<compile_context>
chip_gen: v6e
topology: v6e:2x2x1
jax: 0.10.0
libtpu: 0.0.40
codegen_flags: <defaults>
</compile_context>

<pallas_src>
import numpy as np
import jax
import jax.numpy as jnp
from jax import lax
from jax.experimental import pallas as pl
from jax.experimental.pallas import tpu as pltpu

C = 1280          # in_planes, fixed by the module (MoEGate(1280, ...), CBAM(1280, 16, 3))
RED = 16
CR = C // RED     # 80
E = 5             # num_experts
TEMP = 1.0        # gate temperature


# --------------------------------------------------------------------------- #
# Pallas kernel: selected-expert CBAM on NCHW-flat blocks, write-once output   #
# --------------------------------------------------------------------------- #
def _make_cbam_kernel(H, W, TB):
    HW = H * W
    # rolled[p] == img[(p + dy*W + dx) % HW]  (jnp.roll semantics => negate offset)
    offsets = [((t // 3) - 1) * W + ((t % 3) - 1) for t in range(9)]
    shifts = [(-o) % HW for o in offsets]

    def kernel(x_ref, ca_ref, mask_ref, taps_ref, o_ref):
        # x_ref    : (TB, C, HW) f32  NCHW-flat input features
        # ca_ref   : (TB, C, 1)  f32  precomputed channel-attention gate (sigmoid)
        # mask_ref : (9, HW)     f32  zero-padding masks for the 9 conv taps
        # taps_ref : (B, 18)     f32  SMEM, selected expert's 3x3x2 conv taps
        # o_ref    : (TB, C, HW) f32
        border = mask_ref[...]                               # (9, HW), tiny
        b0 = pl.program_id(0) * TB
        for tb in range(TB):                                 # static unroll
            bg = b0 + tb
            out = x_ref[tb] * ca_ref[tb]                     # (C,HW)*(C,1): channel gate

            # SpatialAttention inputs: channel mean/max (sublane axis -> mostly VPU)
            avg_s = jnp.mean(out, axis=0, keepdims=True)     # (1, HW)
            max_s = jnp.max(out, axis=0, keepdims=True)      # (1, HW)
            cat = jnp.concatenate([avg_s, max_s], axis=0)    # (2, HW)

            # 3x3 conv (padding=1, 2 in-channels): rolls + border masks + scalar FMAs
            logit = taps_ref[bg, 4] * avg_s + taps_ref[bg, 13] * max_s   # center tap
            for t in range(9):
                if t == 4:
                    continue
                sh = pltpu.roll(cat, shifts[t], axis=1)      # (2, HW), XLU lane-roll
                sh = sh * border[t:t + 1, :]                 # zero the padded border
                logit = (logit
                         + taps_ref[bg, t] * sh[0:1, :]
                         + taps_ref[bg, 9 + t] * sh[1:2, :])
            sa = jax.nn.sigmoid(logit)                       # (1, HW)

            # top-1 masked softmax => gate weight is exactly 1.0, so no gate multiply
            o_ref[tb] = out * sa                             # sa broadcasts over C (sublanes)

    return kernel


# --------------------------------------------------------------------------- #
# Helpers                                                                      #
# --------------------------------------------------------------------------- #
def _conv_masks(H, W):
    """(9, H*W) {0,1} masks zeroing out-of-bounds taps of the padded 3x3 conv."""
    ms = []
    for dy in (-1, 0, 1):
        for dx in (-1, 0, 1):
            m = np.ones((H, W), np.float32)
            if dy == -1:
                m[0, :] = 0.0
            elif dy == 1:
                m[H - 1, :] = 0.0
            if dx == -1:
                m[:, 0] = 0.0
            elif dx == 1:
                m[:, W - 1] = 0.0
            ms.append(m.reshape(-1))
    return np.stack(ms, axis=0)


def _pick_batch_pack(B, per_batch_bytes, target=512 * 1024, cap=8 * 1024 * 1024):
    """Pack batches per grid step so DMAs reach >=512 KiB without huge blocks."""
    tb = 1
    for cand in range(1, B + 1):
        if B % cand:
            continue
        if cand * per_batch_bytes > cap:
            break
        tb = cand
        if cand * per_batch_bytes >= target:
            break
    return tb


def _vmem_limit(block_bytes):
    try:
        cap = int(pltpu.get_tpu_info().vmem_capacity_bytes)
    except Exception:
        cap = 64 * 1024 * 1024          # conservative (v7x per-TensorCore)
    want = 8 * block_bytes + (4 << 20)  # 2x double-buffered in/out + temps + headroom
    return max(32 << 20, min(want, (cap * 3) // 4))


# --------------------------------------------------------------------------- #
# Wrapper: gate, expert selection, hoisted channel-attention MLP, pallas_call  #
# --------------------------------------------------------------------------- #
def moe_pallas(x_nchw, params, noise_key):
    B, Cc, H, W = x_nchw.shape
    assert Cc == C, "module fixes in_planes to 1280"
    HW = H * W
    xf = x_nchw.reshape(B, Cc, HW)                 # free reshape, no HBM transpose

    # One pooling pass over x shared by the gate and the channel attention.
    avg_c = jnp.mean(xf, axis=2)                   # (B, C)
    max_c = jnp.max(xf, axis=2)                    # (B, C)

    # ---- MoEGate: Linear + noisy top-1 masked softmax ----
    # TODO(synk): noisy routing (randn, topk, scatter, softmax) stays in plain
    # JAX glue; it is negligible compute and inherently pre-kernel.
    logits = avg_c @ params["gate_w"].T + params["gate_b"]              # (B, E)
    noise = jax.random.normal(noise_key, logits.shape) * jax.nn.softplus(logits / TEMP)
    logits = logits + noise
    top = jnp.argmax(logits, axis=1)                                    # k = 1
    onehot = jax.nn.one_hot(top, E, dtype=bool)
    gate_w = jax.nn.softmax(jnp.where(onehot, logits, -jnp.inf) / TEMP, axis=1)
    gate_w = gate_w.astype(jnp.float32)
    # Top-1 masked softmax => selected weight is exactly 1.0; kernel omits it.

    # ---- ChannelAttention of the *selected* expert (tiny MLP, plain JAX) ----
    hp = lax.Precision.HIGHEST
    w1 = params["ca1"][top]                                             # (B, CR, C)
    w2 = params["ca2"][top]                                             # (B, C, CR)

    def _mlp(v):                                                        # v: (B, C)
        h = jnp.maximum(jnp.einsum("bc,boc->bo", v, w1, precision=hp), 0.0)
        return jnp.einsum("bo,bco->bc", h, w2, precision=hp)

    ca = jax.nn.sigmoid(_mlp(avg_c) + _mlp(max_c)).astype(jnp.float32)  # (B, C)
    ca3 = ca.reshape(B, Cc, 1)

    # ---- SpatialAttention operands: selected expert's taps + constant masks ----
    taps = params["sp"][top][:, 0].reshape(B, 18).astype(jnp.float32)   # (B, 2*3*3)
    masks = jnp.asarray(_conv_masks(H, W))                              # (9, HW)

    per_batch_bytes = Cc * HW * 4
    TB = _pick_batch_pack(B, per_batch_bytes)
    grid = (B // TB,)
    kernel = _make_cbam_kernel(H, W, TB)

    out_flat = pl.pallas_call(
        kernel,
        out_shape=jax.ShapeDtypeStruct((B, Cc, HW), jnp.float32),
        grid_spec=pltpu.PrefetchScalarGridSpec(
            num_scalar_prefetch=0,
            grid=grid,
            in_specs=[
                pl.BlockSpec((TB, Cc, HW), lambda i: (i, 0, 0)),        # x, NCHW-flat
                pl.BlockSpec((TB, Cc, 1), lambda i: (i, 0, 0)),         # channel attn
                pl.BlockSpec((9, HW), lambda i: (0, 0)),                # conv border masks
                pl.BlockSpec(memory_space=pltpu.MemorySpace.SMEM),      # conv taps (B,18)
            ],
            out_specs=pl.BlockSpec((TB, Cc, HW), lambda i: (i, 0, 0)),
        ),
        compiler_params=pltpu.CompilerParams(
            dimension_semantics=("parallel",),       # batch blocks shard across TCs
            vmem_limit_bytes=_vmem_limit(TB * per_batch_bytes)),
    )(xf, ca3, masks, taps)

    # TODO(synk): for very large H*W (v7x's 64 MiB VMEM) additionally tile the
    # flattened spatial axis with a W-wide halo for the 3x3 conv.
    return out_flat.reshape(B, Cc, H, W), gate_w


# --------------------------------------------------------------------------- #
# Pure-JAX reference (mirrors the PyTorch forward) for validation              #
# --------------------------------------------------------------------------- #
def moe_ref(x, params, gate_w):
    outs = []
    for ei in range(E):
        c1 = params["ca1"][ei]            # (CR, C)
        c2 = params["ca2"][ei]            # (C, CR)
        sp = params["sp"][ei]             # (1, 2, 3, 3)
        avg = jnp.mean(x, axis=(2, 3))
        mx = jnp.max(x, axis=(2, 3))
        mlp = lambda v: jnp.dot(
            jnp.maximum(jnp.dot(v, c1.T, precision=lax.Precision.HIGHEST), 0.0),
            c2.T, precision=lax.Precision.HIGHEST)
        ca = jax.nn.sigmoid(mlp(avg) + mlp(mx))[:, :, None, None]
        out = x * ca
        avg_s = jnp.mean(out, axis=1, keepdims=True)
        max_s = jnp.max(out, axis=1, keepdims=True)
        cat = jnp.concatenate([avg_s, max_s], axis=1)
        conv = lax.conv_general_dilated(cat, sp, window_strides=(1, 1),
                                        padding=((1, 1), (1, 1)),
                                        dimension_numbers=("NCHW", "OIHW", "NCHW"),
                                        precision=lax.Precision.HIGHEST)
        sa = jax.nn.sigmoid(conv)
        outs.append(out * sa)
    stacked = jnp.stack(outs, axis=1)                                   # (B, E, C, H, W)
    return jnp.sum(stacked * gate_w[:, :, None, None, None], axis=1)


if __name__ == "__main__":
    B, H, W = 2, 16, 16      # channels fixed to 1280 by the module; spatial kept small
    key = jax.random.PRNGKey(0)
    kx, kg, kb, k1, k2, ks, kn = jax.random.split(key, 7)

    x = jax.random.normal(kx, (B, C, H, W), jnp.float32)

    params = {
        "gate_w": 0.02 * jax.random.normal(kg, (E, C), jnp.float32),      # Linear(1280, 5)
        "gate_b": 0.02 * jax.random.normal(kb, (E,), jnp.float32),
        "ca1":    0.05 * jax.random.normal(k1, (E, CR, C), jnp.float32),  # Conv2d(1280, 80, 1)
        "ca2":    0.05 * jax.random.normal(k2, (E, C, CR), jnp.float32),  # Conv2d(80, 1280, 1)
        "sp":     0.10 * jax.random.normal(ks, (E, 1, 2, 3, 3), jnp.float32),  # spatial 3x3 conv
        # note: ChannelAttention.threshold is unused in forward -> omitted
    }

    out, gate_w = moe_pallas(x, params, kn)
    out = jax.block_until_ready(out)

    # Reference sums all experts; the gate is exactly one-hot (top-1 masked
    # softmax), so this equals the single selected expert computed by the kernel.
    ref = moe_ref(x, params, gate_w)
    max_err = float(jnp.max(jnp.abs(out - ref)))
    assert np.allclose(np.asarray(out), np.asarray(ref), rtol=1e-2, atol=1e-2), \
        f"mismatch vs reference, max abs err = {max_err}"
    print("KERNEL_OK")
</pallas_src>

<mosaic_0001>
module attributes {stable_mosaic.version = 11 : i64} {
  func.func @kernel(%arg0: i32, %arg1: memref<1x1280x256xf32, #tpu.memory_space<vmem>>, %arg2: memref<1x1280x1xf32, #tpu.memory_space<vmem>>, %arg3: memref<9x256xf32, #tpu.memory_space<vmem>>, %arg4: memref<2x18xf32, #tpu.memory_space<smem>>, %arg5: memref<1x1280x256xf32, #tpu.memory_space<vmem>>) attributes {dimension_semantics = [#tpu.dimension_semantics<parallel>], iteration_bounds = array<i64: 2>, scalar_prefetch = 0 : i64, scratch_operands = 0 : i64, tpu.core_type = #tpu.core_type<tc>, window_params = [{transform_indices = @transform_0, window_bounds = array<i64: 1, 1280, 256>}, {transform_indices = @transform_1, window_bounds = array<i64: 1, 1280, 1>}, {pipeline_mode = #tpu.pipeline_mode<synchronous>, transform_indices = @transform_2, window_bounds = array<i64: 9, 256>}, {transform_indices = @transform_3, window_bounds = array<i64: 2, 18>}, {transform_indices = @transform_4, window_bounds = array<i64: 1, 1280, 256>}]} {
    %c0 = arith.constant 0 : index
    %c0_0 = arith.constant 0 : index
    %0 = vector.load %arg3[%c0, %c0_0] : memref<9x256xf32, #tpu.memory_space<vmem>>, vector<9x256xf32>
    %c1_i32 = arith.constant 1 : i32
    %1 = arith.muli %arg0, %c1_i32 : i32
    %c0_i32 = arith.constant 0 : i32
    %2 = arith.addi %1, %c0_i32 : i32
    %c0_1 = arith.constant 0 : index
    %c0_2 = arith.constant 0 : index
    %c0_3 = arith.constant 0 : index
    %3 = vector.load %arg1[%c0_1, %c0_2, %c0_3] : memref<1x1280x256xf32, #tpu.memory_space<vmem>>, vector<1x1280x256xf32>
    %4 = vector.shape_cast %3 : vector<1x1280x256xf32> to vector<1280x256xf32>
    %c0_4 = arith.constant 0 : index
    %c0_5 = arith.constant 0 : index
    %c0_6 = arith.constant 0 : index
    %5 = vector.load %arg2[%c0_4, %c0_5, %c0_6] : memref<1x1280x1xf32, #tpu.memory_space<vmem>>, vector<1x1280x1xf32>
    %6 = vector.shape_cast %5 : vector<1x1280x1xf32> to vector<1280x1xf32>
    %7 = vector.broadcast %6 : vector<1280x1xf32> to vector<1280x256xf32>
    %8 = arith.mulf %4, %7 : vector<1280x256xf32>
    %cst = arith.constant dense<0.000000e+00> : vector<256xf32>
    %9 = vector.multi_reduction <add>, %8, %cst [0] : vector<1280x256xf32> to vector<256xf32>
    %10 = vector.shape_cast %9 : vector<256xf32> to vector<1x256xf32>
    %cst_7 = arith.constant 1.280000e+03 : f32
    %11 = vector.broadcast %cst_7 : f32 to vector<1x256xf32>
    %12 = arith.divf %10, %11 : vector<1x256xf32>
    %cst_8 = arith.constant dense<0xFF800000> : vector<256xf32>
    %13 = vector.multi_reduction <maximumf>, %8, %cst_8 [0] : vector<1280x256xf32> to vector<256xf32>
    %14 = vector.shape_cast %13 : vector<256xf32> to vector<1x256xf32>
    %15 = tpu.concatenate %12, %14 in 0 : vector<1x256xf32>, vector<1x256xf32> -> vector<2x256xf32>
    %16 = arith.index_cast %2 : i32 to index
    %c4 = arith.constant 4 : index
    %17 = memref.load %arg4[%16, %c4] : memref<2x18xf32, #tpu.memory_space<smem>>
    %18 = vector.broadcast %17 : f32 to vector<1x256xf32>
    %19 = arith.mulf %18, %12 : vector<1x256xf32>
    %20 = arith.index_cast %2 : i32 to index
    %c13 = arith.constant 13 : index
    %21 = memref.load %arg4[%20, %c13] : memref<2x18xf32, #tpu.memory_space<smem>>
    %22 = vector.broadcast %21 : f32 to vector<1x256xf32>
    %23 = arith.mulf %22, %14 : vector<1x256xf32>
    %24 = arith.addf %19, %23 : vector<1x256xf32>
    %c17_i32 = arith.constant 17 : i32
    %25 = tpu.dynamic_rotate %15 by %c17_i32 dim 1 : vector<2x256xf32>, i32 -> vector<2x256xf32>
    %26 = vector.extract_strided_slice %0 {offsets = [0, 0], sizes = [1, 256], strides = [1, 1]} : vector<9x256xf32> to vector<1x256xf32>
    %27 = vector.broadcast %26 : vector<1x256xf32> to vector<2x256xf32>
    %28 = arith.mulf %25, %27 : vector<2x256xf32>
    %29 = arith.index_cast %2 : i32 to index
    %c0_9 = arith.constant 0 : index
    %30 = memref.load %arg4[%29, %c0_9] : memref<2x18xf32, #tpu.memory_space<smem>>
    %31 = vector.extract_strided_slice %28 {offsets = [0, 0], sizes = [1, 256], strides = [1, 1]} : vector<2x256xf32> to vector<1x256xf32>
    %32 = vector.broadcast %30 : f32 to vector<1x256xf32>
    %33 = arith.mulf %32, %31 : vector<1x256xf32>
    %34 = arith.addf %24, %33 : vector<1x256xf32>
    %35 = arith.index_cast %2 : i32 to index
    %c9 = arith.constant 9 : index
    %36 = memref.load %arg4[%35, %c9] : memref<2x18xf32, #tpu.memory_space<smem>>
    %37 = vector.extract_strided_slice %28 {offsets = [1, 0], sizes = [1, 256], strides = [1, 1]} : vector<2x256xf32> to vector<1x256xf32>
    %38 = vector.broadcast %36 : f32 to vector<1x256xf32>
    %39 = arith.mulf %38, %37 : vector<1x256xf32>
    %40 = arith.addf %34, %39 : vector<1x256xf32>
    %c16_i32 = arith.constant 16 : i32
    %41 = tpu.dynamic_rotate %15 by %c16_i32 dim 1 : vector<2x256xf32>, i32 -> vector<2x256xf32>
    %42 = vector.extract_strided_slice %0 {offsets = [1, 0], sizes = [1, 256], strides = [1, 1]} : vector<9x256xf32> to vector<1x256xf32>
    %43 = vector.broadcast %42 : vector<1x256xf32> to vector<2x256xf32>
    %44 = arith.mulf %41, %43 : vector<2x256xf32>
    %45 = arith.index_cast %2 : i32 to index
    %c1 = arith.constant 1 : index
    %46 = memref.load %arg4[%45, %c1] : memref<2x18xf32, #tpu.memory_space<smem>>
    %47 = vector.extract_strided_slice %44 {offsets = [0, 0], sizes = [1, 256], strides = [1, 1]} : vector<2x256xf32> to vector<1x256xf32>
    %48 = vector.broadcast %46 : f32 to vector<1x256xf32>
    %49 = arith.mulf %48, %47 : vector<1x256xf32>
    %50 = arith.addf %40, %49 : vector<1x256xf32>
    %51 = arith.index_cast %2 : i32 to index
    %c10 = arith.constant 10 : index
    %52 = memref.load %arg4[%51, %c10] : memref<2x18xf32, #tpu.memory_space<smem>>
    %53 = vector.extract_strided_slice %44 {offsets = [1, 0], sizes = [1, 256], strides = [1, 1]} : vector<2x256xf32> to vector<1x256xf32>
    %54 = vector.broadcast %52 : f32 to vector<1x256xf32>
    %55 = arith.mulf %54, %53 : vector<1x256xf32>
    %56 = arith.addf %50, %55 : vector<1x256xf32>
    %c15_i32 = arith.constant 15 : i32
    %57 = tpu.dynamic_rotate %15 by %c15_i32 dim 1 : vector<2x256xf32>, i32 -> vector<2x256xf32>
    %58 = vector.extract_strided_slice %0 {offsets = [2, 0], sizes = [1, 256], strides = [1, 1]} : vector<9x256xf32> to vector<1x256xf32>
    %59 = vector.broadcast %58 : vector<1x256xf32> to vector<2x256xf32>
    %60 = arith.mulf %57, %59 : vector<2x256xf32>
    %61 = arith.index_cast %2 : i32 to index
    %c2 = arith.constant 2 : index
    %62 = memref.load %arg4[%61, %c2] : memref<2x18xf32, #tpu.memory_space<smem>>
    %63 = vector.extract_strided_slice %60 {offsets = [0, 0], sizes = [1, 256], strides = [1, 1]} : vector<2x256xf32> to vector<1x256xf32>
    %64 = vector.broadcast %62 : f32 to vector<1x256xf32>
    %65 = arith.mulf %64, %63 : vector<1x256xf32>
    %66 = arith.addf %56, %65 : vector<1x256xf32>
    %67 = arith.index_cast %2 : i32 to index
    %c11 = arith.constant 11 : index
    %68 = memref.load %arg4[%67, %c11] : memref<2x18xf32, #tpu.memory_space<smem>>
    %69 = vector.extract_strided_slice %60 {offsets = [1, 0], sizes = [1, 256], strides = [1, 1]} : vector<2x256xf32> to vector<1x256xf32>
    %70 = vector.broadcast %68 : f32 to vector<1x256xf32>
    %71 = arith.mulf %70, %69 : vector<1x256xf32>
    %72 = arith.addf %66, %71 : vector<1x256xf32>
    %c1_i32_10 = arith.constant 1 : i32
    %73 = tpu.dynamic_rotate %15 by %c1_i32_10 dim 1 : vector<2x256xf32>, i32 -> vector<2x256xf32>
    %74 = vector.extract_strided_slice %0 {offsets = [3, 0], sizes = [1, 256], strides = [1, 1]} : vector<9x256xf32> to vector<1x256xf32>
    %75 = vector.broadcast %74 : vector<1x256xf32> to vector<2x256xf32>
    %76 = arith.mulf %73, %75 : vector<2x256xf32>
    %77 = arith.index_cast %2 : i32 to index
    %c3 = arith.constant 3 : index
    %78 = memref.load %arg4[%77, %c3] : memref<2x18xf32, #tpu.memory_space<smem>>
    %79 = vector.extract_strided_slice %76 {offsets = [0, 0], sizes = [1, 256], strides = [1, 1]} : vector<2x256xf32> to vector<1x256xf32>
    %80 = vector.broadcast %78 : f32 to vector<1x256xf32>
    %81 = arith.mulf %80, %79 : vector<1x256xf32>
    %82 = arith.addf %72, %81 : vector<1x256xf32>
    %83 = arith.index_cast %2 : i32 to index
    %c12 = arith.constant 12 : index
    %84 = memref.load %arg4[%83, %c12] : memref<2x18xf32, #tpu.memory_space<smem>>
    %85 = vector.extract_strided_slice %76 {offsets = [1, 0], sizes = [1, 256], strides = [1, 1]} : vector<2x256xf32> to vector<1x256xf32>
    %86 = vector.broadcast %84 : f32 to vector<1x256xf32>
    %87 = arith.mulf %86, %85 : vector<1x256xf32>
    %88 = arith.addf %82, %87 : vector<1x256xf32>
    %c255_i32 = arith.constant 255 : i32
    %89 = tpu.dynamic_rotate %15 by %c255_i32 dim 1 : vector<2x256xf32>, i32 -> vector<2x256xf32>
    %90 = vector.extract_strided_slice %0 {offsets = [5, 0], sizes = [1, 256], strides = [1, 1]} : vector<9x256xf32> to vector<1x256xf32>
    %91 = vector.broadcast %90 : vector<1x256xf32> to vector<2x256xf32>
    %92 = arith.mulf %89, %91 : vector<2x256xf32>
    %93 = arith.index_cast %2 : i32 to index
    %c5 = arith.constant 5 : index
    %94 = memref.load %arg4[%93, %c5] : memref<2x18xf32, #tpu.memory_space<smem>>
    %95 = vector.extract_strided_slice %92 {offsets = [0, 0], sizes = [1, 256], strides = [1, 1]} : vector<2x256xf32> to vector<1x256xf32>
    %96 = vector.broadcast %94 : f32 to vector<1x256xf32>
    %97 = arith.mulf %96, %95 : vector<1x256xf32>
    %98 = arith.addf %88, %97 : vector<1x256xf32>
    %99 = arith.index_cast %2 : i32 to index
    %c14 = arith.constant 14 : index
    %100 = memref.load %arg4[%99, %c14] : memref<2x18xf32, #tpu.memory_space<smem>>
    %101 = vector.extract_strided_slice %92 {offsets = [1, 0], sizes = [1, 256], strides = [1, 1]} : vector<2x256xf32> to vector<1x256xf32>
    %102 = vector.broadcast %100 : f32 to vector<1x256xf32>
    %103 = arith.mulf %102, %101 : vector<1x256xf32>
    %104 = arith.addf %98, %103 : vector<1x256xf32>
    %c241_i32 = arith.constant 241 : i32
    %105 = tpu.dynamic_rotate %15 by %c241_i32 dim 1 : vector<2x256xf32>, i32 -> vector<2x256xf32>
    %106 = vector.extract_strided_slice %0 {offsets = [6, 0], sizes = [1, 256], strides = [1, 1]} : vector<9x256xf32> to vector<1x256xf32>
    %107 = vector.broadcast %106 : vector<1x256xf32> to vector<2x256xf32>
    %108 = arith.mulf %105, %107 : vector<2x256xf32>
    %109 = arith.index_cast %2 : i32 to index
    %c6 = arith.constant 6 : index
    %110 = memref.load %arg4[%109, %c6] : memref<2x18xf32, #tpu.memory_space<smem>>
    %111 = vector.extract_strided_slice %108 {offsets = [0, 0], sizes = [1, 256], strides = [1, 1]} : vector<2x256xf32> to vector<1x256xf32>
    %112 = vector.broadcast %110 : f32 to vector<1x256xf32>
    %113 = arith.mulf %112, %111 : vector<1x256xf32>
    %114 = arith.addf %104, %113 : vector<1x256xf32>
    %115 = arith.index_cast %2 : i32 to index
    %c15 = arith.constant 15 : index
    %116 = memref.load %arg4[%115, %c15] : memref<2x18xf32, #tpu.memory_space<smem>>
    %117 = vector.extract_strided_slice %108 {offsets = [1, 0], sizes = [1, 256], strides = [1, 1]} : vector<2x256xf32> to vector<1x256xf32>
    %118 = vector.broadcast %116 : f32 to vector<1x256xf32>
    %119 = arith.mulf %118, %117 : vector<1x256xf32>
    %120 = arith.addf %114, %119 : vector<1x256xf32>
    %c240_i32 = arith.constant 240 : i32
    %121 = tpu.dynamic_rotate %15 by %c240_i32 dim 1 : vector<2x256xf32>, i32 -> vector<2x256xf32>
    %122 = vector.extract_strided_slice %0 {offsets = [7, 0], sizes = [1, 256], strides = [1, 1]} : vector<9x256xf32> to vector<1x256xf32>
    %123 = vector.broadcast %122 : vector<1x256xf32> to vector<2x256xf32>
    %124 = arith.mulf %121, %123 : vector<2x256xf32>
    %125 = arith.index_cast %2 : i32 to index
    %c7 = arith.constant 7 : index
    %126 = memref.load %arg4[%125, %c7] : memref<2x18xf32, #tpu.memory_space<smem>>
    %127 = vector.extract_strided_slice %124 {offsets = [0, 0], sizes = [1, 256], strides = [1, 1]} : vector<2x256xf32> to vector<1x256xf32>
    %128 = vector.broadcast %126 : f32 to vector<1x256xf32>
    %129 = arith.mulf %128, %127 : vector<1x256xf32>
    %130 = arith.addf %120, %129 : vector<1x256xf32>
    %131 = arith.index_cast %2 : i32 to index
    %c16 = arith.constant 16 : index
    %132 = memref.load %arg4[%131, %c16] : memref<2x18xf32, #tpu.memory_space<smem>>
    %133 = vector.extract_strided_slice %124 {offsets = [1, 0], sizes = [1, 256], strides = [1, 1]} : vector<2x256xf32> to vector<1x256xf32>
    %134 = vector.broadcast %132 : f32 to vector<1x256xf32>
    %135 = arith.mulf %134, %133 : vector<1x256xf32>
    %136 = arith.addf %130, %135 : vector<1x256xf32>
    %c239_i32 = arith.constant 239 : i32
    %137 = tpu.dynamic_rotate %15 by %c239_i32 dim 1 : vector<2x256xf32>, i32 -> vector<2x256xf32>
    %138 = vector.extract_strided_slice %0 {offsets = [8, 0], sizes = [1, 256], strides = [1, 1]} : vector<9x256xf32> to vector<1x256xf32>
    %139 = vector.broadcast %138 : vector<1x256xf32> to vector<2x256xf32>
    %140 = arith.mulf %137, %139 : vector<2x256xf32>
    %141 = arith.index_cast %2 : i32 to index
    %c8 = arith.constant 8 : index
    %142 = memref.load %arg4[%141, %c8] : memref<2x18xf32, #tpu.memory_space<smem>>
    %143 = vector.extract_strided_slice %140 {offsets = [0, 0], sizes = [1, 256], strides = [1, 1]} : vector<2x256xf32> to vector<1x256xf32>
    %144 = vector.broadcast %142 : f32 to vector<1x256xf32>
    %145 = arith.mulf %144, %143 : vector<1x256xf32>
    %146 = arith.addf %136, %145 : vector<1x256xf32>
    %147 = arith.index_cast %2 : i32 to index
    %c17 = arith.constant 17 : index
    %148 = memref.load %arg4[%147, %c17] : memref<2x18xf32, #tpu.memory_space<smem>>
    %149 = vector.extract_strided_slice %140 {offsets = [1, 0], sizes = [1, 256], strides = [1, 1]} : vector<2x256xf32> to vector<1x256xf32>
    %150 = vector.broadcast %148 : f32 to vector<1x256xf32>
    %151 = arith.mulf %150, %149 : vector<1x256xf32>
    %152 = arith.addf %146, %151 : vector<1x256xf32>
    %153 = arith.negf %152 : vector<1x256xf32>
    %154 = math.exp %153 : vector<1x256xf32>
    %cst_11 = arith.constant 1.000000e+00 : f32
    %155 = vector.broadcast %cst_11 : f32 to vector<1x256xf32>
    %156 = arith.addf %155, %154 : vector<1x256xf32>
    %157 = arith.divf %155, %156 : vector<1x256xf32>
    %158 = vector.broadcast %157 : vector<1x256xf32> to vector<1280x256xf32>
    %159 = arith.mulf %8, %158 : vector<1280x256xf32>
    %c0_12 = arith.constant 0 : index
    %c0_13 = arith.constant 0 : index
    %c0_14 = arith.constant 0 : index
    %160 = vector.load %arg5[%c0_12, %c0_13, %c0_14] : memref<1x1280x256xf32, #tpu.memory_space<vmem>>, vector<1x1280x256xf32>
    %161 = vector.shape_cast %160 : vector<1x1280x256xf32> to vector<1280x256xf32>
    %162 = vector.shape_cast %159 : vector<1280x256xf32> to vector<1x1280x256xf32>
    tpu.vector_store %arg5[%c0_12, %c0_13, %c0_14], %162 {strides = array<i32>} : memref<1x1280x256xf32, #tpu.memory_space<vmem>>, vector<1x1280x256xf32>,
    return
  }
  func.func @transform_0(%arg0: i32) -> (i32, i32, i32) {
    %c0_i32 = arith.constant 0 : i32
    %c0_i32_0 = arith.constant 0 : i32
    %c0_i32_1 = arith.constant 0 : i32
    return %arg0, %c0_i32, %c0_i32_0 : i32, i32, i32
  }
  func.func @transform_1(%arg0: i32) -> (i32, i32, i32) {
    %c0_i32 = arith.constant 0 : i32
    %c0_i32_0 = arith.constant 0 : i32
    %c0_i32_1 = arith.constant 0 : i32
    return %arg0, %c0_i32, %c0_i32_0 : i32, i32, i32
  }
  func.func @transform_2(%arg0: i32) -> (i32, i32) {
    %c0_i32 = arith.constant 0 : i32
    %c0_i32_0 = arith.constant 0 : i32
    %c0_i32_1 = arith.constant 0 : i32
    return %c0_i32, %c0_i32_0 : i32, i32
  }
  func.func @transform_3(%arg0: i32) -> (i32, i32) {
    %c0_i32 = arith.constant 0 : i32
    %c0_i32_0 = arith.constant 0 : i32
    %c0_i32_1 = arith.constant 0 : i32
    return %c0_i32, %c0_i32_0 : i32, i32
  }
  func.func @transform_4(%arg0: i32) -> (i32, i32, i32) {
    %c0_i32 = arith.constant 0 : i32
    %c0_i32_0 = arith.constant 0 : i32
    %c0_i32_1 = arith.constant 0 : i32
    return %arg0, %c0_i32, %c0_i32_0 : i32, i32, i32
  }
}

</mosaic_0001>

<llo_original>
// kernel: tpu_custom_call.1
$region0: #{tpu_custom_call.1}
  #allocation0 [shape = 'u32[]', space=smem, size = 0x4, offset = 0x4, fixed_abs, tag = 'smem constant byte address 0x4 - core index']
  #allocation1 [shape = 'u32[144,128]{1,0:T(1,128)}', space=vmem, size = 0x12000, scoped, tag = 'internal scratch']
  %s0 = inlined_call_operand.hbm [shape: f32[2,1280,256], index: 0, kind: input, shape index: {}]
  %s1 = inlined_call_operand.vmem [shape: f32[2,1280,1], index: 1, kind: input, shape index: {}]
  %s2 = inlined_call_operand.hbm [shape: f32[9,256], index: 2, kind: input, shape index: {}]
  %s3 = inlined_call_operand.hbm [shape: f32[2,18], index: 3, kind: input, shape index: {}]
  %s4 = inlined_call_operand.hbm [shape: f32[2,1280,256], index: 4, kind: output, shape index: {}]
  %s5 = sld [smem:[#allocation0]]
  $region61: #{tpu_custom_call.1} parent=0
    _
  %s7 = ssub.s32 1, %s5
  %s8 = scalar_select 0, %s7, %s5
  $region1: #{tpu_custom_call.1} parent=0
    #allocation2 [shape = 'u8[2621440]{0}', space=vmem, size = 0x280000, scoped, tag = 'input window, operand 0']
    #allocation3 [shape = 's32[2]{0}', space=sflag, size = 0x8, scoped, tag = 'scoped memory for tpu_custom_call.1']
    #allocation4 [shape = 's32[2]{0}', space=sflag, size = 0x8, scoped, tag = 'scoped memory for tpu_custom_call.1']
    #allocation5 [shape = 's32[2]{0}', space=sflag, size = 0x8, scoped, tag = 'scoped memory for tpu_custom_call.1']
    #allocation6 [shape = 'u8[16384]{0}', space=vmem, size = 0x4000, scoped, tag = 'input window, operand 2, single buffered']
    #allocation7 [shape = 's32[1]{0}', space=sflag, size = 0x4, scoped, tag = 'scoped memory for tpu_custom_call.1']
    #allocation8 [shape = 'u8[1024]{0}', space=smem, size = 0x400, scoped, tag = 'input window, operand 3, single buffered']
    #allocation9 [shape = 'u8[2621440]{0}', space=vmem, size = 0x280000, scoped, tag = 'output window, operand 0']
    %9 = vsyncpa [#allocation3], 0
    %s10 = scalar_lea.sflag [#allocation3], 1
    %11 = vsyncpa %s10, 0
    %12 = vsyncpa [#allocation7], 0
    %13 = vsyncpa [#allocation5], 0
    %14 = vsyncpa [#allocation4], 0
    %s15 = scalar_lea.sflag [#allocation4], 1
    %16 = vsyncpa %s15, 0
    loop: start=0, step=1, limit=4
    $region2: #{tpu_custom_call.1} parent=1 // loop_pre_header
      _
    $region3: #{tpu_custom_call.1} parent=1 // loop_header
      %s18 = sphi 0, %s22
      %p19 = scmp.ge.s32.totalorder %s18, 4
      %s28 = sphi 0, %s30
      %s31 = sphi 0, %s28
      %s32 = sphi 0, %s31
      %s48 = sphi 0, %s32
      %s54 = sphi 0, %s56
      %s57 = sphi 0, %s54
      %s58 = sphi 0, %s57
      %s74 = sphi 0, %s58
      %s78 = sphi 0, %s78
      %s80 = sphi 0, %s78
      %s81 = sphi 0, %s80
      %s95 = sphi 0, %s81
      %s99 = sphi 0, %s99
      %s101 = sphi 0, %s99
      %s102 = sphi 0, %s101
      %s116 = sphi 0, %s102
      %s122 = sphi 0, %s124
      %s125 = sphi 0, %s122
      %s126 = sphi 0, %s125
      %s142 = sphi 0, %s126
    $region4: #{tpu_custom_call.1} parent=1 // loop_header_branch
      %21 = sbr.rel (%p19) target = $region8
    $region5: #{tpu_custom_call.1} parent=1 // loop_body
      %s23 = ssub.s32 %s18, 1
      %s24 = ssub.s32 %s18, 2
      %s25 = sadd.s32 %s18, 1
      %s26 = ssub.s32 %s18, %s25
      %p27 = scmp.eq.s32.totalorder %s26, 0
      %s29 = sadd.s32 %s28, 1
      %s30 = scalar_select %p27, %s28, %s29
      %p33 = pneg %p27
      %p34 = scmp.eq.s32.totalorder %s18, 1
      %p35 = por %p33, %p34
      %p36 = scmp.ne.s32.totalorder %s28, %s31
      %p37 = scmp.eq.s32.totalorder %s18, 0
      %p38 = por %p36, %p37
      %p39 = scmp.ne.s32.totalorder %s28, %s31
      %p40 = scmp.eq.s32.totalorder %s23, 1
      %p41 = por %p39, %p40
      %p42 = scmp.ne.s32.totalorder %s31, %s32
      %p43 = scmp.eq.s32.totalorder %s23, 0
      %p44 = por %p42, %p43
      %p45 = scmp.ne.s32.totalorder %s31, %s32
      %p46 = scmp.eq.s32.totalorder %s24, 1
      %p47 = por %p45, %p46
      %p49 = scmp.ne.s32.totalorder %s32, %s48
      %p50 = scmp.eq.s32.totalorder %s24, 0
      %p51 = por %p49, %p50
      %s52 = ssub.s32 %s18, %s25
      %p53 = scmp.eq.s32.totalorder %s52, 0
      %s55 = sadd.s32 %s54, 1
      %s56 = scalar_select %p53, %s54, %s55
      %p59 = pneg %p53
      %p60 = scmp.eq.s32.totalorder %s18, 1
      %p61 = por %p59, %p60
      %p62 = scmp.ne.s32.totalorder %s54, %s57
      %p63 = scmp.eq.s32.totalorder %s18, 0
      %p64 = por %p62, %p63
      %p65 = scmp.ne.s32.totalorder %s54, %s57
      %p66 = scmp.eq.s32.totalorder %s23, 1
      %p67 = por %p65, %p66
      %p68 = scmp.ne.s32.totalorder %s57, %s58
      %p69 = scmp.eq.s32.totalorder %s23, 0
      %p70 = por %p68, %p69
      %p71 = scmp.ne.s32.totalorder %s57, %s58
      %p72 = scmp.eq.s32.totalorder %s24, 1
      %p73 = por %p71, %p72
      %p75 = scmp.ne.s32.totalorder %s58, %s74
      %p76 = scmp.eq.s32.totalorder %s24, 0
      %p77 = por %p75, %p76
      %s79 = sadd.s32 %s78, 1
      %p82 = scmp.eq.s32.totalorder %s18, 1
      %p83 = scmp.ne.s32.totalorder %s78, %s80
      %p84 = scmp.eq.s32.totalorder %s18, 0
      %p85 = por %p83, %p84
      %p86 = scmp.ne.s32.totalorder %s78, %s80
      %p87 = scmp.eq.s32.totalorder %s23, 1
      %p88 = por %p86, %p87
      %p89 = scmp.ne.s32.totalorder %s80, %s81
      %p90 = scmp.eq.s32.totalorder %s23, 0
      %p91 = por %p89, %p90
      %p92 = scmp.ne.s32.totalorder %s80, %s81
      %p93 = scmp.eq.s32.totalorder %s24, 1
      %p94 = por %p92, %p93
      %p96 = scmp.ne.s32.totalorder %s81, %s95
      %p97 = scmp.eq.s32.totalorder %s24, 0
      %p98 = por %p96, %p97
      %s100 = sadd.s32 %s99, 1
      %p103 = scmp.eq.s32.totalorder %s18, 1
      %p104 = scmp.ne.s32.totalorder %s99, %s101
      %p105 = scmp.eq.s32.totalorder %s18, 0
      %p106 = por %p104, %p105
      %p107 = scmp.ne.s32.totalorder %s99, %s101
      %p108 = scmp.eq.s32.totalorder %s23, 1
      %p109 = por %p107, %p108
      %p110 = scmp.ne.s32.totalorder %s101, %s102
      %p111 = scmp.eq.s32.totalorder %s23, 0
      %p112 = por %p110, %p111
      %p113 = scmp.ne.s32.totalorder %s101, %s102
      %p114 = scmp.eq.s32.totalorder %s24, 1
      %p115 = por %p113, %p114
      %p117 = scmp.ne.s32.totalorder %s102, %s116
      %p118 = scmp.eq.s32.totalorder %s24, 0
      %p119 = por %p117, %p118
      %s120 = ssub.s32 %s18, %s25
      %p121 = scmp.eq.s32.totalorder %s120, 0
      %s123 = sadd.s32 %s122, 1
      %s124 = scalar_select %p121, %s122, %s123
      %p127 = pneg %p121
      %p128 = scmp.eq.s32.totalorder %s18, 1
      %p129 = por %p127, %p128
      %p130 = scmp.ne.s32.totalorder %s122, %s125
      %p131 = scmp.eq.s32.totalorder %s18, 0
      %p132 = por %p130, %p131
      %p133 = scmp.ne.s32.totalorder %s122, %s125
      %p134 = scmp.eq.s32.totalorder %s23, 1
      %p135 = por %p133, %p134
      %p136 = scmp.ne.s32.totalorder %s125, %s126
      %p137 = scmp.eq.s32.totalorder %s23, 0
      %p138 = por %p136, %p137
      %p139 = scmp.ne.s32.totalorder %s125, %s126
      %p140 = scmp.eq.s32.totalorder %s24, 1
      %p141 = por %p139, %p140
      %p143 = scmp.ne.s32.totalorder %s126, %s142
      %p144 = scmp.eq.s32.totalorder %s24, 0
      %p145 = por %p143, %p144
      %p146 = scmp.le.s32.totalorder 1, %s18
      %p147 = scmp.lt.s32.totalorder %s18, 3
      %p148 = pnand %p146, %p147
      %p149 = pneg %p148
      // Predicated region
      $region9: #{tpu_custom_call.1} parent=5 // pred_check
        _
      $region10: #{tpu_custom_call.1} parent=5 // pred_check_branch
        %151 = sbr.rel (%p148) target = $region12
      $region11: #{tpu_custom_call.1} parent=5 // pred_region
        %s152 = ssub.s32 %s18, 1
        // Predicated region
        $region13: #{tpu_custom_call.1} parent=11 // pred_check
          %p153 = pneg %p91
        $region14: #{tpu_custom_call.1} parent=11 // pred_check_branch
          %155 = sbr.rel (%p153) target = $region16
        $region15: #{tpu_custom_call.1} parent=11 // pred_region
          %s157 = ssub.s32 512, 512
          %158 = vsyncadd [#allocation7], %s157
          %s159 = sshll.u32 [#allocation6], 4
          %s160 = int_to_ptr.vmem [resolvable:$true] %s159
          %165 = dma.hbm_to_vmem [thread:$0]  %s2, 512, %s160, [#allocation7], 256, 256, 16
        $region16: #{tpu_custom_call.1} parent=11 // pred_fallthru
          _
        // Predicated region
        $region17: #{tpu_custom_call.1} parent=11 // pred_check
          %p166 = pneg %p112
        $region18: #{tpu_custom_call.1} parent=11 // pred_check_branch
          %168 = sbr.rel (%p166) target = $region20
        $region19: #{tpu_custom_call.1} parent=11 // pred_region
          %s170 = ssub.s32 32, 32
          %171 = vsyncadd [#allocation5], %s170
          %174 = dma.hbm_to_smem %s3, 32, [#allocation8], [#allocation5]
        $region20: #{tpu_custom_call.1} parent=11 // pred_fallthru
          _
      $region12: #{tpu_custom_call.1} parent=5 // pred_fallthru
        _
      %p175 = scmp.lt.s32.totalorder %s18, 2
      // Predicated region
      $region21: #{tpu_custom_call.1} parent=5 // pred_check
        %p176 = pneg %p175
      $region22: #{tpu_custom_call.1} parent=5 // pred_check_branch
        %178 = sbr.rel (%p176) target = $region24
      $region23: #{tpu_custom_call.1} parent=5 // pred_region
        // Predicated region
        $region25: #{tpu_custom_call.1} parent=23 // pred_check
          %p179 = pneg %p38
        $region26: #{tpu_custom_call.1} parent=23 // pred_check_branch
          %181 = sbr.rel (%p179) target = $region28
        $region27: #{tpu_custom_call.1} parent=23 // pred_region
          %s182 = sand.u32 %s28, 1
          %s183 = scalar_lea.sflag [#allocation3], %s182
          %s184 = sand.u32 %s28, 1
          %s185 = smul.addr %s184, 2560
          %s186 = scalar_lea.vmem [#allocation2], %s185
          %s188 = ssub.s32 40960, 40960
          %189 = vsyncadd %s183, %s188
          %s190 = smul.addr %s18, 320
          %s191 = smul.addr %s190, 128
          %s192 = scalar_lea.hbm %s0, %s191
          %s193 = sshll.u32 %s186, 4
          %s194 = int_to_ptr.vmem [resolvable:$true] %s193
          %199 = dma.hbm_to_vmem [thread:$0]  %s192, 40960, %s194, %s183, 256, 256, 16
        $region28: #{tpu_custom_call.1} parent=23 // pred_fallthru
          _
        // Predicated region
        $region29: #{tpu_custom_call.1} parent=23 // pred_check
          %p200 = pneg %p64
        $region30: #{tpu_custom_call.1} parent=23 // pred_check_branch
          %202 = sbr.rel (%p200) target = $region32
        $region31: #{tpu_custom_call.1} parent=23 // pred_region
          %p203 = scmp.lt.s32.totalorder %s18, 1
          %s204 = scalar_select %p203, %s18, 1
          %s205 = smul.addr %s204, 160
          %s206 = smul.addr %s205, 8
          %s207 = scalar_lea.vmem %s1, %s206
        $region32: #{tpu_custom_call.1} parent=23 // pred_fallthru
          _
      $region24: #{tpu_custom_call.1} parent=5 // pred_fallthru
        _
      %p208 = scmp.le.s32.totalorder 1, %s18
      %p209 = scmp.lt.s32.totalorder %s18, 3
      %p210 = pnand %p208, %p209
      %p211 = pneg %p210
      // Predicated region
      $region33: #{tpu_custom_call.1} parent=5 // pred_check
        _
      $region34: #{tpu_custom_call.1} parent=5 // pred_check_branch
        %213 = sbr.rel (%p210) target = $region36
      $region35: #{tpu_custom_call.1} parent=5 // pred_region
        %s214 = ssub.s32 %s18, 1
        %s215 = sand.u32 %s31, 1
        %s216 = scalar_lea.sflag [#allocation3], %s215
        %s217 = sand.u32 %s31, 1
        %s218 = smul.addr %s217, 2560
        %s219 = scalar_lea.vmem [#allocation2], %s218
        // Predicated region
        $region37: #{tpu_custom_call.1} parent=35 // pred_check
          %p220 = pneg %p44
        $region38: #{tpu_custom_call.1} parent=35 // pred_check_branch
          %222 = sbr.rel (%p220) target = $region40
        $region39: #{tpu_custom_call.1} parent=35 // pred_region
          %223 = dma.done %s216, 40960
        $region40: #{tpu_custom_call.1} parent=35 // pred_fallthru
          _
        // Predicated region
        $region41: #{tpu_custom_call.1} parent=35 // pred_check
          %p224 = pneg %p91
        $region42: #{tpu_custom_call.1} parent=35 // pred_check_branch
          %226 = sbr.rel (%p224) target = $region44
        $region43: #{tpu_custom_call.1} parent=35 // pred_region
          %227 = dma.done [#allocation7], 512
        $region44: #{tpu_custom_call.1} parent=35 // pred_fallthru
          _
        // Predicated region
        $region45: #{tpu_custom_call.1} parent=35 // pred_check
          %p228 = pneg %p112
        $region46: #{tpu_custom_call.1} parent=35 // pred_check_branch
          %230 = sbr.rel (%p228) target = $region48
        $region47: #{tpu_custom_call.1} parent=35 // pred_region
          %231 = dma.done [#allocation5], 32
        $region48: #{tpu_custom_call.1} parent=35 // pred_fallthru
          _
        %232 = sfence
        %s233 = sand.u32 %s31, 1
        %s234 = scalar_lea.sflag [#allocation3], %s233
        %s235 = sand.u32 %s31, 1
        %s236 = smul.addr %s235, 2560
        %s237 = scalar_lea.vmem [#allocation2], %s236
        %p238 = pneg %p44
        %p239 = pneg %p41
        %p240 = scmp.lt.s32.totalorder %s23, 1
        %s241 = scalar_select %p240, %s23, 1
        %s242 = smul.addr %s241, 160
        %s243 = smul.addr %s242, 8
        %s244 = scalar_lea.vmem %s1, %s243
        %p245 = pneg %p70
        %p246 = pneg %p67
        %p247 = pneg %p91
        %p248 = pneg %p88
        %p249 = pneg %p112
        %p250 = pneg %p109
        %p251 = pneg %p138
        %p252 = pneg %p135
        %s253 = sand.u32 %s125, 1
        %s254 = scalar_lea.sflag [#allocation4], %s253
        %s255 = sand.u32 %s125, 1
        %s256 = smul.addr %s255, 2560
        %s257 = scalar_lea.vmem [#allocation9], %s256
        %p258 = scmp.lt.s32.totalorder %s23, 1
        %s259 = scalar_select %p258, %s23, 1
        %s260 = smul.addr %s259, 160
        %s261 = smul.addr %s260, 8
        %s262 = scalar_lea.vmem %s1, %s261
        %v263 = vld [vmem:[#allocation6] sm:$0xff]
        %v264 = vld [vmem:[#allocation6 + $0x8] sm:$0xff]
        %v265 = vld [vmem:[#allocation6 + $0x10] sm:$0x1]
        %v266 = vld [vmem:[#allocation6 + $0x18] sm:$0x1]
        %v267 = vld [vmem:[%s219] sm:$0xff]
        %v268 = vld [vmem:[%s219 + $0x8] sm:$0xff]
        %v269 = vld [vmem:[%s219 + $0x10] sm:$0xff]
        %v270 = vld [vmem:[%s219 + $0x18] sm:$0xff]
        %v271 = vld [vmem:[%s219 + $0x20] sm:$0xff]
        %v272 = vld [vmem:[%s219 + $0x28] sm:$0xff]
        %v273 = vld [vmem:[%s219 + $0x30] sm:$0xff]
        %v274 = vld [vmem:[%s219 + $0x38] sm:$0xff]
        %v275 = vld [vmem:[%s219 + $0x40] sm:$0xff]
        %v276 = vld [vmem:[%s219 + $0x48] sm:$0xff]
        %v277 = vld [vmem:[%s219 + $0x50] sm:$0xff]
        %v278 = vld [vmem:[%s219 + $0x58] sm:$0xff]
        %v279 = vld [vmem:[%s219 + $0x60] sm:$0xff]
        %v280 = vld [vmem:[%s219 + $0x68] sm:$0xff]
        %v281 = vld [vmem:[%s219 + $0x70] sm:$0xff]
        %v282 = vld [vmem:[%s219 + $0x78] sm:$0xff]
        %v283 = vld [vmem:[%s219 + $0x80] sm:$0xff]
        %v284 = vld [vmem:[%s219 + $0x88] sm:$0xff]
        %v285 = vld [vmem:[%s219 + $0x90] sm:$0xff]
        %v286 = vld [vmem:[%s219 + $0x98] sm:$0xff]
        %v287 = vld [vmem:[%s219 + $0xa0] sm:$0xff]
        %v288 = vld [vmem:[%s219 + $0xa8] sm:$0xff]
        %v289 = vld [vmem:[%s219 + $0xb0] sm:$0xff]
        %v290 = vld [vmem:[%s219 + $0xb8] sm:$0xff]
        %v291 = vld [vmem:[%s219 + $0xc0] sm:$0xff]
        %v292 = vld [vmem:[%s219 + $0xc8] sm:$0xff]
        %v293 = vld [vmem:[%s219 + $0xd0] sm:$0xff]
        %v294 = vld [vmem:[%s219 + $0xd8] sm:$0xff]
        %v295 = vld [vmem:[%s219 + $0xe0] sm:$0xff]
        %v296 = vld [vmem:[%s219 + $0xe8] sm:$0xff]
        %v297 = vld [vmem:[%s219 + $0xf0] sm:$0xff]
        %v298 = vld [vmem:[%s219 + $0xf8] sm:$0xff]
        %v299 = vld [vmem:[%s219 + $0x100] sm:$0xff]
        %v300 = vld [vmem:[%s219 + $0x108] sm:$0xff]
        %v301 = vld [vmem:[%s219 + $0x110] sm:$0xff]
        %v302 = vld [vmem:[%s219 + $0x118] sm:$0xff]
        %v303 = vld [vmem:[%s219 + $0x120] sm:$0xff]
        %v304 = vld [vmem:[%s219 + $0x128] sm:$0xff]
        %v305 = vld [vmem:[%s219 + $0x130] sm:$0xff]
        %v306 = vld [vmem:[%s219 + $0x138] sm:$0xff]
        %v307 = vld [vmem:[%s219 + $0x140] sm:$0xff]
        %v308 = vld [vmem:[%s219 + $0x148] sm:$0xff]
        %v309 = vld [vmem:[%s219 + $0x150] sm:$0xff]
        %v310 = vld [vmem:[%s219 + $0x158] sm:$0xff]
        %v311 = vld [vmem:[%s219 + $0x160] sm:$0xff]
        %v312 = vld [vmem:[%s219 + $0x168] sm:$0xff]
        %v313 = vld [vmem:[%s219 + $0x170] sm:$0xff]
        %v314 = vld [vmem:[%s219 + $0x178] sm:$0xff]
        %v315 = vld [vmem:[%s219 + $0x180] sm:$0xff]
        %v316 = vld [vmem:[%s219 + $0x188] sm:$0xff]
        %v317 = vld [vmem:[%s219 + $0x190] sm:$0xff]
        %v318 = vld [vmem:[%s219 + $0x198] sm:$0xff]
        %v319 = vld [vmem:[%s219 + $0x1a0] sm:$0xff]
        %v320 = vld [vmem:[%s219 + $0x1a8] sm:$0xff]
        %v321 = vld [vmem:[%s219 + $0x1b0] sm:$0xff]
        %v322 = vld [vmem:[%s219 + $0x1b8] sm:$0xff]
        %v323 = vld [vmem:[%s219 + $0x1c0] sm:$0xff]
        %v324 = vld [vmem:[%s219 + $0x1c8] sm:$0xff]
        %v325 = vld [vmem:[%s219 + $0x1d0] sm:$0xff]
        %v326 = vld [vmem:[%s219 + $0x1d8] sm:$0xff]
        %v327 = vld [vmem:[%s219 + $0x1e0] sm:$0xff]
        %v328 = vld [vmem:[%s219 + $0x1e8] sm:$0xff]
        %v329 = vld [vmem:[%s219 + $0x1f0] sm:$0xff]
        %v330 = vld [vmem:[%s219 + $0x1f8] sm:$0xff]
        %v331 = vld [vmem:[%s219 + $0x200] sm:$0xff]
        %v332 = vld [vmem:[%s219 + $0x208] sm:$0xff]
        %v333 = vld [vmem:[%s219 + $0x210] sm:$0xff]
        %v334 = vld [vmem:[%s219 + $0x218] sm:$0xff]
        %v335 = vld [vmem:[%s219 + $0x220] sm:$0xff]
        %v336 = vld [vmem:[%s219 + $0x228] sm:$0xff]
        %v337 = vld [vmem:[%s219 + $0x230] sm:$0xff]
        %v338 = vld [vmem:[%s219 + $0x238] sm:$0xff]
        %v339 = vld [vmem:[%s219 + $0x240] sm:$0xff]
        %v340 = vld [vmem:[%s219 + $0x248] sm:$0xff]
        %v341 = vld [vmem:[%s219 + $0x250] sm:$0xff]
        %v342 = vld [vmem:[%s219 + $0x258] sm:$0xff]
        %v343 = vld [vmem:[%s219 + $0x260] sm:$0xff]
        %v344 = vld [vmem:[%s219 + $0x268] sm:$0xff]
        %v345 = vld [vmem:[%s219 + $0x270] sm:$0xff]
        %v346 = vld [vmem:[%s219 + $0x278] sm:$0xff]
        %v347 = vld [vmem:[%s219 + $0x280] sm:$0xff]
        %v348 = vld [vmem:[%s219 + $0x288] sm:$0xff]
        %v349 = vld [vmem:[%s219 + $0x290] sm:$0xff]
        %v350 = vld [vmem:[%s219 + $0x298] sm:$0xff]
        %v351 = vld [vmem:[%s219 + $0x2a0] sm:$0xff]
        %v352 = vld [vmem:[%s219 + $0x2a8] sm:$0xff]
        %v353 = vld [vmem:[%s219 + $0x2b0] sm:$0xff]
        %v354 = vld [vmem:[%s219 + $0x2b8] sm:$0xff]
        %v355 = vld [vmem:[%s219 + $0x2c0] sm:$0xff]
        %v356 = vld [vmem:[%s219 + $0x2c8] sm:$0xff]
        %v357 = vld [vmem:[%s219 + $0x2d0] sm:$0xff]
        %v358 = vld [vmem:[%s219 + $0x2d8] sm:$0xff]
        %v359 = vld [vmem:[%s219 + $0x2e0] sm:$0xff]
        %v360 = vld [vmem:[%s219 + $0x2e8] sm:$0xff]
        %v361 = vld [vmem:[%s219 + $0x2f0] sm:$0xff]
        %v362 = vld [vmem:[%s219 + $0x2f8] sm:$0xff]
        %v363 = vld [vmem:[%s219 + $0x300] sm:$0xff]
        %v364 = vld [vmem:[%s219 + $0x308] sm:$0xff]
        %v365 = vld [vmem:[%s219 + $0x310] sm:$0xff]
        %v366 = vld [vmem:[%s219 + $0x318] sm:$0xff]
        %v367 = vld [vmem:[%s219 + $0x320] sm:$0xff]
        %v368 = vld [vmem:[%s219 + $0x328] sm:$0xff]
        %v369 = vld [vmem:[%s219 + $0x330] sm:$0xff]
        %v370 = vld [vmem:[%s219 + $0x338] sm:$0xff]
        %v371 = vld [vmem:[%s219 + $0x340] sm:$0xff]
        %v372 = vld [vmem:[%s219 + $0x348] sm:$0xff]
        %v373 = vld [vmem:[%s219 + $0x350] sm:$0xff]
        %v374 = vld [vmem:[%s219 + $0x358] sm:$0xff]
        %v375 = vld [vmem:[%s219 + $0x360] sm:$0xff]
        %v376 = vld [vmem:[%s219 + $0x368] sm:$0xff]
        %v377 = vld [vmem:[%s219 + $0x370] sm:$0xff]
        %v378 = vld [vmem:[%s219 + $0x378] sm:$0xff]
        %v379 = vld [vmem:[%s219 + $0x380] sm:$0xff]
        %v380 = vld [vmem:[%s219 + $0x388] sm:$0xff]
        %v381 = vld [vmem:[%s219 + $0x390] sm:$0xff]
        %v382 = vld [vmem:[%s219 + $0x398] sm:$0xff]
        %v383 = vld [vmem:[%s219 + $0x3a0] sm:$0xff]
        %v384 = vld [vmem:[%s219 + $0x3a8] sm:$0xff]
        %v385 = vld [vmem:[%s219 + $0x3b0] sm:$0xff]
        %v386 = vld [vmem:[%s219 + $0x3b8] sm:$0xff]
        %v387 = vld [vmem:[%s219 + $0x3c0] sm:$0xff]
        %v388 = vld [vmem:[%s219 + $0x3c8] sm:$0xff]
        %v389 = vld [vmem:[%s219 + $0x3d0] sm:$0xff]
        %v390 = vld [vmem:[%s219 + $0x3d8] sm:$0xff]
        %v391 = vld [vmem:[%s219 + $0x3e0] sm:$0xff]
        %v392 = vld [vmem:[%s219 + $0x3e8] sm:$0xff]
        %v393 = vld [vmem:[%s219 + $0x3f0] sm:$0xff]
        %v394 = vld [vmem:[%s219 + $0x3f8] sm:$0xff]
        %v395 = vld [vmem:[%s219 + $0x400] sm:$0xff]
        %v396 = vld [vmem:[%s219 + $0x408] sm:$0xff]
        %v397 = vld [vmem:[%s219 + $0x410] sm:$0xff]
        %v398 = vld [vmem:[%s219 + $0x418] sm:$0xff]
        %v399 = vld [vmem:[%s219 + $0x420] sm:$0xff]
        %v400 = vld [vmem:[%s219 + $0x428] sm:$0xff]
        %v401 = vld [vmem:[%s219 + $0x430] sm:$0xff]
        %v402 = vld [vmem:[%s219 + $0x438] sm:$0xff]
        %v403 = vld [vmem:[%s219 + $0x440] sm:$0xff]
        %v404 = vld [vmem:[%s219 + $0x448] sm:$0xff]
        %v405 = vld [vmem:[%s219 + $0x450] sm:$0xff]
        %v406 = vld [vmem:[%s219 + $0x458] sm:$0xff]
        %v407 = vld [vmem:[%s219 + $0x460] sm:$0xff]
        %v408 = vld [vmem:[%s219 + $0x468] sm:$0xff]
        %v409 = vld [vmem:[%s219 + $0x470] sm:$0xff]
        %v410 = vld [vmem:[%s219 + $0x478] sm:$0xff]
        %v411 = vld [vmem:[%s219 + $0x480] sm:$0xff]
        %v412 = vld [vmem:[%s219 + $0x488] sm:$0xff]
        %v413 = vld [vmem:[%s219 + $0x490] sm:$0xff]
        %v414 = vld [vmem:[%s219 + $0x498] sm:$0xff]
        %v415 = vld [vmem:[%s219 + $0x4a0] sm:$0xff]
        %v416 = vld [vmem:[%s219 + $0x4a8] sm:$0xff]
        %v417 = vld [vmem:[%s219 + $0x4b0] sm:$0xff]
        %v418 = vld [vmem:[%s219 + $0x4b8] sm:$0xff]
        %v419 = vld [vmem:[%s219 + $0x4c0] sm:$0xff]
        %v420 = vld [vmem:[%s219 + $0x4c8] sm:$0xff]
        %v421 = vld [vmem:[%s219 + $0x4d0] sm:$0xff]
        %v422 = vld [vmem:[%s219 + $0x4d8] sm:$0xff]
        %v423 = vld [vmem:[%s219 + $0x4e0] sm:$0xff]
        %v424 = vld [vmem:[%s219 + $0x4e8] sm:$0xff]
        %v425 = vld [vmem:[%s219 + $0x4f0] sm:$0xff]
        %v426 = vld [vmem:[%s219 + $0x4f8] sm:$0xff]
        %v427 = vld [vmem:[%s219 + $0x500] sm:$0xff]
        %v428 = vld [vmem:[%s219 + $0x508] sm:$0xff]
        %v429 = vld [vmem:[%s219 + $0x510] sm:$0xff]
        %v430 = vld [vmem:[%s219 + $0x518] sm:$0xff]
        %v431 = vld [vmem:[%s219 + $0x520] sm:$0xff]
        %v432 = vld [vmem:[%s219 + $0x528] sm:$0xff]
        %v433 = vld [vmem:[%s219 + $0x530] sm:$0xff]
        %v434 = vld [vmem:[%s219 + $0x538] sm:$0xff]
        %v435 = vld [vmem:[%s219 + $0x540] sm:$0xff]
        %v436 = vld [vmem:[%s219 + $0x548] sm:$0xff]
        %v437 = vld [vmem:[%s219 + $0x550] sm:$0xff]
        %v438 = vld [vmem:[%s219 + $0x558] sm:$0xff]
        %v439 = vld [vmem:[%s219 + $0x560] sm:$0xff]
        %v440 = vld [vmem:[%s219 + $0x568] sm:$0xff]
        %v441 = vld [vmem:[%s219 + $0x570] sm:$0xff]
        %v442 = vld [vmem:[%s219 + $0x578] sm:$0xff]
        %v443 = vld [vmem:[%s219 + $0x580] sm:$0xff]
        %v444 = vld [vmem:[%s219 + $0x588] sm:$0xff]
        %v445 = vld [vmem:[%s219 + $0x590] sm:$0xff]
        %v446 = vld [vmem:[%s219 + $0x598] sm:$0xff]
        %v447 = vld [vmem:[%s219 + $0x5a0] sm:$0xff]
        %v448 = vld [vmem:[%s219 + $0x5a8] sm:$0xff]
        %v449 = vld [vmem:[%s219 + $0x5b0] sm:$0xff]
        %v450 = vld [vmem:[%s219 + $0x5b8] sm:$0xff]
        %v451 = vld [vmem:[%s219 + $0x5c0] sm:$0xff]
        %v452 = vld [vmem:[%s219 + $0x5c8] sm:$0xff]
        %v453 = vld [vmem:[%s219 + $0x5d0] sm:$0xff]
        %v454 = vld [vmem:[%s219 + $0x5d8] sm:$0xff]
        %v455 = vld [vmem:[%s219 + $0x5e0] sm:$0xff]
        %v456 = vld [vmem:[%s219 + $0x5e8] sm:$0xff]
        %v457 = vld [vmem:[%s219 + $0x5f0] sm:$0xff]
        %v458 = vld [vmem:[%s219 + $0x5f8] sm:$0xff]
        %v459 = vld [vmem:[%s219 + $0x600] sm:$0xff]
        %v460 = vld [vmem:[%s219 + $0x608] sm:$0xff]
        %v461 = vld [vmem:[%s219 + $0x610] sm:$0xff]
        %v462 = vld [vmem:[%s219 + $0x618] sm:$0xff]
        %v463 = vld [vmem:[%s219 + $0x620] sm:$0xff]
        %v464 = vld [vmem:[%s219 + $0x628] sm:$0xff]
        %v465 = vld [vmem:[%s219 + $0x630] sm:$0xff]
        %v466 = vld [vmem:[%s219 + $0x638] sm:$0xff]
        %v467 = vld [vmem:[%s219 + $0x640] sm:$0xff]
        %v468 = vld [vmem:[%s219 + $0x648] sm:$0xff]
        %v469 = vld [vmem:[%s219 + $0x650] sm:$0xff]
        %v470 = vld [vmem:[%s219 + $0x658] sm:$0xff]
        %v471 = vld [vmem:[%s219 + $0x660] sm:$0xff]
        %v472 = vld [vmem:[%s219 + $0x668] sm:$0xff]
        %v473 = vld [vmem:[%s219 + $0x670] sm:$0xff]
        %v474 = vld [vmem:[%s219 + $0x678] sm:$0xff]
        %v475 = vld [vmem:[%s219 + $0x680] sm:$0xff]
        %v476 = vld [vmem:[%s219 + $0x688] sm:$0xff]
        %v477 = vld [vmem:[%s219 + $0x690] sm:$0xff]
        %v478 = vld [vmem:[%s219 + $0x698] sm:$0xff]
        %v479 = vld [vmem:[%s219 + $0x6a0] sm:$0xff]
        %v480 = vld [vmem:[%s219 + $0x6a8] sm:$0xff]
        %v481 = vld [vmem:[%s219 + $0x6b0] sm:$0xff]
        %v482 = vld [vmem:[%s219 + $0x6b8] sm:$0xff]
        %v483 = vld [vmem:[%s219 + $0x6c0] sm:$0xff]
        %v484 = vld [vmem:[%s219 + $0x6c8] sm:$0xff]
        %v485 = vld [vmem:[%s219 + $0x6d0] sm:$0xff]
        %v486 = vld [vmem:[%s219 + $0x6d8] sm:$0xff]
        %v487 = vld [vmem:[%s219 + $0x6e0] sm:$0xff]
        %v488 = vld [vmem:[%s219 + $0x6e8] sm:$0xff]
        %v489 = vld [vmem:[%s219 + $0x6f0] sm:$0xff]
        %v490 = vld [vmem:[%s219 + $0x6f8] sm:$0xff]
        %v491 = vld [vmem:[%s219 + $0x700] sm:$0xff]
        %v492 = vld [vmem:[%s219 + $0x708] sm:$0xff]
        %v493 = vld [vmem:[%s219 + $0x710] sm:$0xff]
        %v494 = vld [vmem:[%s219 + $0x718] sm:$0xff]
        %v495 = vld [vmem:[%s219 + $0x720] sm:$0xff]
        %v496 = vld [vmem:[%s219 + $0x728] sm:$0xff]
        %v497 = vld [vmem:[%s219 + $0x730] sm:$0xff]
        %v498 = vld [vmem:[%s219 + $0x738] sm:$0xff]
        %v499 = vld [vmem:[%s219 + $0x740] sm:$0xff]
        %v500 = vld [vmem:[%s219 + $0x748] sm:$0xff]
        %v501 = vld [vmem:[%s219 + $0x750] sm:$0xff]
        %v502 = vld [vmem:[%s219 + $0x758] sm:$0xff]
        %v503 = vld [vmem:[%s219 + $0x760] sm:$0xff]
        %v504 = vld [vmem:[%s219 + $0x768] sm:$0xff]
        %v505 = vld [vmem:[%s219 + $0x770] sm:$0xff]
        %v506 = vld [vmem:[%s219 + $0x778] sm:$0xff]
        %v507 = vld [vmem:[%s219 + $0x780] sm:$0xff]
        %v508 = vld [vmem:[%s219 + $0x788] sm:$0xff]
        %v509 = vld [vmem:[%s219 + $0x790] sm:$0xff]
        %v510 = vld [vmem:[%s219 + $0x798] sm:$0xff]
        %v511 = vld [vmem:[%s219 + $0x7a0] sm:$0xff]
        %v512 = vld [vmem:[%s219 + $0x7a8] sm:$0xff]
        %v513 = vld [vmem:[%s219 + $0x7b0] sm:$0xff]
        %v514 = vld [vmem:[%s219 + $0x7b8] sm:$0xff]
        %v515 = vld [vmem:[%s219 + $0x7c0] sm:$0xff]
        %v516 = vld [vmem:[%s219 + $0x7c8] sm:$0xff]
        %v517 = vld [vmem:[%s219 + $0x7d0] sm:$0xff]
        %v518 = vld [vmem:[%s219 + $0x7d8] sm:$0xff]
        %v519 = vld [vmem:[%s219 + $0x7e0] sm:$0xff]
        %v520 = vld [vmem:[%s219 + $0x7e8] sm:$0xff]
        %v521 = vld [vmem:[%s219 + $0x7f0] sm:$0xff]
        %v522 = vld [vmem:[%s219 + $0x7f8] sm:$0xff]
        %v523 = vld [vmem:[%s219 + $0x800] sm:$0xff]
        %v524 = vld [vmem:[%s219 + $0x808] sm:$0xff]
        %v525 = vld [vmem:[%s219 + $0x810] sm:$0xff]
        %v526 = vld [vmem:[%s219 + $0x818] sm:$0xff]
        %v527 = vld [vmem:[%s219 + $0x820] sm:$0xff]
        %v528 = vld [vmem:[%s219 + $0x828] sm:$0xff]
        %v529 = vld [vmem:[%s219 + $0x830] sm:$0xff]
        %v530 = vld [vmem:[%s219 + $0x838] sm:$0xff]
        %v531 = vld [vmem:[%s219 + $0x840] sm:$0xff]
        %v532 = vld [vmem:[%s219 + $0x848] sm:$0xff]
        %v533 = vld [vmem:[%s219 + $0x850] sm:$0xff]
        %v534 = vld [vmem:[%s219 + $0x858] sm:$0xff]
        %v535 = vld [vmem:[%s219 + $0x860] sm:$0xff]
        %v536 = vld [vmem:[%s219 + $0x868] sm:$0xff]
        %v537 = vld [vmem:[%s219 + $0x870] sm:$0xff]
        %v538 = vld [vmem:[%s219 + $0x878] sm:$0xff]
        %v539 = vld [vmem:[%s219 + $0x880] sm:$0xff]
        %v540 = vld [vmem:[%s219 + $0x888] sm:$0xff]
        %v541 = vld [vmem:[%s219 + $0x890] sm:$0xff]
        %v542 = vld [vmem:[%s219 + $0x898] sm:$0xff]
        %v543 = vld [vmem:[%s219 + $0x8a0] sm:$0xff]
        %v544 = vld [vmem:[%s219 + $0x8a8] sm:$0xff]
        %v545 = vld [vmem:[%s219 + $0x8b0] sm:$0xff]
        %v546 = vld [vmem:[%s219 + $0x8b8] sm:$0xff]
        %v547 = vld [vmem:[%s219 + $0x8c0] sm:$0xff]
        %v548 = vld [vmem:[%s219 + $0x8c8] sm:$0xff]
        %v549 = vld [vmem:[%s219 + $0x8d0] sm:$0xff]
        %v550 = vld [vmem:[%s219 + $0x8d8] sm:$0xff]
        %v551 = vld [vmem:[%s219 + $0x8e0] sm:$0xff]
        %v552 = vld [vmem:[%s219 + $0x8e8] sm:$0xff]
        %v553 = vld [vmem:[%s219 + $0x8f0] sm:$0xff]
        %v554 = vld [vmem:[%s219 + $0x8f8] sm:$0xff]
        %v555 = vld [vmem:[%s219 + $0x900] sm:$0xff]
        %v556 = vld [vmem:[%s219 + $0x908] sm:$0xff]
        %v557 = vld [vmem:[%s219 + $0x910] sm:$0xff]
        %v558 = vld [vmem:[%s219 + $0x918] sm:$0xff]
        %v559 = vld [vmem:[%s219 + $0x920] sm:$0xff]
        %v560 = vld [vmem:[%s219 + $0x928] sm:$0xff]
        %v561 = vld [vmem:[%s219 + $0x930] sm:$0xff]
        %v562 = vld [vmem:[%s219 + $0x938] sm:$0xff]
        %v563 = vld [vmem:[%s219 + $0x940] sm:$0xff]
        %v564 = vld [vmem:[%s219 + $0x948] sm:$0xff]
        %v565 = vld [vmem:[%s219 + $0x950] sm:$0xff]
        %v566 = vld [vmem:[%s219 + $0x958] sm:$0xff]
        %v567 = vld [vmem:[%s219 + $0x960] sm:$0xff]
        %v568 = vld [vmem:[%s219 + $0x968] sm:$0xff]
        %v569 = vld [vmem:[%s219 + $0x970] sm:$0xff]
        %v570 = vld [vmem:[%s219 + $0x978] sm:$0xff]
        %v571 = vld [vmem:[%s219 + $0x980] sm:$0xff]
        %v572 = vld [vmem:[%s219 + $0x988] sm:$0xff]
        %v573 = vld [vmem:[%s219 + $0x990] sm:$0xff]
        %v574 = vld [vmem:[%s219 + $0x998] sm:$0xff]
        %v575 = vld [vmem:[%s219 + $0x9a0] sm:$0xff]
        %v576 = vld [vmem:[%s219 + $0x9a8] sm:$0xff]
        %v577 = vld [vmem:[%s219 + $0x9b0] sm:$0xff]
        %v578 = vld [vmem:[%s219 + $0x9b8] sm:$0xff]
        %v579 = vld [vmem:[%s219 + $0x9c0] sm:$0xff]
        %v580 = vld [vmem:[%s219 + $0x9c8] sm:$0xff]
        %v581 = vld [vmem:[%s219 + $0x9d0] sm:$0xff]
        %v582 = vld [vmem:[%s219 + $0x9d8] sm:$0xff]
        %v583 = vld [vmem:[%s219 + $0x9e0] sm:$0xff]
        %v584 = vld [vmem:[%s219 + $0x9e8] sm:$0xff]
        %v585 = vld [vmem:[%s219 + $0x9f0] sm:$0xff]
        %v586 = vld [vmem:[%s219 + $0x9f8] sm:$0xff]
        %v587 = vld [vmem:[%s262] sm:$0xff]
        %v588 = vld [vmem:[%s262 + $0x8] sm:$0xff]
        %v589 = vld [vmem:[%s262 + $0x10] sm:$0xff]
        %v590 = vld [vmem:[%s262 + $0x18] sm:$0xff]
        %v591 = vld [vmem:[%s262 + $0x20] sm:$0xff]
        %v592 = vld [vmem:[%s262 + $0x28] sm:$0xff]
        %v593 = vld [vmem:[%s262 + $0x30] sm:$0xff]
        %v594 = vld [vmem:[%s262 + $0x38] sm:$0xff]
        %v595 = vld [vmem:[%s262 + $0x40] sm:$0xff]
        %v596 = vld [vmem:[%s262 + $0x48] sm:$0xff]
        %v597 = vld [vmem:[%s262 + $0x50] sm:$0xff]
        %v598 = vld [vmem:[%s262 + $0x58] sm:$0xff]
        %v599 = vld [vmem:[%s262 + $0x60] sm:$0xff]
        %v600 = vld [vmem:[%s262 + $0x68] sm:$0xff]
        %v601 = vld [vmem:[%s262 + $0x70] sm:$0xff]
        %v602 = vld [vmem:[%s262 + $0x78] sm:$0xff]
        %v603 = vld [vmem:[%s262 + $0x80] sm:$0xff]
        %v604 = vld [vmem:[%s262 + $0x88] sm:$0xff]
        %v605 = vld [vmem:[%s262 + $0x90] sm:$0xff]
        %v606 = vld [vmem:[%s262 + $0x98] sm:$0xff]
        %v607 = vld [vmem:[%s262 + $0xa0] sm:$0xff]
        %v608 = vld [vmem:[%s262 + $0xa8] sm:$0xff]
        %v609 = vld [vmem:[%s262 + $0xb0] sm:$0xff]
        %v610 = vld [vmem:[%s262 + $0xb8] sm:$0xff]
        %v611 = vld [vmem:[%s262 + $0xc0] sm:$0xff]
        %v612 = vld [vmem:[%s262 + $0xc8] sm:$0xff]
        %v613 = vld [vmem:[%s262 + $0xd0] sm:$0xff]
        %v614 = vld [vmem:[%s262 + $0xd8] sm:$0xff]
        %v615 = vld [vmem:[%s262 + $0xe0] sm:$0xff]
        %v616 = vld [vmem:[%s262 + $0xe8] sm:$0xff]
        %v617 = vld [vmem:[%s262 + $0xf0] sm:$0xff]
        %v618 = vld [vmem:[%s262 + $0xf8] sm:$0xff]
        %v619 = vld [vmem:[%s262 + $0x100] sm:$0xff]
        %v620 = vld [vmem:[%s262 + $0x108] sm:$0xff]
        %v621 = vld [vmem:[%s262 + $0x110] sm:$0xff]
        %v622 = vld [vmem:[%s262 + $0x118] sm:$0xff]
        %v623 = vld [vmem:[%s262 + $0x120] sm:$0xff]
        %v624 = vld [vmem:[%s262 + $0x128] sm:$0xff]
        %v625 = vld [vmem:[%s262 + $0x130] sm:$0xff]
        %v626 = vld [vmem:[%s262 + $0x138] sm:$0xff]
        %v627 = vld [vmem:[%s262 + $0x140] sm:$0xff]
        %v628 = vld [vmem:[%s262 + $0x148] sm:$0xff]
        %v629 = vld [vmem:[%s262 + $0x150] sm:$0xff]
        %v630 = vld [vmem:[%s262 + $0x158] sm:$0xff]
        %v631 = vld [vmem:[%s262 + $0x160] sm:$0xff]
        %v632 = vld [vmem:[%s262 + $0x168] sm:$0xff]
        %v633 = vld [vmem:[%s262 + $0x170] sm:$0xff]
        %v634 = vld [vmem:[%s262 + $0x178] sm:$0xff]
        %v635 = vld [vmem:[%s262 + $0x180] sm:$0xff]
        %v636 = vld [vmem:[%s262 + $0x188] sm:$0xff]
        %v637 = vld [vmem:[%s262 + $0x190] sm:$0xff]
        %v638 = vld [vmem:[%s262 + $0x198] sm:$0xff]
        %v639 = vld [vmem:[%s262 + $0x1a0] sm:$0xff]
        %v640 = vld [vmem:[%s262 + $0x1a8] sm:$0xff]
        %v641 = vld [vmem:[%s262 + $0x1b0] sm:$0xff]
        %v642 = vld [vmem:[%s262 + $0x1b8] sm:$0xff]
        %v643 = vld [vmem:[%s262 + $0x1c0] sm:$0xff]
        %v644 = vld [vmem:[%s262 + $0x1c8] sm:$0xff]
        %v645 = vld [vmem:[%s262 + $0x1d0] sm:$0xff]
        %v646 = vld [vmem:[%s262 + $0x1d8] sm:$0xff]
        %v647 = vld [vmem:[%s262 + $0x1e0] sm:$0xff]
        %v648 = vld [vmem:[%s262 + $0x1e8] sm:$0xff]
        %v649 = vld [vmem:[%s262 + $0x1f0] sm:$0xff]
        %v650 = vld [vmem:[%s262 + $0x1f8] sm:$0xff]
        %v651 = vld [vmem:[%s262 + $0x200] sm:$0xff]
        %v652 = vld [vmem:[%s262 + $0x208] sm:$0xff]
        %v653 = vld [vmem:[%s262 + $0x210] sm:$0xff]
        %v654 = vld [vmem:[%s262 + $0x218] sm:$0xff]
        %v655 = vld [vmem:[%s262 + $0x220] sm:$0xff]
        %v656 = vld [vmem:[%s262 + $0x228] sm:$0xff]
        %v657 = vld [vmem:[%s262 + $0x230] sm:$0xff]
        %v658 = vld [vmem:[%s262 + $0x238] sm:$0xff]
        %v659 = vld [vmem:[%s262 + $0x240] sm:$0xff]
        %v660 = vld [vmem:[%s262 + $0x248] sm:$0xff]
        %v661 = vld [vmem:[%s262 + $0x250] sm:$0xff]
        %v662 = vld [vmem:[%s262 + $0x258] sm:$0xff]
        %v663 = vld [vmem:[%s262 + $0x260] sm:$0xff]
        %v664 = vld [vmem:[%s262 + $0x268] sm:$0xff]
        %v665 = vld [vmem:[%s262 + $0x270] sm:$0xff]
        %v666 = vld [vmem:[%s262 + $0x278] sm:$0xff]
        %v667 = vld [vmem:[%s262 + $0x280] sm:$0xff]
        %v668 = vld [vmem:[%s262 + $0x288] sm:$0xff]
        %v669 = vld [vmem:[%s262 + $0x290] sm:$0xff]
        %v670 = vld [vmem:[%s262 + $0x298] sm:$0xff]
        %v671 = vld [vmem:[%s262 + $0x2a0] sm:$0xff]
        %v672 = vld [vmem:[%s262 + $0x2a8] sm:$0xff]
        %v673 = vld [vmem:[%s262 + $0x2b0] sm:$0xff]
        %v674 = vld [vmem:[%s262 + $0x2b8] sm:$0xff]
        %v675 = vld [vmem:[%s262 + $0x2c0] sm:$0xff]
        %v676 = vld [vmem:[%s262 + $0x2c8] sm:$0xff]
        %v677 = vld [vmem:[%s262 + $0x2d0] sm:$0xff]
        %v678 = vld [vmem:[%s262 + $0x2d8] sm:$0xff]
        %v679 = vld [vmem:[%s262 + $0x2e0] sm:$0xff]
        %v680 = vld [vmem:[%s262 + $0x2e8] sm:$0xff]
        %v681 = vld [vmem:[%s262 + $0x2f0] sm:$0xff]
        %v682 = vld [vmem:[%s262 + $0x2f8] sm:$0xff]
        %v683 = vld [vmem:[%s262 + $0x300] sm:$0xff]
        %v684 = vld [vmem:[%s262 + $0x308] sm:$0xff]
        %v685 = vld [vmem:[%s262 + $0x310] sm:$0xff]
        %v686 = vld [vmem:[%s262 + $0x318] sm:$0xff]
        %v687 = vld [vmem:[%s262 + $0x320] sm:$0xff]
        %v688 = vld [vmem:[%s262 + $0x328] sm:$0xff]
        %v689 = vld [vmem:[%s262 + $0x330] sm:$0xff]
        %v690 = vld [vmem:[%s262 + $0x338] sm:$0xff]
        %v691 = vld [vmem:[%s262 + $0x340] sm:$0xff]
        %v692 = vld [vmem:[%s262 + $0x348] sm:$0xff]
        %v693 = vld [vmem:[%s262 + $0x350] sm:$0xff]
        %v694 = vld [vmem:[%s262 + $0x358] sm:$0xff]
        %v695 = vld [vmem:[%s262 + $0x360] sm:$0xff]
        %v696 = vld [vmem:[%s262 + $0x368] sm:$0xff]
        %v697 = vld [vmem:[%s262 + $0x370] sm:$0xff]
        %v698 = vld [vmem:[%s262 + $0x378] sm:$0xff]
        %v699 = vld [vmem:[%s262 + $0x380] sm:$0xff]
        %v700 = vld [vmem:[%s262 + $0x388] sm:$0xff]
        %v701 = vld [vmem:[%s262 + $0x390] sm:$0xff]
        %v702 = vld [vmem:[%s262 + $0x398] sm:$0xff]
        %v703 = vld [vmem:[%s262 + $0x3a0] sm:$0xff]
        %v704 = vld [vmem:[%s262 + $0x3a8] sm:$0xff]
        %v705 = vld [vmem:[%s262 + $0x3b0] sm:$0xff]
        %v706 = vld [vmem:[%s262 + $0x3b8] sm:$0xff]
        %v707 = vld [vmem:[%s262 + $0x3c0] sm:$0xff]
        %v708 = vld [vmem:[%s262 + $0x3c8] sm:$0xff]
        %v709 = vld [vmem:[%s262 + $0x3d0] sm:$0xff]
        %v710 = vld [vmem:[%s262 + $0x3d8] sm:$0xff]
        %v711 = vld [vmem:[%s262 + $0x3e0] sm:$0xff]
        %v712 = vld [vmem:[%s262 + $0x3e8] sm:$0xff]
        %v713 = vld [vmem:[%s262 + $0x3f0] sm:$0xff]
        %v714 = vld [vmem:[%s262 + $0x3f8] sm:$0xff]
        %v715 = vld [vmem:[%s262 + $0x400] sm:$0xff]
        %v716 = vld [vmem:[%s262 + $0x408] sm:$0xff]
        %v717 = vld [vmem:[%s262 + $0x410] sm:$0xff]
        %v718 = vld [vmem:[%s262 + $0x418] sm:$0xff]
        %v719 = vld [vmem:[%s262 + $0x420] sm:$0xff]
        %v720 = vld [vmem:[%s262 + $0x428] sm:$0xff]
        %v721 = vld [vmem:[%s262 + $0x430] sm:$0xff]
        %v722 = vld [vmem:[%s262 + $0x438] sm:$0xff]
        %v723 = vld [vmem:[%s262 + $0x440] sm:$0xff]
        %v724 = vld [vmem:[%s262 + $0x448] sm:$0xff]
        %v725 = vld [vmem:[%s262 + $0x450] sm:$0xff]
        %v726 = vld [vmem:[%s262 + $0x458] sm:$0xff]
        %v727 = vld [vmem:[%s262 + $0x460] sm:$0xff]
        %v728 = vld [vmem:[%s262 + $0x468] sm:$0xff]
        %v729 = vld [vmem:[%s262 + $0x470] sm:$0xff]
        %v730 = vld [vmem:[%s262 + $0x478] sm:$0xff]
        %v731 = vld [vmem:[%s262 + $0x480] sm:$0xff]
        %v732 = vld [vmem:[%s262 + $0x488] sm:$0xff]
        %v733 = vld [vmem:[%s262 + $0x490] sm:$0xff]
        %v734 = vld [vmem:[%s262 + $0x498] sm:$0xff]
        %v735 = vld [vmem:[%s262 + $0x4a0] sm:$0xff]
        %v736 = vld [vmem:[%s262 + $0x4a8] sm:$0xff]
        %v737 = vld [vmem:[%s262 + $0x4b0] sm:$0xff]
        %v738 = vld [vmem:[%s262 + $0x4b8] sm:$0xff]
        %v739 = vld [vmem:[%s262 + $0x4c0] sm:$0xff]
        %v740 = vld [vmem:[%s262 + $0x4c8] sm:$0xff]
        %v741 = vld [vmem:[%s262 + $0x4d0] sm:$0xff]
        %v742 = vld [vmem:[%s262 + $0x4d8] sm:$0xff]
        %v743 = vld [vmem:[%s262 + $0x4e0] sm:$0xff]
        %v744 = vld [vmem:[%s262 + $0x4e8] sm:$0xff]
        %v745 = vld [vmem:[%s262 + $0x4f0] sm:$0xff]
        %v746 = vld [vmem:[%s262 + $0x4f8] sm:$0xff]
        %748 = vset.pattern.permute.xlu0 0
        %749 = vperm.xlu0 %748, %v587
        %v750 = vpop.permute.xlu0 %749
        %753 = vset.pattern.permute.xlu0 0
        %754 = vperm.xlu0 %753, %v588
        %v755 = vpop.permute.xlu0 %754
        %758 = vset.pattern.permute.xlu0 0
        %759 = vperm.xlu0 %758, %v589
        %v760 = vpop.permute.xlu0 %759
        %763 = vset.pattern.permute.xlu0 0
        %764 = vperm.xlu0 %763, %v590
        %v765 = vpop.permute.xlu0 %764
        %768 = vset.pattern.permute.xlu0 0
        %769 = vperm.xlu0 %768, %v591
        %v770 = vpop.permute.xlu0 %769
        %773 = vset.pattern.permute.xlu0 0
        %774 = vperm.xlu0 %773, %v592
        %v775 = vpop.permute.xlu0 %774
        %778 = vset.pattern.permute.xlu0 0
        %779 = vperm.xlu0 %778, %v593
        %v780 = vpop.permute.xlu0 %779
        %783 = vset.pattern.permute.xlu0 0
        %784 = vperm.xlu0 %783, %v594
        %v785 = vpop.permute.xlu0 %784
        %788 = vset.pattern.permute.xlu0 0
        %789 = vperm.xlu0 %788, %v595
        %v790 = vpop.permute.xlu0 %789
        %793 = vset.pattern.permute.xlu0 0
        %794 = vperm.xlu0 %793, %v596
        %v795 = vpop.permute.xlu0 %794
        %798 = vset.pattern.permute.xlu0 0
        %799 = vperm.xlu0 %798, %v597
        %v800 = vpop.permute.xlu0 %799
        %803 = vset.pattern.permute.xlu0 0
        %804 = vperm.xlu0 %803, %v598
        %v805 = vpop.permute.xlu0 %804
        %808 = vset.pattern.permute.xlu0 0
        %809 = vperm.xlu0 %808, %v599
        %v810 = vpop.permute.xlu0 %809
        %813 = vset.pattern.permute.xlu0 0
        %814 = vperm.xlu0 %813, %v600
        %v815 = vpop.permute.xlu0 %814
        %818 = vset.pattern.permute.xlu0 0
        %819 = vperm.xlu0 %818, %v601
        %v820 = vpop.permute.xlu0 %819
        %823 = vset.pattern.permute.xlu0 0
        %824 = vperm.xlu0 %823, %v602
        %v825 = vpop.permute.xlu0 %824
        %828 = vset.pattern.permute.xlu0 0
        %829 = vperm.xlu0 %828, %v603
        %v830 = vpop.permute.xlu0 %829
        %833 = vset.pattern.permute.xlu0 0
        %834 = vperm.xlu0 %833, %v604
        %v835 = vpop.permute.xlu0 %834
        %838 = vset.pattern.permute.xlu0 0
        %839 = vperm.xlu0 %838, %v605
        %v840 = vpop.permute.xlu0 %839
        %843 = vset.pattern.permute.xlu0 0
        %844 = vperm.xlu0 %843, %v606
        %v845 = vpop.permute.xlu0 %844
        %848 = vset.pattern.permute.xlu0 0
        %849 = vperm.xlu0 %848, %v607
        %v850 = vpop.permute.xlu0 %849
        %853 = vset.pattern.permute.xlu0 0
        %854 = vperm.xlu0 %853, %v608
        %v855 = vpop.permute.xlu0 %854
        %858 = vset.pattern.permute.xlu0 0
        %859 = vperm.xlu0 %858, %v609
        %v860 = vpop.permute.xlu0 %859
        %863 = vset.pattern.permute.xlu0 0
        %864 = vperm.xlu0 %863, %v610
        %v865 = vpop.permute.xlu0 %864
        %868 = vset.pattern.permute.xlu0 0
        %869 = vperm.xlu0 %868, %v611
        %v870 = vpop.permute.xlu0 %869
        %873 = vset.pattern.permute.xlu0 0
        %874 = vperm.xlu0 %873, %v612
        %v875 = vpop.permute.xlu0 %874
        %878 = vset.pattern.permute.xlu0 0
        %879 = vperm.xlu0 %878, %v613
        %v880 = vpop.permute.xlu0 %879
        %883 = vset.pattern.permute.xlu0 0
        %884 = vperm.xlu0 %883, %v614
        %v885 = vpop.permute.xlu0 %884
        %888 = vset.pattern.permute.xlu0 0
        %889 = vperm.xlu0 %888, %v615
        %v890 = vpop.permute.xlu0 %889
        %893 = vset.pattern.permute.xlu0 0
        %894 = vperm.xlu0 %893, %v616
        %v895 = vpop.permute.xlu0 %894
        %898 = vset.pattern.permute.xlu0 0
        %899 = vperm.xlu0 %898, %v617
        %v900 = vpop.permute.xlu0 %899
        %903 = vset.pattern.permute.xlu0 0
        %904 = vperm.xlu0 %903, %v618
        %v905 = vpop.permute.xlu0 %904
        %908 = vset.pattern.permute.xlu0 0
        %909 = vperm.xlu0 %908, %v619
        %v910 = vpop.permute.xlu0 %909
        %913 = vset.pattern.permute.xlu0 0
        %914 = vperm.xlu0 %913, %v620
        %v915 = vpop.permute.xlu0 %914
        %918 = vset.pattern.permute.xlu0 0
        %919 = vperm.xlu0 %918, %v621
        %v920 = vpop.permute.xlu0 %919
        %923 = vset.pattern.permute.xlu0 0
        %924 = vperm.xlu0 %923, %v622
        %v925 = vpop.permute.xlu0 %924
        %928 = vset.pattern.permute.xlu0 0
        %929 = vperm.xlu0 %928, %v623
        %v930 = vpop.permute.xlu0 %929
        %933 = vset.pattern.permute.xlu0 0
        %934 = vperm.xlu0 %933, %v624
        %v935 = vpop.permute.xlu0 %934
        %938 = vset.pattern.permute.xlu0 0
        %939 = vperm.xlu0 %938, %v625
        %v940 = vpop.permute.xlu0 %939
        %943 = vset.pattern.permute.xlu0 0
        %944 = vperm.xlu0 %943, %v626
        %v945 = vpop.permute.xlu0 %944
        %948 = vset.pattern.permute.xlu0 0
        %949 = vperm.xlu0 %948, %v627
        %v950 = vpop.permute.xlu0 %949
        %953 = vset.pattern.permute.xlu0 0
        %954 = vperm.xlu0 %953, %v628
        %v955 = vpop.permute.xlu0 %954
        %958 = vset.pattern.permute.xlu0 0
        %959 = vperm.xlu0 %958, %v629
        %v960 = vpop.permute.xlu0 %959
        %963 = vset.pattern.permute.xlu0 0
        %964 = vperm.xlu0 %963, %v630
        %v965 = vpop.permute.xlu0 %964
        %968 = vset.pattern.permute.xlu0 0
        %969 = vperm.xlu0 %968, %v631
        %v970 = vpop.permute.xlu0 %969
        %973 = vset.pattern.permute.xlu0 0
        %974 = vperm.xlu0 %973, %v632
        %v975 = vpop.permute.xlu0 %974
        %978 = vset.pattern.permute.xlu0 0
        %979 = vperm.xlu0 %978, %v633
        %v980 = vpop.permute.xlu0 %979
        %983 = vset.pattern.permute.xlu0 0
        %984 = vperm.xlu0 %983, %v634
        %v985 = vpop.permute.xlu0 %984
        %988 = vset.pattern.permute.xlu0 0
        %989 = vperm.xlu0 %988, %v635
        %v990 = vpop.permute.xlu0 %989
        %993 = vset.pattern.permute.xlu0 0
        %994 = vperm.xlu0 %993, %v636
        %v995 = vpop.permute.xlu0 %994
        %998 = vset.pattern.permute.xlu0 0
        %999 = vperm.xlu0 %998, %v637
        %v1000 = vpop.permute.xlu0 %999
        %1003 = vset.pattern.permute.xlu0 0
        %1004 = vperm.xlu0 %1003, %v638
        %v1005 = vpop.permute.xlu0 %1004
        %1008 = vset.pattern.permute.xlu0 0
        %1009 = vperm.xlu0 %1008, %v639
        %v1010 = vpop.permute.xlu0 %1009
        %1013 = vset.pattern.permute.xlu0 0
        %1014 = vperm.xlu0 %1013, %v640
        %v1015 = vpop.permute.xlu0 %1014
        %1018 = vset.pattern.permute.xlu0 0
        %1019 = vperm.xlu0 %1018, %v641
        %v1020 = vpop.permute.xlu0 %1019
        %1023 = vset.pattern.permute.xlu0 0
        %1024 = vperm.xlu0 %1023, %v642
        %v1025 = vpop.permute.xlu0 %1024
        %1028 = vset.pattern.permute.xlu0 0
        %1029 = vperm.xlu0 %1028, %v643
        %v1030 = vpop.permute.xlu0 %1029
        %1033 = vset.pattern.permute.xlu0 0
        %1034 = vperm.xlu0 %1033, %v644
        %v1035 = vpop.permute.xlu0 %1034
        %1038 = vset.pattern.permute.xlu0 0
        %1039 = vperm.xlu0 %1038, %v645
        %v1040 = vpop.permute.xlu0 %1039
        %1043 = vset.pattern.permute.xlu0 0
        %1044 = vperm.xlu0 %1043, %v646
        %v1045 = vpop.permute.xlu0 %1044
        %1048 = vset.pattern.permute.xlu0 0
        %1049 = vperm.xlu0 %1048, %v647
        %v1050 = vpop.permute.xlu0 %1049
        %1053 = vset.pattern.permute.xlu0 0
        %1054 = vperm.xlu0 %1053, %v648
        %v1055 = vpop.permute.xlu0 %1054
        %1058 = vset.pattern.permute.xlu0 0
        %1059 = vperm.xlu0 %1058, %v649
        %v1060 = vpop.permute.xlu0 %1059
        %1063 = vset.pattern.permute.xlu0 0
        %1064 = vperm.xlu0 %1063, %v650
        %v1065 = vpop.permute.xlu0 %1064
        %1068 = vset.pattern.permute.xlu0 0
        %1069 = vperm.xlu0 %1068, %v651
        %v1070 = vpop.permute.xlu0 %1069
        %1073 = vset.pattern.permute.xlu0 0
        %1074 = vperm.xlu0 %1073, %v652
        %v1075 = vpop.permute.xlu0 %1074
        %1078 = vset.pattern.permute.xlu0 0
        %1079 = vperm.xlu0 %1078, %v653
        %v1080 = vpop.permute.xlu0 %1079
        %1083 = vset.pattern.permute.xlu0 0
        %1084 = vperm.xlu0 %1083, %v654
        %v1085 = vpop.permute.xlu0 %1084
        %1088 = vset.pattern.permute.xlu0 0
        %1089 = vperm.xlu0 %1088, %v655
        %v1090 = vpop.permute.xlu0 %1089
        %1093 = vset.pattern.permute.xlu0 0
        %1094 = vperm.xlu0 %1093, %v656
        %v1095 = vpop.permute.xlu0 %1094
        %1098 = vset.pattern.permute.xlu0 0
        %1099 = vperm.xlu0 %1098, %v657
        %v1100 = vpop.permute.xlu0 %1099
        %1103 = vset.pattern.permute.xlu0 0
        %1104 = vperm.xlu0 %1103, %v658
        %v1105 = vpop.permute.xlu0 %1104
        %1108 = vset.pattern.permute.xlu0 0
        %1109 = vperm.xlu0 %1108, %v659
        %v1110 = vpop.permute.xlu0 %1109
        %1113 = vset.pattern.permute.xlu0 0
        %1114 = vperm.xlu0 %1113, %v660
        %v1115 = vpop.permute.xlu0 %1114
        %1118 = vset.pattern.permute.xlu0 0
        %1119 = vperm.xlu0 %1118, %v661
        %v1120 = vpop.permute.xlu0 %1119
        %1123 = vset.pattern.permute.xlu0 0
        %1124 = vperm.xlu0 %1123, %v662
        %v1125 = vpop.permute.xlu0 %1124
        %1128 = vset.pattern.permute.xlu0 0
        %1129 = vperm.xlu0 %1128, %v663
        %v1130 = vpop.permute.xlu0 %1129
        %1133 = vset.pattern.permute.xlu0 0
        %1134 = vperm.xlu0 %1133, %v664
        %v1135 = vpop.permute.xlu0 %1134
        %1138 = vset.pattern.permute.xlu0 0
        %1139 = vperm.xlu0 %1138, %v665
        %v1140 = vpop.permute.xlu0 %1139
        %1143 = vset.pattern.permute.xlu0 0
        %1144 = vperm.xlu0 %1143, %v666
        %v1145 = vpop.permute.xlu0 %1144
        %1148 = vset.pattern.permute.xlu0 0
        %1149 = vperm.xlu0 %1148, %v667
        %v1150 = vpop.permute.xlu0 %1149
        %1153 = vset.pattern.permute.xlu0 0
        %1154 = vperm.xlu0 %1153, %v668
        %v1155 = vpop.permute.xlu0 %1154
        %1158 = vset.pattern.permute.xlu0 0
        %1159 = vperm.xlu0 %1158, %v669
        %v1160 = vpop.permute.xlu0 %1159
        %1163 = vset.pattern.permute.xlu0 0
        %1164 = vperm.xlu0 %1163, %v670
        %v1165 = vpop.permute.xlu0 %1164
        %1168 = vset.pattern.permute.xlu0 0
        %1169 = vperm.xlu0 %1168, %v671
        %v1170 = vpop.permute.xlu0 %1169
        %1173 = vset.pattern.permute.xlu0 0
        %1174 = vperm.xlu0 %1173, %v672
        %v1175 = vpop.permute.xlu0 %1174
        %1178 = vset.pattern.permute.xlu0 0
        %1179 = vperm.xlu0 %1178, %v673
        %v1180 = vpop.permute.xlu0 %1179
        %1183 = vset.pattern.permute.xlu0 0
        %1184 = vperm.xlu0 %1183, %v674
        %v1185 = vpop.permute.xlu0 %1184
        %1188 = vset.pattern.permute.xlu0 0
        %1189 = vperm.xlu0 %1188, %v675
        %v1190 = vpop.permute.xlu0 %1189
        %1193 = vset.pattern.permute.xlu0 0
        %1194 = vperm.xlu0 %1193, %v676
        %v1195 = vpop.permute.xlu0 %1194
        %1198 = vset.pattern.permute.xlu0 0
        %1199 = vperm.xlu0 %1198, %v677
        %v1200 = vpop.permute.xlu0 %1199
        %1203 = vset.pattern.permute.xlu0 0
        %1204 = vperm.xlu0 %1203, %v678
        %v1205 = vpop.permute.xlu0 %1204
        %1208 = vset.pattern.permute.xlu0 0
        %1209 = vperm.xlu0 %1208, %v679
        %v1210 = vpop.permute.xlu0 %1209
        %1213 = vset.pattern.permute.xlu0 0
        %1214 = vperm.xlu0 %1213, %v680
        %v1215 = vpop.permute.xlu0 %1214
        %1218 = vset.pattern.permute.xlu0 0
        %1219 = vperm.xlu0 %1218, %v681
        %v1220 = vpop.permute.xlu0 %1219
        %1223 = vset.pattern.permute.xlu0 0
        %1224 = vperm.xlu0 %1223, %v682
        %v1225 = vpop.permute.xlu0 %1224
        %1228 = vset.pattern.permute.xlu0 0
        %1229 = vperm.xlu0 %1228, %v683
        %v1230 = vpop.permute.xlu0 %1229
        %1233 = vset.pattern.permute.xlu0 0
        %1234 = vperm.xlu0 %1233, %v684
        %v1235 = vpop.permute.xlu0 %1234
        %1238 = vset.pattern.permute.xlu0 0
        %1239 = vperm.xlu0 %1238, %v685
        %v1240 = vpop.permute.xlu0 %1239
        %1243 = vset.pattern.permute.xlu0 0
        %1244 = vperm.xlu0 %1243, %v686
        %v1245 = vpop.permute.xlu0 %1244
        %1248 = vset.pattern.permute.xlu0 0
        %1249 = vperm.xlu0 %1248, %v687
        %v1250 = vpop.permute.xlu0 %1249
        %1253 = vset.pattern.permute.xlu0 0
        %1254 = vperm.xlu0 %1253, %v688
        %v1255 = vpop.permute.xlu0 %1254
        %1258 = vset.pattern.permute.xlu0 0
        %1259 = vperm.xlu0 %1258, %v689
        %v1260 = vpop.permute.xlu0 %1259
        %1263 = vset.pattern.permute.xlu0 0
        %1264 = vperm.xlu0 %1263, %v690
        %v1265 = vpop.permute.xlu0 %1264
        %1268 = vset.pattern.permute.xlu0 0
        %1269 = vperm.xlu0 %1268, %v691
        %v1270 = vpop.permute.xlu0 %1269
        %1273 = vset.pattern.permute.xlu0 0
        %1274 = vperm.xlu0 %1273, %v692
        %v1275 = vpop.permute.xlu0 %1274
        %1278 = vset.pattern.permute.xlu0 0
        %1279 = vperm.xlu0 %1278, %v693
        %v1280 = vpop.permute.xlu0 %1279
        %1283 = vset.pattern.permute.xlu0 0
        %1284 = vperm.xlu0 %1283, %v694
        %v1285 = vpop.permute.xlu0 %1284
        %1288 = vset.pattern.permute.xlu0 0
        %1289 = vperm.xlu0 %1288, %v695
        %v1290 = vpop.permute.xlu0 %1289
        %1293 = vset.pattern.permute.xlu0 0
        %1294 = vperm.xlu0 %1293, %v696
        %v1295 = vpop.permute.xlu0 %1294
        %1298 = vset.pattern.permute.xlu0 0
        %1299 = vperm.xlu0 %1298, %v697
        %v1300 = vpop.permute.xlu0 %1299
        %1303 = vset.pattern.permute.xlu0 0
        %1304 = vperm.xlu0 %1303, %v698
        %v1305 = vpop.permute.xlu0 %1304
        %1308 = vset.pattern.permute.xlu0 0
        %1309 = vperm.xlu0 %1308, %v699
        %v1310 = vpop.permute.xlu0 %1309
        %1313 = vset.pattern.permute.xlu0 0
        %1314 = vperm.xlu0 %1313, %v700
        %v1315 = vpop.permute.xlu0 %1314
        %1318 = vset.pattern.permute.xlu0 0
        %1319 = vperm.xlu0 %1318, %v701
        %v1320 = vpop.permute.xlu0 %1319
        %1323 = vset.pattern.permute.xlu0 0
        %1324 = vperm.xlu0 %1323, %v702
        %v1325 = vpop.permute.xlu0 %1324
        %1328 = vset.pattern.permute.xlu0 0
        %1329 = vperm.xlu0 %1328, %v703
        %v1330 = vpop.permute.xlu0 %1329
        %1333 = vset.pattern.permute.xlu0 0
        %1334 = vperm.xlu0 %1333, %v704
        %v1335 = vpop.permute.xlu0 %1334
        %1338 = vset.pattern.permute.xlu0 0
        %1339 = vperm.xlu0 %1338, %v705
        %v1340 = vpop.permute.xlu0 %1339
        %1343 = vset.pattern.permute.xlu0 0
        %1344 = vperm.xlu0 %1343, %v706
        %v1345 = vpop.permute.xlu0 %1344
        %1348 = vset.pattern.permute.xlu0 0
        %1349 = vperm.xlu0 %1348, %v707
        %v1350 = vpop.permute.xlu0 %1349
        %1353 = vset.pattern.permute.xlu0 0
        %1354 = vperm.xlu0 %1353, %v708
        %v1355 = vpop.permute.xlu0 %1354
        %1358 = vset.pattern.permute.xlu0 0
        %1359 = vperm.xlu0 %1358, %v709
        %v1360 = vpop.permute.xlu0 %1359
        %1363 = vset.pattern.permute.xlu0 0
        %1364 = vperm.xlu0 %1363, %v710
        %v1365 = vpop.permute.xlu0 %1364
        %1368 = vset.pattern.permute.xlu0 0
        %1369 = vperm.xlu0 %1368, %v711
        %v1370 = vpop.permute.xlu0 %1369
        %1373 = vset.pattern.permute.xlu0 0
        %1374 = vperm.xlu0 %1373, %v712
        %v1375 = vpop.permute.xlu0 %1374
        %1378 = vset.pattern.permute.xlu0 0
        %1379 = vperm.xlu0 %1378, %v713
        %v1380 = vpop.permute.xlu0 %1379
        %1383 = vset.pattern.permute.xlu0 0
        %1384 = vperm.xlu0 %1383, %v714
        %v1385 = vpop.permute.xlu0 %1384
        %1388 = vset.pattern.permute.xlu0 0
        %1389 = vperm.xlu0 %1388, %v715
        %v1390 = vpop.permute.xlu0 %1389
        %1393 = vset.pattern.permute.xlu0 0
        %1394 = vperm.xlu0 %1393, %v716
        %v1395 = vpop.permute.xlu0 %1394
        %1398 = vset.pattern.permute.xlu0 0
        %1399 = vperm.xlu0 %1398, %v717
        %v1400 = vpop.permute.xlu0 %1399
        %1403 = vset.pattern.permute.xlu0 0
        %1404 = vperm.xlu0 %1403, %v718
        %v1405 = vpop.permute.xlu0 %1404
        %1408 = vset.pattern.permute.xlu0 0
        %1409 = vperm.xlu0 %1408, %v719
        %v1410 = vpop.permute.xlu0 %1409
        %1413 = vset.pattern.permute.xlu0 0
        %1414 = vperm.xlu0 %1413, %v720
        %v1415 = vpop.permute.xlu0 %1414
        %1418 = vset.pattern.permute.xlu0 0
        %1419 = vperm.xlu0 %1418, %v721
        %v1420 = vpop.permute.xlu0 %1419
        %1423 = vset.pattern.permute.xlu0 0
        %1424 = vperm.xlu0 %1423, %v722
        %v1425 = vpop.permute.xlu0 %1424
        %1428 = vset.pattern.permute.xlu0 0
        %1429 = vperm.xlu0 %1428, %v723
        %v1430 = vpop.permute.xlu0 %1429
        %1433 = vset.pattern.permute.xlu0 0
        %1434 = vperm.xlu0 %1433, %v724
        %v1435 = vpop.permute.xlu0 %1434
        %1438 = vset.pattern.permute.xlu0 0
        %1439 = vperm.xlu0 %1438, %v725
        %v1440 = vpop.permute.xlu0 %1439
        %1443 = vset.pattern.permute.xlu0 0
        %1444 = vperm.xlu0 %1443, %v726
        %v1445 = vpop.permute.xlu0 %1444
        %1448 = vset.pattern.permute.xlu0 0
        %1449 = vperm.xlu0 %1448, %v727
        %v1450 = vpop.permute.xlu0 %1449
        %1453 = vset.pattern.permute.xlu0 0
        %1454 = vperm.xlu0 %1453, %v728
        %v1455 = vpop.permute.xlu0 %1454
        %1458 = vset.pattern.permute.xlu0 0
        %1459 = vperm.xlu0 %1458, %v729
        %v1460 = vpop.permute.xlu0 %1459
        %1463 = vset.pattern.permute.xlu0 0
        %1464 = vperm.xlu0 %1463, %v730
        %v1465 = vpop.permute.xlu0 %1464
        %1468 = vset.pattern.permute.xlu0 0
        %1469 = vperm.xlu0 %1468, %v731
        %v1470 = vpop.permute.xlu0 %1469
        %1473 = vset.pattern.permute.xlu0 0
        %1474 = vperm.xlu0 %1473, %v732
        %v1475 = vpop.permute.xlu0 %1474
        %1478 = vset.pattern.permute.xlu0 0
        %1479 = vperm.xlu0 %1478, %v733
        %v1480 = vpop.permute.xlu0 %1479
        %1483 = vset.pattern.permute.xlu0 0
        %1484 = vperm.xlu0 %1483, %v734
        %v1485 = vpop.permute.xlu0 %1484
        %1488 = vset.pattern.permute.xlu0 0
        %1489 = vperm.xlu0 %1488, %v735
        %v1490 = vpop.permute.xlu0 %1489
        %1493 = vset.pattern.permute.xlu0 0
        %1494 = vperm.xlu0 %1493, %v736
        %v1495 = vpop.permute.xlu0 %1494
        %1498 = vset.pattern.permute.xlu0 0
        %1499 = vperm.xlu0 %1498, %v737
        %v1500 = vpop.permute.xlu0 %1499
        %1503 = vset.pattern.permute.xlu0 0
        %1504 = vperm.xlu0 %1503, %v738
        %v1505 = vpop.permute.xlu0 %1504
        %1508 = vset.pattern.permute.xlu0 0
        %1509 = vperm.xlu0 %1508, %v739
        %v1510 = vpop.permute.xlu0 %1509
        %1513 = vset.pattern.permute.xlu0 0
        %1514 = vperm.xlu0 %1513, %v740
        %v1515 = vpop.permute.xlu0 %1514
        %1518 = vset.pattern.permute.xlu0 0
        %1519 = vperm.xlu0 %1518, %v741
        %v1520 = vpop.permute.xlu0 %1519
        %1523 = vset.pattern.permute.xlu0 0
        %1524 = vperm.xlu0 %1523, %v742
        %v1525 = vpop.permute.xlu0 %1524
        %1528 = vset.pattern.permute.xlu0 0
        %1529 = vperm.xlu0 %1528, %v743
        %v1530 = vpop.permute.xlu0 %1529
        %1533 = vset.pattern.permute.xlu0 0
        %1534 = vperm.xlu0 %1533, %v744
        %v1535 = vpop.permute.xlu0 %1534
        %1538 = vset.pattern.permute.xlu0 0
        %1539 = vperm.xlu0 %1538, %v745
        %v1540 = vpop.permute.xlu0 %1539
        %1543 = vset.pattern.permute.xlu0 0
        %1544 = vperm.xlu0 %1543, %v746
        %v1545 = vpop.permute.xlu0 %1544
        %v1547 = vmul.f32 %v267, %v750
        %v1548 = vmul.f32 %v268, %v750
        %v1549 = vmul.f32 %v269, %v755
        %v1550 = vmul.f32 %v270, %v755
        %v1551 = vmul.f32 %v271, %v760
        %v1552 = vmul.f32 %v272, %v760
        %v1553 = vmul.f32 %v273, %v765
        %v1554 = vmul.f32 %v274, %v765
        %v1555 = vmul.f32 %v275, %v770
        %v1556 = vmul.f32 %v276, %v770
        %v1557 = vmul.f32 %v277, %v775
        %v1558 = vmul.f32 %v278, %v775
        %v1559 = vmul.f32 %v279, %v780
        %v1560 = vmul.f32 %v280, %v780
        %v1561 = vmul.f32 %v281, %v785
        %v1562 = vmul.f32 %v282, %v785
        %v1563 = vmul.f32 %v283, %v790
        %v1564 = vmul.f32 %v284, %v790
        %v1565 = vmul.f32 %v285, %v795
        %v1566 = vmul.f32 %v286, %v795
        %v1567 = vmul.f32 %v287, %v800
        %v1568 = vmul.f32 %v288, %v800
        %v1569 = vmul.f32 %v289, %v805
        %v1570 = vmul.f32 %v290, %v805
        %v1571 = vmul.f32 %v291, %v810
        %v1572 = vmul.f32 %v292, %v810
        %v1573 = vmul.f32 %v293, %v815
        %v1574 = vmul.f32 %v294, %v815
        %v1575 = vmul.f32 %v295, %v820
        %v1576 = vmul.f32 %v296, %v820
        %v1577 = vmul.f32 %v297, %v825
        %v1578 = vmul.f32 %v298, %v825
        %v1579 = vmul.f32 %v299, %v830
        %v1580 = vmul.f32 %v300, %v830
        %v1581 = vmul.f32 %v301, %v835
        %v1582 = vmul.f32 %v302, %v835
        %v1583 = vmul.f32 %v303, %v840
        %v1584 = vmul.f32 %v304, %v840
        %v1585 = vmul.f32 %v305, %v845
        %v1586 = vmul.f32 %v306, %v845
        %v1587 = vmul.f32 %v307, %v850
        %v1588 = vmul.f32 %v308, %v850
        %v1589 = vmul.f32 %v309, %v855
        %v1590 = vmul.f32 %v310, %v855
        %v1591 = vmul.f32 %v311, %v860
        %v1592 = vmul.f32 %v312, %v860
        %v1593 = vmul.f32 %v313, %v865
        %v1594 = vmul.f32 %v314, %v865
        %v1595 = vmul.f32 %v315, %v870
        %v1596 = vmul.f32 %v316, %v870
        %v1597 = vmul.f32 %v317, %v875
        %v1598 = vmul.f32 %v318, %v875
        %v1599 = vmul.f32 %v319, %v880
        %v1600 = vmul.f32 %v320, %v880
        %v1601 = vmul.f32 %v321, %v885
        %v1602 = vmul.f32 %v322, %v885
        %v1603 = vmul.f32 %v323, %v890
        %v1604 = vmul.f32 %v324, %v890
        %v1605 = vmul.f32 %v325, %v895
        %v1606 = vmul.f32 %v326, %v895
        %v1607 = vmul.f32 %v327, %v900
        %v1608 = vmul.f32 %v328, %v900
        %v1609 = vmul.f32 %v329, %v905
        %v1610 = vmul.f32 %v330, %v905
        %v1611 = vmul.f32 %v331, %v910
        %v1612 = vmul.f32 %v332, %v910
        %v1613 = vmul.f32 %v333, %v915
        %v1614 = vmul.f32 %v334, %v915
        %v1615 = vmul.f32 %v335, %v920
        %v1616 = vmul.f32 %v336, %v920
        %v1617 = vmul.f32 %v337, %v925
        %v1618 = vmul.f32 %v338, %v925
        %v1619 = vmul.f32 %v339, %v930
        %v1620 = vmul.f32 %v340, %v930
        %v1621 = vmul.f32 %v341, %v935
        %v1622 = vmul.f32 %v342, %v935
        %v1623 = vmul.f32 %v343, %v940
        %v1624 = vmul.f32 %v344, %v940
        %v1625 = vmul.f32 %v345, %v945
        %v1626 = vmul.f32 %v346, %v945
        %v1627 = vmul.f32 %v347, %v950
        %v1628 = vmul.f32 %v348, %v950
        %v1629 = vmul.f32 %v349, %v955
        %v1630 = vmul.f32 %v350, %v955
        %v1631 = vmul.f32 %v351, %v960
        %v1632 = vmul.f32 %v352, %v960
        %v1633 = vmul.f32 %v353, %v965
        %v1634 = vmul.f32 %v354, %v965
        %v1635 = vmul.f32 %v355, %v970
        %v1636 = vmul.f32 %v356, %v970
        %v1637 = vmul.f32 %v357, %v975
        %v1638 = vmul.f32 %v358, %v975
        %v1639 = vmul.f32 %v359, %v980
        %v1640 = vmul.f32 %v360, %v980
        %v1641 = vmul.f32 %v361, %v985
        %v1642 = vmul.f32 %v362, %v985
        %v1643 = vmul.f32 %v363, %v990
        %v1644 = vmul.f32 %v364, %v990
        %v1645 = vmul.f32 %v365, %v995
        %v1646 = vmul.f32 %v366, %v995
        %v1647 = vmul.f32 %v367, %v1000
        %v1648 = vmul.f32 %v368, %v1000
        %v1649 = vmul.f32 %v369, %v1005
        %v1650 = vmul.f32 %v370, %v1005
        %v1651 = vmul.f32 %v371, %v1010
        %v1652 = vmul.f32 %v372, %v1010
        %v1653 = vmul.f32 %v373, %v1015
        %v1654 = vmul.f32 %v374, %v1015
        %v1655 = vmul.f32 %v375, %v1020
        %v1656 = vmul.f32 %v376, %v1020
        %v1657 = vmul.f32 %v377, %v1025
        %v1658 = vmul.f32 %v378, %v1025
        %v1659 = vmul.f32 %v379, %v1030
        %v1660 = vmul.f32 %v380, %v1030
        %v1661 = vmul.f32 %v381, %v1035
        %v1662 = vmul.f32 %v382, %v1035
        %v1663 = vmul.f32 %v383, %v1040
        %v1664 = vmul.f32 %v384, %v1040
        %v1665 = vmul.f32 %v385, %v1045
        %v1666 = vmul.f32 %v386, %v1045
        %v1667 = vmul.f32 %v387, %v1050
        %v1668 = vmul.f32 %v388, %v1050
        %v1669 = vmul.f32 %v389, %v1055
        %v1670 = vmul.f32 %v390, %v1055
        %v1671 = vmul.f32 %v391, %v1060
        %v1672 = vmul.f32 %v392, %v1060
        %v1673 = vmul.f32 %v393, %v1065
        %v1674 = vmul.f32 %v394, %v1065
        %v1675 = vmul.f32 %v395, %v1070
        %v1676 = vmul.f32 %v396, %v1070
        %v1677 = vmul.f32 %v397, %v1075
        %v1678 = vmul.f32 %v398, %v1075
        %v1679 = vmul.f32 %v399, %v1080
        %v1680 = vmul.f32 %v400, %v1080
        %v1681 = vmul.f32 %v401, %v1085
        %v1682 = vmul.f32 %v402, %v1085
        %v1683 = vmul.f32 %v403, %v1090
        %v1684 = vmul.f32 %v404, %v1090
        %v1685 = vmul.f32 %v405, %v1095
        %v1686 = vmul.f32 %v406, %v1095
        %v1687 = vmul.f32 %v407, %v1100
        %v1688 = vmul.f32 %v408, %v1100
        %v1689 = vmul.f32 %v409, %v1105
        %v1690 = vmul.f32 %v410, %v1105
        %v1691 = vmul.f32 %v411, %v1110
        %v1692 = vmul.f32 %v412, %v1110
        %v1693 = vmul.f32 %v413, %v1115
        %v1694 = vmul.f32 %v414, %v1115
        %v1695 = vmul.f32 %v415, %v1120
        %v1696 = vmul.f32 %v416, %v1120
        %v1697 = vmul.f32 %v417, %v1125
        %v1698 = vmul.f32 %v418, %v1125
        %v1699 = vmul.f32 %v419, %v1130
        %v1700 = vmul.f32 %v420, %v1130
        %v1701 = vmul.f32 %v421, %v1135
        %v1702 = vmul.f32 %v422, %v1135
        %v1703 = vmul.f32 %v423, %v1140
        %v1704 = vmul.f32 %v424, %v1140
        %v1705 = vmul.f32 %v425, %v1145
        %v1706 = vmul.f32 %v426, %v1145
        %v1707 = vmul.f32 %v427, %v1150
        %v1708 = vmul.f32 %v428, %v1150
        %v1709 = vmul.f32 %v429, %v1155
        %v1710 = vmul.f32 %v430, %v1155
        %v1711 = vmul.f32 %v431, %v1160
        %v1712 = vmul.f32 %v432, %v1160
        %v1713 = vmul.f32 %v433, %v1165
        %v1714 = vmul.f32 %v434, %v1165
        %v1715 = vmul.f32 %v435, %v1170
        %v1716 = vmul.f32 %v436, %v1170
        %v1717 = vmul.f32 %v437, %v1175
        %v1718 = vmul.f32 %v438, %v1175
        %v1719 = vmul.f32 %v439, %v1180
        %v1720 = vmul.f32 %v440, %v1180
        %v1721 = vmul.f32 %v441, %v1185
        %v1722 = vmul.f32 %v442, %v1185
        %v1723 = vmul.f32 %v443, %v1190
        %v1724 = vmul.f32 %v444, %v1190
        %v1725 = vmul.f32 %v445, %v1195
        %v1726 = vmul.f32 %v446, %v1195
        %v1727 = vmul.f32 %v447, %v1200
        %v1728 = vmul.f32 %v448, %v1200
        %v1729 = vmul.f32 %v449, %v1205
        %v1730 = vmul.f32 %v450, %v1205
        %v1731 = vmul.f32 %v451, %v1210
        %v1732 = vmul.f32 %v452, %v1210
        %v1733 = vmul.f32 %v453, %v1215
        %v1734 = vmul.f32 %v454, %v1215
        %v1735 = vmul.f32 %v455, %v1220
        %v1736 = vmul.f32 %v456, %v1220
        %v1737 = vmul.f32 %v457, %v1225
        %v1738 = vmul.f32 %v458, %v1225
        %v1739 = vmul.f32 %v459, %v1230
        %v1740 = vmul.f32 %v460, %v1230
        %v1741 = vmul.f32 %v461, %v1235
        %v1742 = vmul.f32 %v462, %v1235
        %v1743 = vmul.f32 %v463, %v1240
        %v1744 = vmul.f32 %v464, %v1240
        %v1745 = vmul.f32 %v465, %v1245
        %v1746 = vmul.f32 %v466, %v1245
        %v1747 = vmul.f32 %v467, %v1250
        %v1748 = vmul.f32 %v468, %v1250
        %v1749 = vmul.f32 %v469, %v1255
        %v1750 = vmul.f32 %v470, %v1255
        %v1751 = vmul.f32 %v471, %v1260
        %v1752 = vmul.f32 %v472, %v1260
        %v1753 = vmul.f32 %v473, %v1265
        %v1754 = vmul.f32 %v474, %v1265
        %v1755 = vmul.f32 %v475, %v1270
        %v1756 = vmul.f32 %v476, %v1270
        %v1757 = vmul.f32 %v477, %v1275
        %v1758 = vmul.f32 %v478, %v1275
        %v1759 = vmul.f32 %v479, %v1280
        %v1760 = vmul.f32 %v480, %v1280
        %v1761 = vmul.f32 %v481, %v1285
        %v1762 = vmul.f32 %v482, %v1285
        %v1763 = vmul.f32 %v483, %v1290
        %v1764 = vmul.f32 %v484, %v1290
        %v1765 = vmul.f32 %v485, %v1295
        %v1766 = vmul.f32 %v486, %v1295
        %v1767 = vmul.f32 %v487, %v1300
        %v1768 = vmul.f32 %v488, %v1300
        %v1769 = vmul.f32 %v489, %v1305
        %v1770 = vmul.f32 %v490, %v1305
        %v1771 = vmul.f32 %v491, %v1310
        %v1772 = vmul.f32 %v492, %v1310
        %v1773 = vmul.f32 %v493, %v1315
        %v1774 = vmul.f32 %v494, %v1315
        %v1775 = vmul.f32 %v495, %v1320
        %v1776 = vmul.f32 %v496, %v1320
        %v1777 = vmul.f32 %v497, %v1325
        %v1778 = vmul.f32 %v498, %v1325
        %v1779 = vmul.f32 %v499, %v1330
        %v1780 = vmul.f32 %v500, %v1330
        %v1781 = vmul.f32 %v501, %v1335
        %v1782 = vmul.f32 %v502, %v1335
        %v1783 = vmul.f32 %v503, %v1340
        %v1784 = vmul.f32 %v504, %v1340
        %v1785 = vmul.f32 %v505, %v1345
        %v1786 = vmul.f32 %v506, %v1345
        %v1787 = vmul.f32 %v507, %v1350
        %v1788 = vmul.f32 %v508, %v1350
        %v1789 = vmul.f32 %v509, %v1355
        %v1790 = vmul.f32 %v510, %v1355
        %v1791 = vmul.f32 %v511, %v1360
        %v1792 = vmul.f32 %v512, %v1360
        %v1793 = vmul.f32 %v513, %v1365
        %v1794 = vmul.f32 %v514, %v1365
        %v1795 = vmul.f32 %v515, %v1370
        %v1796 = vmul.f32 %v516, %v1370
        %v1797 = vmul.f32 %v517, %v1375
        %v1798 = vmul.f32 %v518, %v1375
        %v1799 = vmul.f32 %v519, %v1380
        %v1800 = vmul.f32 %v520, %v1380
        %v1801 = vmul.f32 %v521, %v1385
        %v1802 = vmul.f32 %v522, %v1385
        %v1803 = vmul.f32 %v523, %v1390
        %v1804 = vmul.f32 %v524, %v1390
        %v1805 = vmul.f32 %v525, %v1395
        %v1806 = vmul.f32 %v526, %v1395
        %v1807 = vmul.f32 %v527, %v1400
        %v1808 = vmul.f32 %v528, %v1400
        %v1809 = vmul.f32 %v529, %v1405
        %v1810 = vmul.f32 %v530, %v1405
        %v1811 = vmul.f32 %v531, %v1410
        %v1812 = vmul.f32 %v532, %v1410
        %v1813 = vmul.f32 %v533, %v1415
        %v1814 = vmul.f32 %v534, %v1415
        %v1815 = vmul.f32 %v535, %v1420
        %v1816 = vmul.f32 %v536, %v1420
        %v1817 = vmul.f32 %v537, %v1425
        %v1818 = vmul.f32 %v538, %v1425
        %v1819 = vmul.f32 %v539, %v1430
        %v1820 = vmul.f32 %v540, %v1430
        %v1821 = vmul.f32 %v541, %v1435
        %v1822 = vmul.f32 %v542, %v1435
        %v1823 = vmul.f32 %v543, %v1440
        %v1824 = vmul.f32 %v544, %v1440
        %v1825 = vmul.f32 %v545, %v1445
        %v1826 = vmul.f32 %v546, %v1445
        %v1827 = vmul.f32 %v547, %v1450
        %v1828 = vmul.f32 %v548, %v1450
        %v1829 = vmul.f32 %v549, %v1455
        %v1830 = vmul.f32 %v550, %v1455
        %v1831 = vmul.f32 %v551, %v1460
        %v1832 = vmul.f32 %v552, %v1460
        %v1833 = vmul.f32 %v553, %v1465
        %v1834 = vmul.f32 %v554, %v1465
        %v1835 = vmul.f32 %v555, %v1470
        %v1836 = vmul.f32 %v556, %v1470
        %v1837 = vmul.f32 %v557, %v1475
        %v1838 = vmul.f32 %v558, %v1475
        %v1839 = vmul.f32 %v559, %v1480
        %v1840 = vmul.f32 %v560, %v1480
        %v1841 = vmul.f32 %v561, %v1485
        %v1842 = vmul.f32 %v562, %v1485
        %v1843 = vmul.f32 %v563, %v1490
        %v1844 = vmul.f32 %v564, %v1490
        %v1845 = vmul.f32 %v565, %v1495
        %v1846 = vmul.f32 %v566, %v1495
        %v1847 = vmul.f32 %v567, %v1500
        %v1848 = vmul.f32 %v568, %v1500
        %v1849 = vmul.f32 %v569, %v1505
        %v1850 = vmul.f32 %v570, %v1505
        %v1851 = vmul.f32 %v571, %v1510
        %v1852 = vmul.f32 %v572, %v1510
        %v1853 = vmul.f32 %v573, %v1515
        %v1854 = vmul.f32 %v574, %v1515
        %v1855 = vmul.f32 %v575, %v1520
        %v1856 = vmul.f32 %v576, %v1520
        %v1857 = vmul.f32 %v577, %v1525
        %v1858 = vmul.f32 %v578, %v1525
        %v1859 = vmul.f32 %v579, %v1530
        %v1860 = vmul.f32 %v580, %v1530
        %v1861 = vmul.f32 %v581, %v1535
        %v1862 = vmul.f32 %v582, %v1535
        %v1863 = vmul.f32 %v583, %v1540
        %v1864 = vmul.f32 %v584, %v1540
        %v1865 = vmul.f32 %v585, %v1545
        %v1866 = vmul.f32 %v586, %v1545
        %v1867 = vadd.f32 %v1547, %v1549
        %v1868 = vadd.f32 %v1867, %v1551
        %v1869 = vadd.f32 %v1868, %v1553
        %v1870 = vadd.f32 %v1869, %v1555
        %v1871 = vadd.f32 %v1870, %v1557
        %v1872 = vadd.f32 %v1871, %v1559
        %v1873 = vadd.f32 %v1872, %v1561
        %v1874 = vadd.f32 %v1873, %v1563
        %v1875 = vadd.f32 %v1874, %v1565
        %v1876 = vadd.f32 %v1875, %v1567
        %v1877 = vadd.f32 %v1876, %v1569
        %v1878 = vadd.f32 %v1877, %v1571
        %v1879 = vadd.f32 %v1878, %v1573
        %v1880 = vadd.f32 %v1879, %v1575
        %v1881 = vadd.f32 %v1880, %v1577
        %v1882 = vadd.f32 %v1881, %v1579
        %v1883 = vadd.f32 %v1882, %v1581
        %v1884 = vadd.f32 %v1883, %v1583
        %v1885 = vadd.f32 %v1884, %v1585
        %v1886 = vadd.f32 %v1885, %v1587
        %v1887 = vadd.f32 %v1886, %v1589
        %v1888 = vadd.f32 %v1887, %v1591
        %v1889 = vadd.f32 %v1888, %v1593
        %v1890 = vadd.f32 %v1889, %v1595
        %v1891 = vadd.f32 %v1890, %v1597
        %v1892 = vadd.f32 %v1891, %v1599
        %v1893 = vadd.f32 %v1892, %v1601
        %v1894 = vadd.f32 %v1893, %v1603
        %v1895 = vadd.f32 %v1894, %v1605
        %v1896 = vadd.f32 %v1895, %v1607
        %v1897 = vadd.f32 %v1896, %v1609
        %v1898 = vadd.f32 %v1897, %v1611
        %v1899 = vadd.f32 %v1898, %v1613
        %v1900 = vadd.f32 %v1899, %v1615
        %v1901 = vadd.f32 %v1900, %v1617
        %v1902 = vadd.f32 %v1901, %v1619
        %v1903 = vadd.f32 %v1902, %v1621
        %v1904 = vadd.f32 %v1903, %v1623
        %v1905 = vadd.f32 %v1904, %v1625
        %v1906 = vadd.f32 %v1905, %v1627
        %v1907 = vadd.f32 %v1906, %v1629
        %v1908 = vadd.f32 %v1907, %v1631
        %v1909 = vadd.f32 %v1908, %v1633
        %v1910 = vadd.f32 %v1909, %v1635
        %v1911 = vadd.f32 %v1910, %v1637
        %v1912 = vadd.f32 %v1911, %v1639
        %v1913 = vadd.f32 %v1912, %v1641
        %v1914 = vadd.f32 %v1913, %v1643
        %v1915 = vadd.f32 %v1914, %v1645
        %v1916 = vadd.f32 %v1915, %v1647
        %v1917 = vadd.f32 %v1916, %v1649
        %v1918 = vadd.f32 %v1917, %v1651
        %v1919 = vadd.f32 %v1918, %v1653
        %v1920 = vadd.f32 %v1919, %v1655
        %v1921 = vadd.f32 %v1920, %v1657
        %v1922 = vadd.f32 %v1921, %v1659
        %v1923 = vadd.f32 %v1922, %v1661
        %v1924 = vadd.f32 %v1923, %v1663
        %v1925 = vadd.f32 %v1924, %v1665
        %v1926 = vadd.f32 %v1925, %v1667
        %v1927 = vadd.f32 %v1926, %v1669
        %v1928 = vadd.f32 %v1927, %v1671
        %v1929 = vadd.f32 %v1928, %v1673
        %v1930 = vadd.f32 %v1929, %v1675
        %v1931 = vadd.f32 %v1930, %v1677
        %v1932 = vadd.f32 %v1931, %v1679
        %v1933 = vadd.f32 %v1932, %v1681
        %v1934 = vadd.f32 %v1933, %v1683
        %v1935 = vadd.f32 %v1934, %v1685
        %v1936 = vadd.f32 %v1935, %v1687
        %v1937 = vadd.f32 %v1936, %v1689
        %v1938 = vadd.f32 %v1937, %v1691
        %v1939 = vadd.f32 %v1938, %v1693
        %v1940 = vadd.f32 %v1939, %v1695
        %v1941 = vadd.f32 %v1940, %v1697
        %v1942 = vadd.f32 %v1941, %v1699
        %v1943 = vadd.f32 %v1942, %v1701
        %v1944 = vadd.f32 %v1943, %v1703
        %v1945 = vadd.f32 %v1944, %v1705
        %v1946 = vadd.f32 %v1945, %v1707
        %v1947 = vadd.f32 %v1946, %v1709
        %v1948 = vadd.f32 %v1947, %v1711
        %v1949 = vadd.f32 %v1948, %v1713
        %v1950 = vadd.f32 %v1949, %v1715
        %v1951 = vadd.f32 %v1950, %v1717
        %v1952 = vadd.f32 %v1951, %v1719
        %v1953 = vadd.f32 %v1952, %v1721
        %v1954 = vadd.f32 %v1953, %v1723
        %v1955 = vadd.f32 %v1954, %v1725
        %v1956 = vadd.f32 %v1955, %v1727
        %v1957 = vadd.f32 %v1956, %v1729
        %v1958 = vadd.f32 %v1957, %v1731
        %v1959 = vadd.f32 %v1958, %v1733
        %v1960 = vadd.f32 %v1959, %v1735
        %v1961 = vadd.f32 %v1960, %v1737
        %v1962 = vadd.f32 %v1961, %v1739
        %v1963 = vadd.f32 %v1962, %v1741
        %v1964 = vadd.f32 %v1963, %v1743
        %v1965 = vadd.f32 %v1964, %v1745
        %v1966 = vadd.f32 %v1965, %v1747
        %v1967 = vadd.f32 %v1966, %v1749
        %v1968 = vadd.f32 %v1967, %v1751
        %v1969 = vadd.f32 %v1968, %v1753
        %v1970 = vadd.f32 %v1969, %v1755
        %v1971 = vadd.f32 %v1970, %v1757
        %v1972 = vadd.f32 %v1971, %v1759
        %v1973 = vadd.f32 %v1972, %v1761
        %v1974 = vadd.f32 %v1973, %v1763
        %v1975 = vadd.f32 %v1974, %v1765
        %v1976 = vadd.f32 %v1975, %v1767
        %v1977 = vadd.f32 %v1976, %v1769
        %v1978 = vadd.f32 %v1977, %v1771
        %v1979 = vadd.f32 %v1978, %v1773
        %v1980 = vadd.f32 %v1979, %v1775
        %v1981 = vadd.f32 %v1980, %v1777
        %v1982 = vadd.f32 %v1981, %v1779
        %v1983 = vadd.f32 %v1982, %v1781
        %v1984 = vadd.f32 %v1983, %v1783
        %v1985 = vadd.f32 %v1984, %v1785
        %v1986 = vadd.f32 %v1985, %v1787
        %v1987 = vadd.f32 %v1986, %v1789
        %v1988 = vadd.f32 %v1987, %v1791
        %v1989 = vadd.f32 %v1988, %v1793
        %v1990 = vadd.f32 %v1989, %v1795
        %v1991 = vadd.f32 %v1990, %v1797
        %v1992 = vadd.f32 %v1991, %v1799
        %v1993 = vadd.f32 %v1992, %v1801
        %v1994 = vadd.f32 %v1993, %v1803
        %v1995 = vadd.f32 %v1994, %v1805
        %v1996 = vadd.f32 %v1995, %v1807
        %v1997 = vadd.f32 %v1996, %v1809
        %v1998 = vadd.f32 %v1997, %v1811
        %v1999 = vadd.f32 %v1998, %v1813
        %v2000 = vadd.f32 %v1999, %v1815
        %v2001 = vadd.f32 %v2000, %v1817
        %v2002 = vadd.f32 %v2001, %v1819
        %v2003 = vadd.f32 %v2002, %v1821
        %v2004 = vadd.f32 %v2003, %v1823
        %v2005 = vadd.f32 %v2004, %v1825
        %v2006 = vadd.f32 %v2005, %v1827
        %v2007 = vadd.f32 %v2006, %v1829
        %v2008 = vadd.f32 %v2007, %v1831
        %v2009 = vadd.f32 %v2008, %v1833
        %v2010 = vadd.f32 %v2009, %v1835
        %v2011 = vadd.f32 %v2010, %v1837
        %v2012 = vadd.f32 %v2011, %v1839
        %v2013 = vadd.f32 %v2012, %v1841
        %v2014 = vadd.f32 %v2013, %v1843
        %v2015 = vadd.f32 %v2014, %v1845
        %v2016 = vadd.f32 %v2015, %v1847
        %v2017 = vadd.f32 %v2016, %v1849
        %v2018 = vadd.f32 %v2017, %v1851
        %v2019 = vadd.f32 %v2018, %v1853
        %v2020 = vadd.f32 %v2019, %v1855
        %v2021 = vadd.f32 %v2020, %v1857
        %v2022 = vadd.f32 %v2021, %v1859
        %v2023 = vadd.f32 %v2022, %v1861
        %v2024 = vadd.f32 %v2023, %v1863
        %v2025 = vadd.f32 %v2024, %v1865
        %v2026 = vrot.slane %v2025, 4
        %v2027 = vadd.f32 %v2025, %v2026
        %v2028 = vrot.slane %v2027, 2
        %v2029 = vadd.f32 %v2027, %v2028
        %v2030 = vrot.slane %v2029, 1
        %v2031 = vadd.f32 %v2029, %v2030
        %v2032 = vadd.f32 %v1548, %v1550
        %v2033 = vadd.f32 %v2032, %v1552
        %v2034 = vadd.f32 %v2033, %v1554
        %v2035 = vadd.f32 %v2034, %v1556
        %v2036 = vadd.f32 %v2035, %v1558
        %v2037 = vadd.f32 %v2036, %v1560
        %v2038 = vadd.f32 %v2037, %v1562
        %v2039 = vadd.f32 %v2038, %v1564
        %v2040 = vadd.f32 %v2039, %v1566
        %v2041 = vadd.f32 %v2040, %v1568
        %v2042 = vadd.f32 %v2041, %v1570
        %v2043 = vadd.f32 %v2042, %v1572
        %v2044 = vadd.f32 %v2043, %v1574
        %v2045 = vadd.f32 %v2044, %v1576
        %v2046 = vadd.f32 %v2045, %v1578
        %v2047 = vadd.f32 %v2046, %v1580
        %v2048 = vadd.f32 %v2047, %v1582
        %v2049 = vadd.f32 %v2048, %v1584
        %v2050 = vadd.f32 %v2049, %v1586
        %v2051 = vadd.f32 %v2050, %v1588
        %v2052 = vadd.f32 %v2051, %v1590
        %v2053 = vadd.f32 %v2052, %v1592
        %v2054 = vadd.f32 %v2053, %v1594
        %v2055 = vadd.f32 %v2054, %v1596
        %v2056 = vadd.f32 %v2055, %v1598
        %v2057 = vadd.f32 %v2056, %v1600
        %v2058 = vadd.f32 %v2057, %v1602
        %v2059 = vadd.f32 %v2058, %v1604
        %v2060 = vadd.f32 %v2059, %v1606
        %v2061 = vadd.f32 %v2060, %v1608
        %v2062 = vadd.f32 %v2061, %v1610
        %v2063 = vadd.f32 %v2062, %v1612
        %v2064 = vadd.f32 %v2063, %v1614
        %v2065 = vadd.f32 %v2064, %v1616
        %v2066 = vadd.f32 %v2065, %v1618
        %v2067 = vadd.f32 %v2066, %v1620
        %v2068 = vadd.f32 %v2067, %v1622
        %v2069 = vadd.f32 %v2068, %v1624
        %v2070 = vadd.f32 %v2069, %v1626
        %v2071 = vadd.f32 %v2070, %v1628
        %v2072 = vadd.f32 %v2071, %v1630
        %v2073 = vadd.f32 %v2072, %v1632
        %v2074 = vadd.f32 %v2073, %v1634
        %v2075 = vadd.f32 %v2074, %v1636
        %v2076 = vadd.f32 %v2075, %v1638
        %v2077 = vadd.f32 %v2076, %v1640
        %v2078 = vadd.f32 %v2077, %v1642
        %v2079 = vadd.f32 %v2078, %v1644
        %v2080 = vadd.f32 %v2079, %v1646
        %v2081 = vadd.f32 %v2080, %v1648
        %v2082 = vadd.f32 %v2081, %v1650
        %v2083 = vadd.f32 %v2082, %v1652
        %v2084 = vadd.f32 %v2083, %v1654
        %v2085 = vadd.f32 %v2084, %v1656
        %v2086 = vadd.f32 %v2085, %v1658
        %v2087 = vadd.f32 %v2086, %v1660
        %v2088 = vadd.f32 %v2087, %v1662
        %v2089 = vadd.f32 %v2088, %v1664
        %v2090 = vadd.f32 %v2089, %v1666
        %v2091 = vadd.f32 %v2090, %v1668
        %v2092 = vadd.f32 %v2091, %v1670
        %v2093 = vadd.f32 %v2092, %v1672
        %v2094 = vadd.f32 %v2093, %v1674
        %v2095 = vadd.f32 %v2094, %v1676
        %v2096 = vadd.f32 %v2095, %v1678
        %v2097 = vadd.f32 %v2096, %v1680
        %v2098 = vadd.f32 %v2097, %v1682
        %v2099 = vadd.f32 %v2098, %v1684
        %v2100 = vadd.f32 %v2099, %v1686
        %v2101 = vadd.f32 %v2100, %v1688
        %v2102 = vadd.f32 %v2101, %v1690
        %v2103 = vadd.f32 %v2102, %v1692
        %v2104 = vadd.f32 %v2103, %v1694
        %v2105 = vadd.f32 %v2104, %v1696
        %v2106 = vadd.f32 %v2105, %v1698
        %v2107 = vadd.f32 %v2106, %v1700
        %v2108 = vadd.f32 %v2107, %v1702
        %v2109 = vadd.f32 %v2108, %v1704
        %v2110 = vadd.f32 %v2109, %v1706
        %v2111 = vadd.f32 %v2110, %v1708
        %v2112 = vadd.f32 %v2111, %v1710
        %v2113 = vadd.f32 %v2112, %v1712
        %v2114 = vadd.f32 %v2113, %v1714
        %v2115 = vadd.f32 %v2114, %v1716
        %v2116 = vadd.f32 %v2115, %v1718
        %v2117 = vadd.f32 %v2116, %v1720
        %v2118 = vadd.f32 %v2117, %v1722
        %v2119 = vadd.f32 %v2118, %v1724
        %v2120 = vadd.f32 %v2119, %v1726
        %v2121 = vadd.f32 %v2120, %v1728
        %v2122 = vadd.f32 %v2121, %v1730
        %v2123 = vadd.f32 %v2122, %v1732
        %v2124 = vadd.f32 %v2123, %v1734
        %v2125 = vadd.f32 %v2124, %v1736
        %v2126 = vadd.f32 %v2125, %v1738
        %v2127 = vadd.f32 %v2126, %v1740
        %v2128 = vadd.f32 %v2127, %v1742
        %v2129 = vadd.f32 %v2128, %v1744
        %v2130 = vadd.f32 %v2129, %v1746
        %v2131 = vadd.f32 %v2130, %v1748
        %v2132 = vadd.f32 %v2131, %v1750
        %v2133 = vadd.f32 %v2132, %v1752
        %v2134 = vadd.f32 %v2133, %v1754
        %v2135 = vadd.f32 %v2134, %v1756
        %v2136 = vadd.f32 %v2135, %v1758
        %v2137 = vadd.f32 %v2136, %v1760
        %v2138 = vadd.f32 %v2137, %v1762
        %v2139 = vadd.f32 %v2138, %v1764
        %v2140 = vadd.f32 %v2139, %v1766
        %v2141 = vadd.f32 %v2140, %v1768
        %v2142 = vadd.f32 %v2141, %v1770
        %v2143 = vadd.f32 %v2142, %v1772
        %v2144 = vadd.f32 %v2143, %v1774
        %v2145 = vadd.f32 %v2144, %v1776
        %v2146 = vadd.f32 %v2145, %v1778
        %v2147 = vadd.f32 %v2146, %v1780
        %v2148 = vadd.f32 %v2147, %v1782
        %v2149 = vadd.f32 %v2148, %v1784
        %v2150 = vadd.f32 %v2149, %v1786
        %v2151 = vadd.f32 %v2150, %v1788
        %v2152 = vadd.f32 %v2151, %v1790
        %v2153 = vadd.f32 %v2152, %v1792
        %v2154 = vadd.f32 %v2153, %v1794
        %v2155 = vadd.f32 %v2154, %v1796
        %v2156 = vadd.f32 %v2155, %v1798
        %v2157 = vadd.f32 %v2156, %v1800
        %v2158 = vadd.f32 %v2157, %v1802
        %v2159 = vadd.f32 %v2158, %v1804
        %v2160 = vadd.f32 %v2159, %v1806
        %v2161 = vadd.f32 %v2160, %v1808
        %v2162 = vadd.f32 %v2161, %v1810
        %v2163 = vadd.f32 %v2162, %v1812
        %v2164 = vadd.f32 %v2163, %v1814
        %v2165 = vadd.f32 %v2164, %v1816
        %v2166 = vadd.f32 %v2165, %v1818
        %v2167 = vadd.f32 %v2166, %v1820
        %v2168 = vadd.f32 %v2167, %v1822
        %v2169 = vadd.f32 %v2168, %v1824
        %v2170 = vadd.f32 %v2169, %v1826
        %v2171 = vadd.f32 %v2170, %v1828
        %v2172 = vadd.f32 %v2171, %v1830
        %v2173 = vadd.f32 %v2172, %v1832
        %v2174 = vadd.f32 %v2173, %v1834
        %v2175 = vadd.f32 %v2174, %v1836
        %v2176 = vadd.f32 %v2175, %v1838
        %v2177 = vadd.f32 %v2176, %v1840
        %v2178 = vadd.f32 %v2177, %v1842
        %v2179 = vadd.f32 %v2178, %v1844
        %v2180 = vadd.f32 %v2179, %v1846
        %v2181 = vadd.f32 %v2180, %v1848
        %v2182 = vadd.f32 %v2181, %v1850
        %v2183 = vadd.f32 %v2182, %v1852
        %v2184 = vadd.f32 %v2183, %v1854
        %v2185 = vadd.f32 %v2184, %v1856
        %v2186 = vadd.f32 %v2185, %v1858
        %v2187 = vadd.f32 %v2186, %v1860
        %v2188 = vadd.f32 %v2187, %v1862
        %v2189 = vadd.f32 %v2188, %v1864
        %v2190 = vadd.f32 %v2189, %v1866
        %v2191 = vrot.slane %v2190, 4
        %v2192 = vadd.f32 %v2190, %v2191
        %v2193 = vrot.slane %v2192, 2
        %v2194 = vadd.f32 %v2192, %v2193
        %v2195 = vrot.slane %v2194, 1
        %v2196 = vadd.f32 %v2194, %v2195
        %v2197 = vrcp.pop 1280.0
        %v2198 = vmul.f32 %v2031, %v2197
        %v2199 = vmul.f32 %v2196, %v2197
        %v2200 = vmax.f32 %v1547, %v1551
        %v2201 = vmax.f32 %v1549, %v1553
        %v2202 = vmax.f32 %v2200, %v1555
        %v2203 = vmax.f32 %v2201, %v1557
        %v2204 = vmax.f32 %v2202, %v1559
        %v2205 = vmax.f32 %v2203, %v1561
        %v2206 = vmax.f32 %v2204, %v1563
        %v2207 = vmax.f32 %v2205, %v1565
        %v2208 = vmax.f32 %v2206, %v1567
        %v2209 = vmax.f32 %v2207, %v1569
        %v2210 = vmax.f32 %v2208, %v1571
        %v2211 = vmax.f32 %v2209, %v1573
        %v2212 = vmax.f32 %v2210, %v1575
        %v2213 = vmax.f32 %v2211, %v1577
        %v2214 = vmax.f32 %v2212, %v1579
        %v2215 = vmax.f32 %v2213, %v1581
        %v2216 = vmax.f32 %v2214, %v1583
        %v2217 = vmax.f32 %v2215, %v1585
        %v2218 = vmax.f32 %v2216, %v1587
        %v2219 = vmax.f32 %v2217, %v1589
        %v2220 = vmax.f32 %v2218, %v1591
        %v2221 = vmax.f32 %v2219, %v1593
        %v2222 = vmax.f32 %v2220, %v1595
        %v2223 = vmax.f32 %v2221, %v1597
        %v2224 = vmax.f32 %v2222, %v1599
        %v2225 = vmax.f32 %v2223, %v1601
        %v2226 = vmax.f32 %v2224, %v1603
        %v2227 = vmax.f32 %v2225, %v1605
        %v2228 = vmax.f32 %v2226, %v1607
        %v2229 = vmax.f32 %v2227, %v1609
        %v2230 = vmax.f32 %v2228, %v1611
        %v2231 = vmax.f32 %v2229, %v1613
        %v2232 = vmax.f32 %v2230, %v1615
        %v2233 = vmax.f32 %v2231, %v1617
        %v2234 = vmax.f32 %v2232, %v1619
        %v2235 = vmax.f32 %v2233, %v1621
        %v2236 = vmax.f32 %v2234, %v1623
        %v2237 = vmax.f32 %v2235, %v1625
        %v2238 = vmax.f32 %v2236, %v1627
        %v2239 = vmax.f32 %v2237, %v1629
        %v2240 = vmax.f32 %v2238, %v1631
        %v2241 = vmax.f32 %v2239, %v1633
        %v2242 = vmax.f32 %v2240, %v1635
        %v2243 = vmax.f32 %v2241, %v1637
        %v2244 = vmax.f32 %v2242, %v1639
        %v2245 = vmax.f32 %v2243, %v1641
        %v2246 = vmax.f32 %v2244, %v1643
        %v2247 = vmax.f32 %v2245, %v1645
        %v2248 = vmax.f32 %v2246, %v1647
        %v2249 = vmax.f32 %v2247, %v1649
        %v2250 = vmax.f32 %v2248, %v1651
        %v2251 = vmax.f32 %v2249, %v1653
        %v2252 = vmax.f32 %v2250, %v1655
        %v2253 = vmax.f32 %v2251, %v1657
        %v2254 = vmax.f32 %v2252, %v1659
        %v2255 = vmax.f32 %v2253, %v1661
        %v2256 = vmax.f32 %v2254, %v1663
        %v2257 = vmax.f32 %v2255, %v1665
        %v2258 = vmax.f32 %v2256, %v1667
        %v2259 = vmax.f32 %v2257, %v1669
        %v2260 = vmax.f32 %v2258, %v1671
        %v2261 = vmax.f32 %v2259, %v1673
        %v2262 = vmax.f32 %v2260, %v1675
        %v2263 = vmax.f32 %v2261, %v1677
        %v2264 = vmax.f32 %v2262, %v1679
        %v2265 = vmax.f32 %v2263, %v1681
        %v2266 = vmax.f32 %v2264, %v1683
        %v2267 = vmax.f32 %v2265, %v1685
        %v2268 = vmax.f32 %v2266, %v1687
        %v2269 = vmax.f32 %v2267, %v1689
        %v2270 = vmax.f32 %v2268, %v1691
        %v2271 = vmax.f32 %v2269, %v1693
        %v2272 = vmax.f32 %v2270, %v1695
        %v2273 = vmax.f32 %v2271, %v1697
        %v2274 = vmax.f32 %v2272, %v1699
        %v2275 = vmax.f32 %v2273, %v1701
        %v2276 = vmax.f32 %v2274, %v1703
        %v2277 = vmax.f32 %v2275, %v1705
        %v2278 = vmax.f32 %v2276, %v1707
        %v2279 = vmax.f32 %v2277, %v1709
        %v2280 = vmax.f32 %v2278, %v1711
        %v2281 = vmax.f32 %v2279, %v1713
        %v2282 = vmax.f32 %v2280, %v1715
        %v2283 = vmax.f32 %v2281, %v1717
        %v2284 = vmax.f32 %v2282, %v1719
        %v2285 = vmax.f32 %v2283, %v1721
        %v2286 = vmax.f32 %v2284, %v1723
        %v2287 = vmax.f32 %v2285, %v1725
        %v2288 = vmax.f32 %v2286, %v1727
        %v2289 = vmax.f32 %v2287, %v1729
        %v2290 = vmax.f32 %v2288, %v1731
        %v2291 = vmax.f32 %v2289, %v1733
        %v2292 = vmax.f32 %v2290, %v1735
        %v2293 = vmax.f32 %v2291, %v1737
        %v2294 = vmax.f32 %v2292, %v1739
        %v2295 = vmax.f32 %v2293, %v1741
        %v2296 = vmax.f32 %v2294, %v1743
        %v2297 = vmax.f32 %v2295, %v1745
        %v2298 = vmax.f32 %v2296, %v1747
        %v2299 = vmax.f32 %v2297, %v1749
        %v2300 = vmax.f32 %v2298, %v1751
        %v2301 = vmax.f32 %v2299, %v1753
        %v2302 = vmax.f32 %v2300, %v1755
        %v2303 = vmax.f32 %v2301, %v1757
        %v2304 = vmax.f32 %v2302, %v1759
        %v2305 = vmax.f32 %v2303, %v1761
        %v2306 = vmax.f32 %v2304, %v1763
        %v2307 = vmax.f32 %v2305, %v1765
        %v2308 = vmax.f32 %v2306, %v1767
        %v2309 = vmax.f32 %v2307, %v1769
        %v2310 = vmax.f32 %v2308, %v1771
        %v2311 = vmax.f32 %v2309, %v1773
        %v2312 = vmax.f32 %v2310, %v1775
        %v2313 = vmax.f32 %v2311, %v1777
        %v2314 = vmax.f32 %v2312, %v1779
        %v2315 = vmax.f32 %v2313, %v1781
        %v2316 = vmax.f32 %v2314, %v1783
        %v2317 = vmax.f32 %v2315, %v1785
        %v2318 = vmax.f32 %v2316, %v1787
        %v2319 = vmax.f32 %v2317, %v1789
        %v2320 = vmax.f32 %v2318, %v1791
        %v2321 = vmax.f32 %v2319, %v1793
        %v2322 = vmax.f32 %v2320, %v1795
        %v2323 = vmax.f32 %v2321, %v1797
        %v2324 = vmax.f32 %v2322, %v1799
        %v2325 = vmax.f32 %v2323, %v1801
        %v2326 = vmax.f32 %v2324, %v1803
        %v2327 = vmax.f32 %v2325, %v1805
        %v2328 = vmax.f32 %v2326, %v1807
        %v2329 = vmax.f32 %v2327, %v1809
        %v2330 = vmax.f32 %v2328, %v1811
        %v2331 = vmax.f32 %v2329, %v1813
        %v2332 = vmax.f32 %v2330, %v1815
        %v2333 = vmax.f32 %v2331, %v1817
        %v2334 = vmax.f32 %v2332, %v1819
        %v2335 = vmax.f32 %v2333, %v1821
        %v2336 = vmax.f32 %v2334, %v1823
        %v2337 = vmax.f32 %v2335, %v1825
        %v2338 = vmax.f32 %v2336, %v1827
        %v2339 = vmax.f32 %v2337, %v1829
        %v2340 = vmax.f32 %v2338, %v1831
        %v2341 = vmax.f32 %v2339, %v1833
        %v2342 = vmax.f32 %v2340, %v1835
        %v2343 = vmax.f32 %v2341, %v1837
        %v2344 = vmax.f32 %v2342, %v1839
        %v2345 = vmax.f32 %v2343, %v1841
        %v2346 = vmax.f32 %v2344, %v1843
        %v2347 = vmax.f32 %v2345, %v1845
        %v2348 = vmax.f32 %v2346, %v1847
        %v2349 = vmax.f32 %v2347, %v1849
        %v2350 = vmax.f32 %v2348, %v1851
        %v2351 = vmax.f32 %v2349, %v1853
        %v2352 = vmax.f32 %v2350, %v1855
        %v2353 = vmax.f32 %v2351, %v1857
        %v2354 = vmax.f32 %v2352, %v1859
        %v2355 = vmax.f32 %v2353, %v1861
        %v2356 = vmax.f32 %v2354, %v1863
        %v2357 = vmax.f32 %v2355, %v1865
        %v2358 = vmax.f32 %v2356, %v2357
        %v2359 = vrot.slane %v2358, 4
        %v2360 = vmax.f32 %v2358, %v2359
        %v2361 = vrot.slane %v2360, 2
        %v2362 = vmax.f32 %v2360, %v2361
        %v2363 = vrot.slane %v2362, 1
        %v2364 = vmax.f32 %v2362, %v2363
        %v2365 = vmax.f32 %v1548, %v1552
        %v2366 = vmax.f32 %v1550, %v1554
        %v2367 = vmax.f32 %v2365, %v1556
        %v2368 = vmax.f32 %v2366, %v1558
        %v2369 = vmax.f32 %v2367, %v1560
        %v2370 = vmax.f32 %v2368, %v1562
        %v2371 = vmax.f32 %v2369, %v1564
        %v2372 = vmax.f32 %v2370, %v1566
        %v2373 = vmax.f32 %v2371, %v1568
        %v2374 = vmax.f32 %v2372, %v1570
        %v2375 = vmax.f32 %v2373, %v1572
        %v2376 = vmax.f32 %v2374, %v1574
        %v2377 = vmax.f32 %v2375, %v1576
        %v2378 = vmax.f32 %v2376, %v1578
        %v2379 = vmax.f32 %v2377, %v1580
        %v2380 = vmax.f32 %v2378, %v1582
        %v2381 = vmax.f32 %v2379, %v1584
        %v2382 = vmax.f32 %v2380, %v1586
        %v2383 = vmax.f32 %v2381, %v1588
        %v2384 = vmax.f32 %v2382, %v1590
        %v2385 = vmax.f32 %v2383, %v1592
        %v2386 = vmax.f32 %v2384, %v1594
        %v2387 = vmax.f32 %v2385, %v1596
        %v2388 = vmax.f32 %v2386, %v1598
        %v2389 = vmax.f32 %v2387, %v1600
        %v2390 = vmax.f32 %v2388, %v1602
        %v2391 = vmax.f32 %v2389, %v1604
        %v2392 = vmax.f32 %v2390, %v1606
        %v2393 = vmax.f32 %v2391, %v1608
        %v2394 = vmax.f32 %v2392, %v1610
        %v2395 = vmax.f32 %v2393, %v1612
        %v2396 = vmax.f32 %v2394, %v1614
        %v2397 = vmax.f32 %v2395, %v1616
        %v2398 = vmax.f32 %v2396, %v1618
        %v2399 = vmax.f32 %v2397, %v1620
        %v2400 = vmax.f32 %v2398, %v1622
        %v2401 = vmax.f32 %v2399, %v1624
        %v2402 = vmax.f32 %v2400, %v1626
        %v2403 = vmax.f32 %v2401, %v1628
        %v2404 = vmax.f32 %v2402, %v1630
        %v2405 = vmax.f32 %v2403, %v1632
        %v2406 = vmax.f32 %v2404, %v1634
        %v2407 = vmax.f32 %v2405, %v1636
        %v2408 = vmax.f32 %v2406, %v1638
        %v2409 = vmax.f32 %v2407, %v1640
        %v2410 = vmax.f32 %v2408, %v1642
        %v2411 = vmax.f32 %v2409, %v1644
        %v2412 = vmax.f32 %v2410, %v1646
        %v2413 = vmax.f32 %v2411, %v1648
        %v2414 = vmax.f32 %v2412, %v1650
        %v2415 = vmax.f32 %v2413, %v1652
        %v2416 = vmax.f32 %v2414, %v1654
        %v2417 = vmax.f32 %v2415, %v1656
        %v2418 = vmax.f32 %v2416, %v1658
        %v2419 = vmax.f32 %v2417, %v1660
        %v2420 = vmax.f32 %v2418, %v1662
        %v2421 = vmax.f32 %v2419, %v1664
        %v2422 = vmax.f32 %v2420, %v1666
        %v2423 = vmax.f32 %v2421, %v1668
        %v2424 = vmax.f32 %v2422, %v1670
        %v2425 = vmax.f32 %v2423, %v1672
        %v2426 = vmax.f32 %v2424, %v1674
        %v2427 = vmax.f32 %v2425, %v1676
        %v2428 = vmax.f32 %v2426, %v1678
        %v2429 = vmax.f32 %v2427, %v1680
        %v2430 = vmax.f32 %v2428, %v1682
        %v2431 = vmax.f32 %v2429, %v1684
        %v2432 = vmax.f32 %v2430, %v1686
        %v2433 = vmax.f32 %v2431, %v1688
        %v2434 = vmax.f32 %v2432, %v1690
        %v2435 = vmax.f32 %v2433, %v1692
        %v2436 = vmax.f32 %v2434, %v1694
        %v2437 = vmax.f32 %v2435, %v1696
        %v2438 = vmax.f32 %v2436, %v1698
        %v2439 = vmax.f32 %v2437, %v1700
        %v2440 = vmax.f32 %v2438, %v1702
        %v2441 = vmax.f32 %v2439, %v1704
        %v2442 = vmax.f32 %v2440, %v1706
        %v2443 = vmax.f32 %v2441, %v1708
        %v2444 = vmax.f32 %v2442, %v1710
        %v2445 = vmax.f32 %v2443, %v1712
        %v2446 = vmax.f32 %v2444, %v1714
        %v2447 = vmax.f32 %v2445, %v1716
        %v2448 = vmax.f32 %v2446, %v1718
        %v2449 = vmax.f32 %v2447, %v1720
        %v2450 = vmax.f32 %v2448, %v1722
        %v2451 = vmax.f32 %v2449, %v1724
        %v2452 = vmax.f32 %v2450, %v1726
        %v2453 = vmax.f32 %v2451, %v1728
        %v2454 = vmax.f32 %v2452, %v1730
        %v2455 = vmax.f32 %v2453, %v1732
        %v2456 = vmax.f32 %v2454, %v1734
        %v2457 = vmax.f32 %v2455, %v1736
        %v2458 = vmax.f32 %v2456, %v1738
        %v2459 = vmax.f32 %v2457, %v1740
        %v2460 = vmax.f32 %v2458, %v1742
        %v2461 = vmax.f32 %v2459, %v1744
        %v2462 = vmax.f32 %v2460, %v1746
        %v2463 = vmax.f32 %v2461, %v1748
        %v2464 = vmax.f32 %v2462, %v1750
        %v2465 = vmax.f32 %v2463, %v1752
        %v2466 = vmax.f32 %v2464, %v1754
        %v2467 = vmax.f32 %v2465, %v1756
        %v2468 = vmax.f32 %v2466, %v1758
        %v2469 = vmax.f32 %v2467, %v1760
        %v2470 = vmax.f32 %v2468, %v1762
        %v2471 = vmax.f32 %v2469, %v1764
        %v2472 = vmax.f32 %v2470, %v1766
        %v2473 = vmax.f32 %v2471, %v1768
        %v2474 = vmax.f32 %v2472, %v1770
        %v2475 = vmax.f32 %v2473, %v1772
        %v2476 = vmax.f32 %v2474, %v1774
        %v2477 = vmax.f32 %v2475, %v1776
        %v2478 = vmax.f32 %v2476, %v1778
        %v2479 = vmax.f32 %v2477, %v1780
        %v2480 = vmax.f32 %v2478, %v1782
        %v2481 = vmax.f32 %v2479, %v1784
        %v2482 = vmax.f32 %v2480, %v1786
        %v2483 = vmax.f32 %v2481, %v1788
        %v2484 = vmax.f32 %v2482, %v1790
        %v2485 = vmax.f32 %v2483, %v1792
        %v2486 = vmax.f32 %v2484, %v1794
        %v2487 = vmax.f32 %v2485, %v1796
        %v2488 = vmax.f32 %v2486, %v1798
        %v2489 = vmax.f32 %v2487, %v1800
        %v2490 = vmax.f32 %v2488, %v1802
        %v2491 = vmax.f32 %v2489, %v1804
        %v2492 = vmax.f32 %v2490, %v1806
        %v2493 = vmax.f32 %v2491, %v1808
        %v2494 = vmax.f32 %v2492, %v1810
        %v2495 = vmax.f32 %v2493, %v1812
        %v2496 = vmax.f32 %v2494, %v1814
        %v2497 = vmax.f32 %v2495, %v1816
        %v2498 = vmax.f32 %v2496, %v1818
        %v2499 = vmax.f32 %v2497, %v1820
        %v2500 = vmax.f32 %v2498, %v1822
        %v2501 = vmax.f32 %v2499, %v1824
        %v2502 = vmax.f32 %v2500, %v1826
        %v2503 = vmax.f32 %v2501, %v1828
        %v2504 = vmax.f32 %v2502, %v1830
        %v2505 = vmax.f32 %v2503, %v1832
        %v2506 = vmax.f32 %v2504, %v1834
        %v2507 = vmax.f32 %v2505, %v1836
        %v2508 = vmax.f32 %v2506, %v1838
        %v2509 = vmax.f32 %v2507, %v1840
        %v2510 = vmax.f32 %v2508, %v1842
        %v2511 = vmax.f32 %v2509, %v1844
        %v2512 = vmax.f32 %v2510, %v1846
        %v2513 = vmax.f32 %v2511, %v1848
        %v2514 = vmax.f32 %v2512, %v1850
        %v2515 = vmax.f32 %v2513, %v1852
        %v2516 = vmax.f32 %v2514, %v1854
        %v2517 = vmax.f32 %v2515, %v1856
        %v2518 = vmax.f32 %v2516, %v1858
        %v2519 = vmax.f32 %v2517, %v1860
        %v2520 = vmax.f32 %v2518, %v1862
        %v2521 = vmax.f32 %v2519, %v1864
        %v2522 = vmax.f32 %v2520, %v1866
        %v2523 = vmax.f32 %v2521, %v2522
        %v2524 = vrot.slane %v2523, 4
        %v2525 = vmax.f32 %v2523, %v2524
        %v2526 = vrot.slane %v2525, 2
        %v2527 = vmax.f32 %v2525, %v2526
        %v2528 = vrot.slane %v2527, 1
        %v2529 = vmax.f32 %v2527, %v2528
        %vm2530 = vcmask 1040384
        %v2531 = vsel %vm2530, %v2198, %v2364
        %v2532 = vsel %vm2530, %v2199, %v2529
        %s2533 = smul.u32 %s23, 128
        %s2534 = sadd.s32 %s2533, 4
        %s2535 = sld [smem:[#allocation8 + %s2534]]
        %v2536 = vstv %s2535
        %v2537 = vmul.f32 %v2536, %v2198
        %v2538 = vmul.f32 %v2536, %v2199
        %s2539 = sadd.s32 %s2533, 13
        %s2540 = sld [smem:[#allocation8 + %s2539]]
        %v2541 = vstv %s2540
        %v2542 = vmul.f32 %v2541, %v2364
        %v2543 = vmul.f32 %v2541, %v2529
        %v2544 = vadd.f32 %v2537, %v2542
        %v2545 = vadd.f32 %v2538, %v2543
        %2546 = vrot.lane.b32.xlu0 %v2531, 17
        %v2547 = vpop.permute.xlu0 %2546
        %2548 = vrot.lane.b32.xlu0 %v2532, 17
        %v2549 = vpop.permute.xlu0 %2548
        %v2550 = vlaneseq
        %v2551 = vand.u32 %v2550, 127
        %vm2552 = vcmp.lt.s32.totalorder %v2551, 17
        %v2553 = vsel %vm2552, %v2547, %v2549
        %v2554 = vsel %vm2552, %v2549, %v2547
        %v2555 = vlaneseq
        %v2556 = vshrl.u32 %v2555, 7
        %v2557 = vsub.s32 0, %v2556
        %v2558 = vrot.slane %v263, %v2557
        %v2559 = vlaneseq
        %v2560 = vshrl.u32 %v2559, 7
        %v2561 = vsub.s32 0, %v2560
        %v2562 = vrot.slane %v264, %v2561
        %v2563 = vmul.f32 %v2554, %v2558
        %v2564 = vmul.f32 %v2553, %v2562
        %s2565 = sld [smem:[#allocation8 + %s2533]]
        %v2566 = vstv %s2565
        %v2567 = vmul.f32 %v2566, %v2563
        %v2568 = vmul.f32 %v2566, %v2564
        %v2569 = vadd.f32 %v2544, %v2567
        %v2570 = vadd.f32 %v2545, %v2568
        %s2571 = sadd.s32 %s2533, 9
        %s2572 = sld [smem:[#allocation8 + %s2571]]
        %v2573 = vstv %s2572
        %v2574 = vmul.f32 %v2573, %v2563
        %v2575 = vmul.f32 %v2573, %v2564
        %v2578 = vrot.slane %v2574, 1
        %v2579 = vrot.slane %v2575, 1
        %v2582 = vadd.f32 %v2569, %v2578
        %v2583 = vadd.f32 %v2570, %v2579
        %2584 = vrot.lane.b32.xlu0 %v2531, 16
        %v2585 = vpop.permute.xlu0 %2584
        %2586 = vrot.lane.b32.xlu0 %v2532, 16
        %v2587 = vpop.permute.xlu0 %2586
        %vm2588 = vcmp.lt.s32.totalorder %v2551, 16
        %v2589 = vsel %vm2588, %v2585, %v2587
        %v2590 = vsel %vm2588, %v2587, %v2585
        %v2591 = vlaneseq
        %v2592 = vshrl.u32 %v2591, 7
        %v2593 = vsub.s32 1, %v2592
        %v2594 = vrot.slane %v263, %v2593
        %v2595 = vlaneseq
        %v2596 = vshrl.u32 %v2595, 7
        %v2597 = vsub.s32 1, %v2596
        %v2598 = vrot.slane %v264, %v2597
        %v2599 = vmul.f32 %v2590, %v2594
        %v2600 = vmul.f32 %v2589, %v2598
        %s2601 = sadd.s32 %s2533, 1
        %s2602 = sld [smem:[#allocation8 + %s2601]]
        %v2603 = vstv %s2602
        %v2604 = vmul.f32 %v2603, %v2599
        %v2605 = vmul.f32 %v2603, %v2600
        %v2606 = vadd.f32 %v2582, %v2604
        %v2607 = vadd.f32 %v2583, %v2605
        %s2608 = sadd.s32 %s2533, 10
        %s2609 = sld [smem:[#allocation8 + %s2608]]
        %v2610 = vstv %s2609
        %v2611 = vmul.f32 %v2610, %v2599
        %v2612 = vmul.f32 %v2610, %v2600
        %v2615 = vrot.slane %v2611, 1
        %v2616 = vrot.slane %v2612, 1
        %v2619 = vadd.f32 %v2606, %v2615
        %v2620 = vadd.f32 %v2607, %v2616
        %2621 = vrot.lane.b32.xlu0 %v2531, 15
        %v2622 = vpop.permute.xlu0 %2621
        %2623 = vrot.lane.b32.xlu0 %v2532, 15
        %v2624 = vpop.permute.xlu0 %2623
        %vm2625 = vcmp.lt.s32.totalorder %v2551, 15
        %v2626 = vsel %vm2625, %v2622, %v2624
        %v2627 = vsel %vm2625, %v2624, %v2622
        %v2628 = vlaneseq
        %v2629 = vshrl.u32 %v2628, 7
        %v2630 = vsub.s32 2, %v2629
        %v2631 = vrot.slane %v263, %v2630
        %v2632 = vlaneseq
        %v2633 = vshrl.u32 %v2632, 7
        %v2634 = vsub.s32 2, %v2633
        %v2635 = vrot.slane %v264, %v2634
        %v2636 = vmul.f32 %v2627, %v2631
        %v2637 = vmul.f32 %v2626, %v2635
        %s2638 = sadd.s32 %s2533, 2
        %s2639 = sld [smem:[#allocation8 + %s2638]]
        %v2640 = vstv %s2639
        %v2641 = vmul.f32 %v2640, %v2636
        %v2642 = vmul.f32 %v2640, %v2637
        %v2643 = vadd.f32 %v2619, %v2641
        %v2644 = vadd.f32 %v2620, %v2642
        %s2645 = sadd.s32 %s2533, 11
        %s2646 = sld [smem:[#allocation8 + %s2645]]
        %v2647 = vstv %s2646
        %v2648 = vmul.f32 %v2647, %v2636
        %v2649 = vmul.f32 %v2647, %v2637
        %v2652 = vrot.slane %v2648, 1
        %v2653 = vrot.slane %v2649, 1
        %v2656 = vadd.f32 %v2643, %v2652
        %v2657 = vadd.f32 %v2644, %v2653
        %2658 = vrot.lane.b32.xlu0 %v2531, 1
        %v2659 = vpop.permute.xlu0 %2658
        %2660 = vrot.lane.b32.xlu0 %v2532, 1
        %v2661 = vpop.permute.xlu0 %2660
        %vm2662 = vcmp.lt.s32.totalorder %v2551, 1
        %v2663 = vsel %vm2662, %v2659, %v2661
        %v2664 = vsel %vm2662, %v2661, %v2659
        %v2665 = vlaneseq
        %v2666 = vshrl.u32 %v2665, 7
        %v2667 = vsub.s32 3, %v2666
        %v2668 = vrot.slane %v263, %v2667
        %v2669 = vlaneseq
        %v2670 = vshrl.u32 %v2669, 7
        %v2671 = vsub.s32 3, %v2670
        %v2672 = vrot.slane %v264, %v2671
        %v2673 = vmul.f32 %v2664, %v2668
        %v2674 = vmul.f32 %v2663, %v2672
        %s2675 = sadd.s32 %s2533, 3
        %s2676 = sld [smem:[#allocation8 + %s2675]]
        %v2677 = vstv %s2676
        %v2678 = vmul.f32 %v2677, %v2673
        %v2679 = vmul.f32 %v2677, %v2674
        %v2680 = vadd.f32 %v2656, %v2678
        %v2681 = vadd.f32 %v2657, %v2679
        %s2682 = sadd.s32 %s2533, 12
        %s2683 = sld [smem:[#allocation8 + %s2682]]
        %v2684 = vstv %s2683
        %v2685 = vmul.f32 %v2684, %v2673
        %v2686 = vmul.f32 %v2684, %v2674
        %v2689 = vrot.slane %v2685, 1
        %v2690 = vrot.slane %v2686, 1
        %v2693 = vadd.f32 %v2680, %v2689
        %v2694 = vadd.f32 %v2681, %v2690
        %2695 = vrot.lane.b32.xlu0 %v2531, 127
        %v2696 = vpop.permute.xlu0 %2695
        %2697 = vrot.lane.b32.xlu0 %v2532, 127
        %v2698 = vpop.permute.xlu0 %2697
        %vm2699 = vcmp.lt.s32.totalorder %v2551, 127
        %v2700 = vsel %vm2699, %v2696, %v2698
        %v2701 = vsel %vm2699, %v2698, %v2696
        %v2702 = vlaneseq
        %v2703 = vshrl.u32 %v2702, 7
        %v2704 = vsub.s32 5, %v2703
        %v2705 = vrot.slane %v263, %v2704
        %v2706 = vlaneseq
        %v2707 = vshrl.u32 %v2706, 7
        %v2708 = vsub.s32 5, %v2707
        %v2709 = vrot.slane %v264, %v2708
        %v2710 = vmul.f32 %v2700, %v2705
        %v2711 = vmul.f32 %v2701, %v2709
        %s2712 = sadd.s32 %s2533, 5
        %s2713 = sld [smem:[#allocation8 + %s2712]]
        %v2714 = vstv %s2713
        %v2715 = vmul.f32 %v2714, %v2710
        %v2716 = vmul.f32 %v2714, %v2711
        %v2717 = vadd.f32 %v2693, %v2715
        %v2718 = vadd.f32 %v2694, %v2716
        %s2719 = sadd.s32 %s2533, 14
        %s2720 = sld [smem:[#allocation8 + %s2719]]
        %v2721 = vstv %s2720
        %v2722 = vmul.f32 %v2721, %v2710
        %v2723 = vmul.f32 %v2721, %v2711
        %v2726 = vrot.slane %v2722, 1
        %v2727 = vrot.slane %v2723, 1
        %v2730 = vadd.f32 %v2717, %v2726
        %v2731 = vadd.f32 %v2718, %v2727
        %2732 = vrot.lane.b32.xlu0 %v2531, 113
        %v2733 = vpop.permute.xlu0 %2732
        %2734 = vrot.lane.b32.xlu0 %v2532, 113
        %v2735 = vpop.permute.xlu0 %2734
        %vm2736 = vcmp.lt.s32.totalorder %v2551, 113
        %v2737 = vsel %vm2736, %v2733, %v2735
        %v2738 = vsel %vm2736, %v2735, %v2733
        %v2739 = vlaneseq
        %v2740 = vshrl.u32 %v2739, 7
        %v2741 = vsub.s32 6, %v2740
        %v2742 = vrot.slane %v263, %v2741
        %v2743 = vlaneseq
        %v2744 = vshrl.u32 %v2743, 7
        %v2745 = vsub.s32 6, %v2744
        %v2746 = vrot.slane %v264, %v2745
        %v2747 = vmul.f32 %v2737, %v2742
        %v2748 = vmul.f32 %v2738, %v2746
        %s2749 = sadd.s32 %s2533, 6
        %s2750 = sld [smem:[#allocation8 + %s2749]]
        %v2751 = vstv %s2750
        %v2752 = vmul.f32 %v2751, %v2747
        %v2753 = vmul.f32 %v2751, %v2748
        %v2754 = vadd.f32 %v2730, %v2752
        %v2755 = vadd.f32 %v2731, %v2753
        %s2756 = sadd.s32 %s2533, 15
        %s2757 = sld [smem:[#allocation8 + %s2756]]
        %v2758 = vstv %s2757
        %v2759 = vmul.f32 %v2758, %v2747
        %v2760 = vmul.f32 %v2758, %v2748
        %v2763 = vrot.slane %v2759, 1
        %v2764 = vrot.slane %v2760, 1
        %v2767 = vadd.f32 %v2754, %v2763
        %v2768 = vadd.f32 %v2755, %v2764
        %2769 = vrot.lane.b32.xlu0 %v2531, 112
        %v2770 = vpop.permute.xlu0 %2769
        %2771 = vrot.lane.b32.xlu0 %v2532, 112
        %v2772 = vpop.permute.xlu0 %2771
        %vm2773 = vcmp.lt.s32.totalorder %v2551, 112
        %v2774 = vsel %vm2773, %v2770, %v2772
        %v2775 = vsel %vm2773, %v2772, %v2770
        %v2776 = vlaneseq
        %v2777 = vshrl.u32 %v2776, 7
        %v2778 = vsub.s32 7, %v2777
        %v2779 = vrot.slane %v263, %v2778
        %v2780 = vlaneseq
        %v2781 = vshrl.u32 %v2780, 7
        %v2782 = vsub.s32 7, %v2781
        %v2783 = vrot.slane %v264, %v2782
        %v2784 = vmul.f32 %v2774, %v2779
        %v2785 = vmul.f32 %v2775, %v2783
        %s2786 = sadd.s32 %s2533, 7
        %s2787 = sld [smem:[#allocation8 + %s2786]]
        %v2788 = vstv %s2787
        %v2789 = vmul.f32 %v2788, %v2784
        %v2790 = vmul.f32 %v2788, %v2785
        %v2791 = vadd.f32 %v2767, %v2789
        %v2792 = vadd.f32 %v2768, %v2790
        %s2793 = sadd.s32 %s2533, 16
        %s2794 = sld [smem:[#allocation8 + %s2793]]
        %v2795 = vstv %s2794
        %v2796 = vmul.f32 %v2795, %v2784
        %v2797 = vmul.f32 %v2795, %v2785
        %v2800 = vrot.slane %v2796, 1
        %v2801 = vrot.slane %v2797, 1
        %v2804 = vadd.f32 %v2791, %v2800
        %v2805 = vadd.f32 %v2792, %v2801
        %2806 = vrot.lane.b32.xlu0 %v2531, 111
        %v2807 = vpop.permute.xlu0 %2806
        %2808 = vrot.lane.b32.xlu0 %v2532, 111
        %v2809 = vpop.permute.xlu0 %2808
        %vm2810 = vcmp.lt.s32.totalorder %v2551, 111
        %v2811 = vsel %vm2810, %v2807, %v2809
        %v2812 = vsel %vm2810, %v2809, %v2807
        %v2813 = vlaneseq
        %v2814 = vshrl.u32 %v2813, 7
        %v2815 = vsub.s32 0, %v2814
        %v2816 = vrot.slane %v265, %v2815
        %v2817 = vlaneseq
        %v2818 = vshrl.u32 %v2817, 7
        %v2819 = vsub.s32 0, %v2818
        %v2820 = vrot.slane %v266, %v2819
        %v2821 = vmul.f32 %v2811, %v2816
        %v2822 = vmul.f32 %v2812, %v2820
        %s2823 = sadd.s32 %s2533, 8
        %s2824 = sld [smem:[#allocation8 + %s2823]]
        %v2825 = vstv %s2824
        %v2826 = vmul.f32 %v2825, %v2821
        %v2827 = vmul.f32 %v2825, %v2822
        %v2828 = vadd.f32 %v2804, %v2826
        %v2829 = vadd.f32 %v2805, %v2827
        %s2830 = sadd.s32 %s2533, 17
        %s2831 = sld [smem:[#allocation8 + %s2830]]
        %v2832 = vstv %s2831
        %v2833 = vmul.f32 %v2832, %v2821
        %v2834 = vmul.f32 %v2832, %v2822
        %v2837 = vrot.slane %v2833, 1
        %v2838 = vrot.slane %v2834, 1
        %v2841 = vadd.f32 %v2828, %v2837
        %v2842 = vadd.f32 %v2829, %v2838
        %v2843 = vxor.u32 %v2841, 2147483648
        %v2844 = vxor.u32 %v2842, 2147483648
        %v2845 = vmul.f32 %v2843, 1.442695
        %v2846 = vpow.pop %v2845
        %v2847 = vmul.f32 %v2844, 1.442695
        %v2848 = vpow.pop %v2847
        %v2849 = vadd.f32 %v2846, 1.0
        %v2850 = vadd.f32 %v2848, 1.0
        %v2851 = vrcp.pop %v2849
        %v2852 = vmul.f32 1.0, %v2851
        %v2853 = vrcp.pop %v2850
        %v2854 = vmul.f32 1.0, %v2853
        %v2855 = vlaneseq
        %v2856 = vshrl.u32 %v2855, 7
        %v2857 = vsub.s32 0, %v2856
        %v2858 = vrot.slane %v2852, %v2857
        %v2859 = vlaneseq
        %v2860 = vshrl.u32 %v2859, 7
        %v2861 = vsub.s32 0, %v2860
        %v2862 = vrot.slane %v2854, %v2861
        %v2863 = vmul.f32 %v1547, %v2858
        %v2864 = vmul.f32 %v1548, %v2862
        %v2865 = vmul.f32 %v1549, %v2858
        %v2866 = vmul.f32 %v1550, %v2862
        %v2867 = vmul.f32 %v1551, %v2858
        %v2868 = vmul.f32 %v1552, %v2862
        %v2869 = vmul.f32 %v1553, %v2858
        %v2870 = vmul.f32 %v1554, %v2862
        %v2871 = vmul.f32 %v1555, %v2858
        %v2872 = vmul.f32 %v1556, %v2862
        %v2873 = vmul.f32 %v1557, %v2858
        %v2874 = vmul.f32 %v1558, %v2862
        %v2875 = vmul.f32 %v1559, %v2858
        %v2876 = vmul.f32 %v1560, %v2862
        %v2877 = vmul.f32 %v1561, %v2858
        %v2878 = vmul.f32 %v1562, %v2862
        %v2879 = vmul.f32 %v1563, %v2858
        %v2880 = vmul.f32 %v1564, %v2862
        %v2881 = vmul.f32 %v1565, %v2858
        %v2882 = vmul.f32 %v1566, %v2862
        %v2883 = vmul.f32 %v1567, %v2858
        %v2884 = vmul.f32 %v1568, %v2862
        %v2885 = vmul.f32 %v1569, %v2858
        %v2886 = vmul.f32 %v1570, %v2862
        %v2887 = vmul.f32 %v1571, %v2858
        %v2888 = vmul.f32 %v1572, %v2862
        %v2889 = vmul.f32 %v1573, %v2858
        %v2890 = vmul.f32 %v1574, %v2862
        %v2891 = vmul.f32 %v1575, %v2858
        %v2892 = vmul.f32 %v1576, %v2862
        %v2893 = vmul.f32 %v1577, %v2858
        %v2894 = vmul.f32 %v1578, %v2862
        %v2895 = vmul.f32 %v1579, %v2858
        %v2896 = vmul.f32 %v1580, %v2862
        %v2897 = vmul.f32 %v1581, %v2858
        %v2898 = vmul.f32 %v1582, %v2862
        %v2899 = vmul.f32 %v1583, %v2858
        %v2900 = vmul.f32 %v1584, %v2862
        %v2901 = vmul.f32 %v1585, %v2858
        %v2902 = vmul.f32 %v1586, %v2862
        %v2903 = vmul.f32 %v1587, %v2858
        %v2904 = vmul.f32 %v1588, %v2862
        %v2905 = vmul.f32 %v1589, %v2858
        %v2906 = vmul.f32 %v1590, %v2862
        %v2907 = vmul.f32 %v1591, %v2858
        %v2908 = vmul.f32 %v1592, %v2862
        %v2909 = vmul.f32 %v1593, %v2858
        %v2910 = vmul.f32 %v1594, %v2862
        %v2911 = vmul.f32 %v1595, %v2858
        %v2912 = vmul.f32 %v1596, %v2862
        %v2913 = vmul.f32 %v1597, %v2858
        %v2914 = vmul.f32 %v1598, %v2862
        %v2915 = vmul.f32 %v1599, %v2858
        %v2916 = vmul.f32 %v1600, %v2862
        %v2917 = vmul.f32 %v1601, %v2858
        %v2918 = vmul.f32 %v1602, %v2862
        %v2919 = vmul.f32 %v1603, %v2858
        %v2920 = vmul.f32 %v1604, %v2862
        %v2921 = vmul.f32 %v1605, %v2858
        %v2922 = vmul.f32 %v1606, %v2862
        %v2923 = vmul.f32 %v1607, %v2858
        %v2924 = vmul.f32 %v1608, %v2862
        %v2925 = vmul.f32 %v1609, %v2858
        %v2926 = vmul.f32 %v1610, %v2862
        %v2927 = vmul.f32 %v1611, %v2858
        %v2928 = vmul.f32 %v1612, %v2862
        %v2929 = vmul.f32 %v1613, %v2858
        %v2930 = vmul.f32 %v1614, %v2862
        %v2931 = vmul.f32 %v1615, %v2858
        %v2932 = vmul.f32 %v1616, %v2862
        %v2933 = vmul.f32 %v1617, %v2858
        %v2934 = vmul.f32 %v1618, %v2862
        %v2935 = vmul.f32 %v1619, %v2858
        %v2936 = vmul.f32 %v1620, %v2862
        %v2937 = vmul.f32 %v1621, %v2858
        %v2938 = vmul.f32 %v1622, %v2862
        %v2939 = vmul.f32 %v1623, %v2858
        %v2940 = vmul.f32 %v1624, %v2862
        %v2941 = vmul.f32 %v1625, %v2858
        %v2942 = vmul.f32 %v1626, %v2862
        %v2943 = vmul.f32 %v1627, %v2858
        %v2944 = vmul.f32 %v1628, %v2862
        %v2945 = vmul.f32 %v1629, %v2858
        %v2946 = vmul.f32 %v1630, %v2862
        %v2947 = vmul.f32 %v1631, %v2858
        %v2948 = vmul.f32 %v1632, %v2862
        %v2949 = vmul.f32 %v1633, %v2858
        %v2950 = vmul.f32 %v1634, %v2862
        %v2951 = vmul.f32 %v1635, %v2858
        %v2952 = vmul.f32 %v1636, %v2862
        %v2953 = vmul.f32 %v1637, %v2858
        %v2954 = vmul.f32 %v1638, %v2862
        %v2955 = vmul.f32 %v1639, %v2858
        %v2956 = vmul.f32 %v1640, %v2862
        %v2957 = vmul.f32 %v1641, %v2858
        %v2958 = vmul.f32 %v1642, %v2862
        %v2959 = vmul.f32 %v1643, %v2858
        %v2960 = vmul.f32 %v1644, %v2862
        %v2961 = vmul.f32 %v1645, %v2858
        %v2962 = vmul.f32 %v1646, %v2862
        %v2963 = vmul.f32 %v1647, %v2858
        %v2964 = vmul.f32 %v1648, %v2862
        %v2965 = vmul.f32 %v1649, %v2858
        %v2966 = vmul.f32 %v1650, %v2862
        %v2967 = vmul.f32 %v1651, %v2858
        %v2968 = vmul.f32 %v1652, %v2862
        %v2969 = vmul.f32 %v1653, %v2858
        %v2970 = vmul.f32 %v1654, %v2862
        %v2971 = vmul.f32 %v1655, %v2858
        %v2972 = vmul.f32 %v1656, %v2862
        %v2973 = vmul.f32 %v1657, %v2858
        %v2974 = vmul.f32 %v1658, %v2862
        %v2975 = vmul.f32 %v1659, %v2858
        %v2976 = vmul.f32 %v1660, %v2862
        %v2977 = vmul.f32 %v1661, %v2858
        %v2978 = vmul.f32 %v1662, %v2862
        %v2979 = vmul.f32 %v1663, %v2858
        %v2980 = vmul.f32 %v1664, %v2862
        %v2981 = vmul.f32 %v1665, %v2858
        %v2982 = vmul.f32 %v1666, %v2862
        %v2983 = vmul.f32 %v1667, %v2858
        %v2984 = vmul.f32 %v1668, %v2862
        %v2985 = vmul.f32 %v1669, %v2858
        %v2986 = vmul.f32 %v1670, %v2862
        %v2987 = vmul.f32 %v1671, %v2858
        %v2988 = vmul.f32 %v1672, %v2862
        %v2989 = vmul.f32 %v1673, %v2858
        %v2990 = vmul.f32 %v1674, %v2862
        %v2991 = vmul.f32 %v1675, %v2858
        %v2992 = vmul.f32 %v1676, %v2862
        %v2993 = vmul.f32 %v1677, %v2858
        %v2994 = vmul.f32 %v1678, %v2862
        %v2995 = vmul.f32 %v1679, %v2858
        %v2996 = vmul.f32 %v1680, %v2862
        %v2997 = vmul.f32 %v1681, %v2858
        %v2998 = vmul.f32 %v1682, %v2862
        %v2999 = vmul.f32 %v1683, %v2858
        %v3000 = vmul.f32 %v1684, %v2862
        %v3001 = vmul.f32 %v1685, %v2858
        %v3002 = vmul.f32 %v1686, %v2862
        %v3003 = vmul.f32 %v1687, %v2858
        %v3004 = vmul.f32 %v1688, %v2862
        %v3005 = vmul.f32 %v1689, %v2858
        %v3006 = vmul.f32 %v1690, %v2862
        %v3007 = vmul.f32 %v1691, %v2858
        %v3008 = vmul.f32 %v1692, %v2862
        %v3009 = vmul.f32 %v1693, %v2858
        %v3010 = vmul.f32 %v1694, %v2862
        %v3011 = vmul.f32 %v1695, %v2858
        %v3012 = vmul.f32 %v1696, %v2862
        %v3013 = vmul.f32 %v1697, %v2858
        %v3014 = vmul.f32 %v1698, %v2862
        %v3015 = vmul.f32 %v1699, %v2858
        %v3016 = vmul.f32 %v1700, %v2862
        %v3017 = vmul.f32 %v1701, %v2858
        %v3018 = vmul.f32 %v1702, %v2862
        %v3019 = vmul.f32 %v1703, %v2858
        %v3020 = vmul.f32 %v1704, %v2862
        %v3021 = vmul.f32 %v1705, %v2858
        %v3022 = vmul.f32 %v1706, %v2862
        %v3023 = vmul.f32 %v1707, %v2858
        %v3024 = vmul.f32 %v1708, %v2862
        %v3025 = vmul.f32 %v1709, %v2858
        %v3026 = vmul.f32 %v1710, %v2862
        %v3027 = vmul.f32 %v1711, %v2858
        %v3028 = vmul.f32 %v1712, %v2862
        %v3029 = vmul.f32 %v1713, %v2858
        %v3030 = vmul.f32 %v1714, %v2862
        %v3031 = vmul.f32 %v1715, %v2858
        %v3032 = vmul.f32 %v1716, %v2862
        %v3033 = vmul.f32 %v1717, %v2858
        %v3034 = vmul.f32 %v1718, %v2862
        %v3035 = vmul.f32 %v1719, %v2858
        %v3036 = vmul.f32 %v1720, %v2862
        %v3037 = vmul.f32 %v1721, %v2858
        %v3038 = vmul.f32 %v1722, %v2862
        %v3039 = vmul.f32 %v1723, %v2858
        %v3040 = vmul.f32 %v1724, %v2862
        %v3041 = vmul.f32 %v1725, %v2858
        %v3042 = vmul.f32 %v1726, %v2862
        %v3043 = vmul.f32 %v1727, %v2858
        %v3044 = vmul.f32 %v1728, %v2862
        %v3045 = vmul.f32 %v1729, %v2858
        %v3046 = vmul.f32 %v1730, %v2862
        %v3047 = vmul.f32 %v1731, %v2858
        %v3048 = vmul.f32 %v1732, %v2862
        %v3049 = vmul.f32 %v1733, %v2858
        %v3050 = vmul.f32 %v1734, %v2862
        %v3051 = vmul.f32 %v1735, %v2858
        %v3052 = vmul.f32 %v1736, %v2862
        %v3053 = vmul.f32 %v1737, %v2858
        %v3054 = vmul.f32 %v1738, %v2862
        %v3055 = vmul.f32 %v1739, %v2858
        %v3056 = vmul.f32 %v1740, %v2862
        %v3057 = vmul.f32 %v1741, %v2858
        %v3058 = vmul.f32 %v1742, %v2862
        %v3059 = vmul.f32 %v1743, %v2858
        %v3060 = vmul.f32 %v1744, %v2862
        %v3061 = vmul.f32 %v1745, %v2858
        %v3062 = vmul.f32 %v1746, %v2862
        %v3063 = vmul.f32 %v1747, %v2858
        %v3064 = vmul.f32 %v1748, %v2862
        %v3065 = vmul.f32 %v1749, %v2858
        %v3066 = vmul.f32 %v1750, %v2862
        %v3067 = vmul.f32 %v1751, %v2858
        %v3068 = vmul.f32 %v1752, %v2862
        %v3069 = vmul.f32 %v1753, %v2858
        %v3070 = vmul.f32 %v1754, %v2862
        %v3071 = vmul.f32 %v1755, %v2858
        %v3072 = vmul.f32 %v1756, %v2862
        %v3073 = vmul.f32 %v1757, %v2858
        %v3074 = vmul.f32 %v1758, %v2862
        %v3075 = vmul.f32 %v1759, %v2858
        %v3076 = vmul.f32 %v1760, %v2862
        %v3077 = vmul.f32 %v1761, %v2858
        %v3078 = vmul.f32 %v1762, %v2862
        %v3079 = vmul.f32 %v1763, %v2858
        %v3080 = vmul.f32 %v1764, %v2862
        %v3081 = vmul.f32 %v1765, %v2858
        %v3082 = vmul.f32 %v1766, %v2862
        %v3083 = vmul.f32 %v1767, %v2858
        %v3084 = vmul.f32 %v1768, %v2862
        %v3085 = vmul.f32 %v1769, %v2858
        %v3086 = vmul.f32 %v1770, %v2862
        %v3087 = vmul.f32 %v1771, %v2858
        %v3088 = vmul.f32 %v1772, %v2862
        %v3089 = vmul.f32 %v1773, %v2858
        %v3090 = vmul.f32 %v1774, %v2862
        %v3091 = vmul.f32 %v1775, %v2858
        %v3092 = vmul.f32 %v1776, %v2862
        %v3093 = vmul.f32 %v1777, %v2858
        %v3094 = vmul.f32 %v1778, %v2862
        %v3095 = vmul.f32 %v1779, %v2858
        %v3096 = vmul.f32 %v1780, %v2862
        %v3097 = vmul.f32 %v1781, %v2858
        %v3098 = vmul.f32 %v1782, %v2862
        %v3099 = vmul.f32 %v1783, %v2858
        %v3100 = vmul.f32 %v1784, %v2862
        %v3101 = vmul.f32 %v1785, %v2858
        %v3102 = vmul.f32 %v1786, %v2862
        %v3103 = vmul.f32 %v1787, %v2858
        %v3104 = vmul.f32 %v1788, %v2862
        %v3105 = vmul.f32 %v1789, %v2858
        %v3106 = vmul.f32 %v1790, %v2862
        %v3107 = vmul.f32 %v1791, %v2858
        %v3108 = vmul.f32 %v1792, %v2862
        %v3109 = vmul.f32 %v1793, %v2858
        %v3110 = vmul.f32 %v1794, %v2862
        %v3111 = vmul.f32 %v1795, %v2858
        %v3112 = vmul.f32 %v1796, %v2862
        %v3113 = vmul.f32 %v1797, %v2858
        %v3114 = vmul.f32 %v1798, %v2862
        %v3115 = vmul.f32 %v1799, %v2858
        %v3116 = vmul.f32 %v1800, %v2862
        %v3117 = vmul.f32 %v1801, %v2858
        %v3118 = vmul.f32 %v1802, %v2862
        %v3119 = vmul.f32 %v1803, %v2858
        %v3120 = vmul.f32 %v1804, %v2862
        %v3121 = vmul.f32 %v1805, %v2858
        %v3122 = vmul.f32 %v1806, %v2862
        %v3123 = vmul.f32 %v1807, %v2858
        %v3124 = vmul.f32 %v1808, %v2862
        %v3125 = vmul.f32 %v1809, %v2858
        %v3126 = vmul.f32 %v1810, %v2862
        %v3127 = vmul.f32 %v1811, %v2858
        %v3128 = vmul.f32 %v1812, %v2862
        %v3129 = vmul.f32 %v1813, %v2858
        %v3130 = vmul.f32 %v1814, %v2862
        %v3131 = vmul.f32 %v1815, %v2858
        %v3132 = vmul.f32 %v1816, %v2862
        %v3133 = vmul.f32 %v1817, %v2858
        %v3134 = vmul.f32 %v1818, %v2862
        %v3135 = vmul.f32 %v1819, %v2858
        %v3136 = vmul.f32 %v1820, %v2862
        %v3137 = vmul.f32 %v1821, %v2858
        %v3138 = vmul.f32 %v1822, %v2862
        %v3139 = vmul.f32 %v1823, %v2858
        %v3140 = vmul.f32 %v1824, %v2862
        %v3141 = vmul.f32 %v1825, %v2858
        %v3142 = vmul.f32 %v1826, %v2862
        %v3143 = vmul.f32 %v1827, %v2858
        %v3144 = vmul.f32 %v1828, %v2862
        %v3145 = vmul.f32 %v1829, %v2858
        %v3146 = vmul.f32 %v1830, %v2862
        %v3147 = vmul.f32 %v1831, %v2858
        %v3148 = vmul.f32 %v1832, %v2862
        %v3149 = vmul.f32 %v1833, %v2858
        %v3150 = vmul.f32 %v1834, %v2862
        %v3151 = vmul.f32 %v1835, %v2858
        %v3152 = vmul.f32 %v1836, %v2862
        %v3153 = vmul.f32 %v1837, %v2858
        %v3154 = vmul.f32 %v1838, %v2862
        %v3155 = vmul.f32 %v1839, %v2858
        %v3156 = vmul.f32 %v1840, %v2862
        %v3157 = vmul.f32 %v1841, %v2858
        %v3158 = vmul.f32 %v1842, %v2862
        %v3159 = vmul.f32 %v1843, %v2858
        %v3160 = vmul.f32 %v1844, %v2862
        %v3161 = vmul.f32 %v1845, %v2858
        %v3162 = vmul.f32 %v1846, %v2862
        %v3163 = vmul.f32 %v1847, %v2858
        %v3164 = vmul.f32 %v1848, %v2862
        %v3165 = vmul.f32 %v1849, %v2858
        %v3166 = vmul.f32 %v1850, %v2862
        %v3167 = vmul.f32 %v1851, %v2858
        %v3168 = vmul.f32 %v1852, %v2862
        %v3169 = vmul.f32 %v1853, %v2858
        %v3170 = vmul.f32 %v1854, %v2862
        %v3171 = vmul.f32 %v1855, %v2858
        %v3172 = vmul.f32 %v1856, %v2862
        %v3173 = vmul.f32 %v1857, %v2858
        %v3174 = vmul.f32 %v1858, %v2862
        %v3175 = vmul.f32 %v1859, %v2858
        %v3176 = vmul.f32 %v1860, %v2862
        %v3177 = vmul.f32 %v1861, %v2858
        %v3178 = vmul.f32 %v1862, %v2862
        %v3179 = vmul.f32 %v1863, %v2858
        %v3180 = vmul.f32 %v1864, %v2862
        %v3181 = vmul.f32 %v1865, %v2858
        %v3182 = vmul.f32 %v1866, %v2862
        %3183 = vst [vmem:[%s257] sm:$0xff] %v2863
        %3184 = vst [vmem:[%s257 + $0x8] sm:$0xff] %v2864
        %3185 = vst [vmem:[%s257 + $0x10] sm:$0xff] %v2865
        %3186 = vst [vmem:[%s257 + $0x18] sm:$0xff] %v2866
        %3187 = vst [vmem:[%s257 + $0x20] sm:$0xff] %v2867
        %3188 = vst [vmem:[%s257 + $0x28] sm:$0xff] %v2868
        %3189 = vst [vmem:[%s257 + $0x30] sm:$0xff] %v2869
        %3190 = vst [vmem:[%s257 + $0x38] sm:$0xff] %v2870
        %3191 = vst [vmem:[%s257 + $0x40] sm:$0xff] %v2871
        %3192 = vst [vmem:[%s257 + $0x48] sm:$0xff] %v2872
        %3193 = vst [vmem:[%s257 + $0x50] sm:$0xff] %v2873
        %3194 = vst [vmem:[%s257 + $0x58] sm:$0xff] %v2874
        %3195 = vst [vmem:[%s257 + $0x60] sm:$0xff] %v2875
        %3196 = vst [vmem:[%s257 + $0x68] sm:$0xff] %v2876
        %3197 = vst [vmem:[%s257 + $0x70] sm:$0xff] %v2877
        %3198 = vst [vmem:[%s257 + $0x78] sm:$0xff] %v2878
        %3199 = vst [vmem:[%s257 + $0x80] sm:$0xff] %v2879
        %3200 = vst [vmem:[%s257 + $0x88] sm:$0xff] %v2880
        %3201 = vst [vmem:[%s257 + $0x90] sm:$0xff] %v2881
        %3202 = vst [vmem:[%s257 + $0x98] sm:$0xff] %v2882
        %3203 = vst [vmem:[%s257 + $0xa0] sm:$0xff] %v2883
        %3204 = vst [vmem:[%s257 + $0xa8] sm:$0xff] %v2884
        %3205 = vst [vmem:[%s257 + $0xb0] sm:$0xff] %v2885
        %3206 = vst [vmem:[%s257 + $0xb8] sm:$0xff] %v2886
        %3207 = vst [vmem:[%s257 + $0xc0] sm:$0xff] %v2887
        %3208 = vst [vmem:[%s257 + $0xc8] sm:$0xff] %v2888
        %3209 = vst [vmem:[%s257 + $0xd0] sm:$0xff] %v2889
        %3210 = vst [vmem:[%s257 + $0xd8] sm:$0xff] %v2890
        %3211 = vst [vmem:[%s257 + $0xe0] sm:$0xff] %v2891
        %3212 = vst [vmem:[%s257 + $0xe8] sm:$0xff] %v2892
        %3213 = vst [vmem:[%s257 + $0xf0] sm:$0xff] %v2893
        %3214 = vst [vmem:[%s257 + $0xf8] sm:$0xff] %v2894
        %3215 = vst [vmem:[%s257 + $0x100] sm:$0xff] %v2895
        %3216 = vst [vmem:[%s257 + $0x108] sm:$0xff] %v2896
        %3217 = vst [vmem:[%s257 + $0x110] sm:$0xff] %v2897
        %3218 = vst [vmem:[%s257 + $0x118] sm:$0xff] %v2898
        %3219 = vst [vmem:[%s257 + $0x120] sm:$0xff] %v2899
        %3220 = vst [vmem:[%s257 + $0x128] sm:$0xff] %v2900
        %3221 = vst [vmem:[%s257 + $0x130] sm:$0xff] %v2901
        %3222 = vst [vmem:[%s257 + $0x138] sm:$0xff] %v2902
        %3223 = vst [vmem:[%s257 + $0x140] sm:$0xff] %v2903
        %3224 = vst [vmem:[%s257 + $0x148] sm:$0xff] %v2904
        %3225 = vst [vmem:[%s257 + $0x150] sm:$0xff] %v2905
        %3226 = vst [vmem:[%s257 + $0x158] sm:$0xff] %v2906
        %3227 = vst [vmem:[%s257 + $0x160] sm:$0xff] %v2907
        %3228 = vst [vmem:[%s257 + $0x168] sm:$0xff] %v2908
        %3229 = vst [vmem:[%s257 + $0x170] sm:$0xff] %v2909
        %3230 = vst [vmem:[%s257 + $0x178] sm:$0xff] %v2910
        %3231 = vst [vmem:[%s257 + $0x180] sm:$0xff] %v2911
        %3232 = vst [vmem:[%s257 + $0x188] sm:$0xff] %v2912
        %3233 = vst [vmem:[%s257 + $0x190] sm:$0xff] %v2913
        %3234 = vst [vmem:[%s257 + $0x198] sm:$0xff] %v2914
        %3235 = vst [vmem:[%s257 + $0x1a0] sm:$0xff] %v2915
        %3236 = vst [vmem:[%s257 + $0x1a8] sm:$0xff] %v2916
        %3237 = vst [vmem:[%s257 + $0x1b0] sm:$0xff] %v2917
        %3238 = vst [vmem:[%s257 + $0x1b8] sm:$0xff] %v2918
        %3239 = vst [vmem:[%s257 + $0x1c0] sm:$0xff] %v2919
        %3240 = vst [vmem:[%s257 + $0x1c8] sm:$0xff] %v2920
        %3241 = vst [vmem:[%s257 + $0x1d0] sm:$0xff] %v2921
        %3242 = vst [vmem:[%s257 + $0x1d8] sm:$0xff] %v2922
        %3243 = vst [vmem:[%s257 + $0x1e0] sm:$0xff] %v2923
        %3244 = vst [vmem:[%s257 + $0x1e8] sm:$0xff] %v2924
        %3245 = vst [vmem:[%s257 + $0x1f0] sm:$0xff] %v2925
        %3246 = vst [vmem:[%s257 + $0x1f8] sm:$0xff] %v2926
        %3247 = vst [vmem:[%s257 + $0x200] sm:$0xff] %v2927
        %3248 = vst [vmem:[%s257 + $0x208] sm:$0xff] %v2928
        %3249 = vst [vmem:[%s257 + $0x210] sm:$0xff] %v2929
        %3250 = vst [vmem:[%s257 + $0x218] sm:$0xff] %v2930
        %3251 = vst [vmem:[%s257 + $0x220] sm:$0xff] %v2931
        %3252 = vst [vmem:[%s257 + $0x228] sm:$0xff] %v2932
        %3253 = vst [vmem:[%s257 + $0x230] sm:$0xff] %v2933
        %3254 = vst [vmem:[%s257 + $0x238] sm:$0xff] %v2934
        %3255 = vst [vmem:[%s257 + $0x240] sm:$0xff] %v2935
        %3256 = vst [vmem:[%s257 + $0x248] sm:$0xff] %v2936
        %3257 = vst [vmem:[%s257 + $0x250] sm:$0xff] %v2937
        %3258 = vst [vmem:[%s257 + $0x258] sm:$0xff] %v2938
        %3259 = vst [vmem:[%s257 + $0x260] sm:$0xff] %v2939
        %3260 = vst [vmem:[%s257 + $0x268] sm:$0xff] %v2940
        %3261 = vst [vmem:[%s257 + $0x270] sm:$0xff] %v2941
        %3262 = vst [vmem:[%s257 + $0x278] sm:$0xff] %v2942
        %3263 = vst [vmem:[%s257 + $0x280] sm:$0xff] %v2943
        %3264 = vst [vmem:[%s257 + $0x288] sm:$0xff] %v2944
        %3265 = vst [vmem:[%s257 + $0x290] sm:$0xff] %v2945
        %3266 = vst [vmem:[%s257 + $0x298] sm:$0xff] %v2946
        %3267 = vst [vmem:[%s257 + $0x2a0] sm:$0xff] %v2947
        %3268 = vst [vmem:[%s257 + $0x2a8] sm:$0xff] %v2948
        %3269 = vst [vmem:[%s257 + $0x2b0] sm:$0xff] %v2949
        %3270 = vst [vmem:[%s257 + $0x2b8] sm:$0xff] %v2950
        %3271 = vst [vmem:[%s257 + $0x2c0] sm:$0xff] %v2951
        %3272 = vst [vmem:[%s257 + $0x2c8] sm:$0xff] %v2952
        %3273 = vst [vmem:[%s257 + $0x2d0] sm:$0xff] %v2953
        %3274 = vst [vmem:[%s257 + $0x2d8] sm:$0xff] %v2954
        %3275 = vst [vmem:[%s257 + $0x2e0] sm:$0xff] %v2955
        %3276 = vst [vmem:[%s257 + $0x2e8] sm:$0xff] %v2956
        %3277 = vst [vmem:[%s257 + $0x2f0] sm:$0xff] %v2957
        %3278 = vst [vmem:[%s257 + $0x2f8] sm:$0xff] %v2958
        %3279 = vst [vmem:[%s257 + $0x300] sm:$0xff] %v2959
        %3280 = vst [vmem:[%s257 + $0x308] sm:$0xff] %v2960
        %3281 = vst [vmem:[%s257 + $0x310] sm:$0xff] %v2961
        %3282 = vst [vmem:[%s257 + $0x318] sm:$0xff] %v2962
        %3283 = vst [vmem:[%s257 + $0x320] sm:$0xff] %v2963
        %3284 = vst [vmem:[%s257 + $0x328] sm:$0xff] %v2964
        %3285 = vst [vmem:[%s257 + $0x330] sm:$0xff] %v2965
        %3286 = vst [vmem:[%s257 + $0x338] sm:$0xff] %v2966
        %3287 = vst [vmem:[%s257 + $0x340] sm:$0xff] %v2967
        %3288 = vst [vmem:[%s257 + $0x348] sm:$0xff] %v2968
        %3289 = vst [vmem:[%s257 + $0x350] sm:$0xff] %v2969
        %3290 = vst [vmem:[%s257 + $0x358] sm:$0xff] %v2970
        %3291 = vst [vmem:[%s257 + $0x360] sm:$0xff] %v2971
        %3292 = vst [vmem:[%s257 + $0x368] sm:$0xff] %v2972
        %3293 = vst [vmem:[%s257 + $0x370] sm:$0xff] %v2973
        %3294 = vst [vmem:[%s257 + $0x378] sm:$0xff] %v2974
        %3295 = vst [vmem:[%s257 + $0x380] sm:$0xff] %v2975
        %3296 = vst [vmem:[%s257 + $0x388] sm:$0xff] %v2976
        %3297 = vst [vmem:[%s257 + $0x390] sm:$0xff] %v2977
        %3298 = vst [vmem:[%s257 + $0x398] sm:$0xff] %v2978
        %3299 = vst [vmem:[%s257 + $0x3a0] sm:$0xff] %v2979
        %3300 = vst [vmem:[%s257 + $0x3a8] sm:$0xff] %v2980
        %3301 = vst [vmem:[%s257 + $0x3b0] sm:$0xff] %v2981
        %3302 = vst [vmem:[%s257 + $0x3b8] sm:$0xff] %v2982
        %3303 = vst [vmem:[%s257 + $0x3c0] sm:$0xff] %v2983
        %3304 = vst [vmem:[%s257 + $0x3c8] sm:$0xff] %v2984
        %3305 = vst [vmem:[%s257 + $0x3d0] sm:$0xff] %v2985
        %3306 = vst [vmem:[%s257 + $0x3d8] sm:$0xff] %v2986
        %3307 = vst [vmem:[%s257 + $0x3e0] sm:$0xff] %v2987
        %3308 = vst [vmem:[%s257 + $0x3e8] sm:$0xff] %v2988
        %3309 = vst [vmem:[%s257 + $0x3f0] sm:$0xff] %v2989
        %3310 = vst [vmem:[%s257 + $0x3f8] sm:$0xff] %v2990
        %3311 = vst [vmem:[%s257 + $0x400] sm:$0xff] %v2991
        %3312 = vst [vmem:[%s257 + $0x408] sm:$0xff] %v2992
        %3313 = vst [vmem:[%s257 + $0x410] sm:$0xff] %v2993
        %3314 = vst [vmem:[%s257 + $0x418] sm:$0xff] %v2994
        %3315 = vst [vmem:[%s257 + $0x420] sm:$0xff] %v2995
        %3316 = vst [vmem:[%s257 + $0x428] sm:$0xff] %v2996
        %3317 = vst [vmem:[%s257 + $0x430] sm:$0xff] %v2997
        %3318 = vst [vmem:[%s257 + $0x438] sm:$0xff] %v2998
        %3319 = vst [vmem:[%s257 + $0x440] sm:$0xff] %v2999
        %3320 = vst [vmem:[%s257 + $0x448] sm:$0xff] %v3000
        %3321 = vst [vmem:[%s257 + $0x450] sm:$0xff] %v3001
        %3322 = vst [vmem:[%s257 + $0x458] sm:$0xff] %v3002
        %3323 = vst [vmem:[%s257 + $0x460] sm:$0xff] %v3003
        %3324 = vst [vmem:[%s257 + $0x468] sm:$0xff] %v3004
        %3325 = vst [vmem:[%s257 + $0x470] sm:$0xff] %v3005
        %3326 = vst [vmem:[%s257 + $0x478] sm:$0xff] %v3006
        %3327 = vst [vmem:[%s257 + $0x480] sm:$0xff] %v3007
        %3328 = vst [vmem:[%s257 + $0x488] sm:$0xff] %v3008
        %3329 = vst [vmem:[%s257 + $0x490] sm:$0xff] %v3009
        %3330 = vst [vmem:[%s257 + $0x498] sm:$0xff] %v3010
        %3331 = vst [vmem:[%s257 + $0x4a0] sm:$0xff] %v3011
        %3332 = vst [vmem:[%s257 + $0x4a8] sm:$0xff] %v3012
        %3333 = vst [vmem:[%s257 + $0x4b0] sm:$0xff] %v3013
        %3334 = vst [vmem:[%s257 + $0x4b8] sm:$0xff] %v3014
        %3335 = vst [vmem:[%s257 + $0x4c0] sm:$0xff] %v3015
        %3336 = vst [vmem:[%s257 + $0x4c8] sm:$0xff] %v3016
        %3337 = vst [vmem:[%s257 + $0x4d0] sm:$0xff] %v3017
        %3338 = vst [vmem:[%s257 + $0x4d8] sm:$0xff] %v3018
        %3339 = vst [vmem:[%s257 + $0x4e0] sm:$0xff] %v3019
        %3340 = vst [vmem:[%s257 + $0x4e8] sm:$0xff] %v3020
        %3341 = vst [vmem:[%s257 + $0x4f0] sm:$0xff] %v3021
        %3342 = vst [vmem:[%s257 + $0x4f8] sm:$0xff] %v3022
        %3343 = vst [vmem:[%s257 + $0x500] sm:$0xff] %v3023
        %3344 = vst [vmem:[%s257 + $0x508] sm:$0xff] %v3024
        %3345 = vst [vmem:[%s257 + $0x510] sm:$0xff] %v3025
        %3346 = vst [vmem:[%s257 + $0x518] sm:$0xff] %v3026
        %3347 = vst [vmem:[%s257 + $0x520] sm:$0xff] %v3027
        %3348 = vst [vmem:[%s257 + $0x528] sm:$0xff] %v3028
        %3349 = vst [vmem:[%s257 + $0x530] sm:$0xff] %v3029
        %3350 = vst [vmem:[%s257 + $0x538] sm:$0xff] %v3030
        %3351 = vst [vmem:[%s257 + $0x540] sm:$0xff] %v3031
        %3352 = vst [vmem:[%s257 + $0x548] sm:$0xff] %v3032
        %3353 = vst [vmem:[%s257 + $0x550] sm:$0xff] %v3033
        %3354 = vst [vmem:[%s257 + $0x558] sm:$0xff] %v3034
        %3355 = vst [vmem:[%s257 + $0x560] sm:$0xff] %v3035
        %3356 = vst [vmem:[%s257 + $0x568] sm:$0xff] %v3036
        %3357 = vst [vmem:[%s257 + $0x570] sm:$0xff] %v3037
        %3358 = vst [vmem:[%s257 + $0x578] sm:$0xff] %v3038
        %3359 = vst [vmem:[%s257 + $0x580] sm:$0xff] %v3039
        %3360 = vst [vmem:[%s257 + $0x588] sm:$0xff] %v3040
        %3361 = vst [vmem:[%s257 + $0x590] sm:$0xff] %v3041
        %3362 = vst [vmem:[%s257 + $0x598] sm:$0xff] %v3042
        %3363 = vst [vmem:[%s257 + $0x5a0] sm:$0xff] %v3043
        %3364 = vst [vmem:[%s257 + $0x5a8] sm:$0xff] %v3044
        %3365 = vst [vmem:[%s257 + $0x5b0] sm:$0xff] %v3045
        %3366 = vst [vmem:[%s257 + $0x5b8] sm:$0xff] %v3046
        %3367 = vst [vmem:[%s257 + $0x5c0] sm:$0xff] %v3047
        %3368 = vst [vmem:[%s257 + $0x5c8] sm:$0xff] %v3048
        %3369 = vst [vmem:[%s257 + $0x5d0] sm:$0xff] %v3049
        %3370 = vst [vmem:[%s257 + $0x5d8] sm:$0xff] %v3050
        %3371 = vst [vmem:[%s257 + $0x5e0] sm:$0xff] %v3051
        %3372 = vst [vmem:[%s257 + $0x5e8] sm:$0xff] %v3052
        %3373 = vst [vmem:[%s257 + $0x5f0] sm:$0xff] %v3053
        %3374 = vst [vmem:[%s257 + $0x5f8] sm:$0xff] %v3054
        %3375 = vst [vmem:[%s257 + $0x600] sm:$0xff] %v3055
        %3376 = vst [vmem:[%s257 + $0x608] sm:$0xff] %v3056
        %3377 = vst [vmem:[%s257 + $0x610] sm:$0xff] %v3057
        %3378 = vst [vmem:[%s257 + $0x618] sm:$0xff] %v3058
        %3379 = vst [vmem:[%s257 + $0x620] sm:$0xff] %v3059
        %3380 = vst [vmem:[%s257 + $0x628] sm:$0xff] %v3060
        %3381 = vst [vmem:[%s257 + $0x630] sm:$0xff] %v3061
        %3382 = vst [vmem:[%s257 + $0x638] sm:$0xff] %v3062
        %3383 = vst [vmem:[%s257 + $0x640] sm:$0xff] %v3063
        %3384 = vst [vmem:[%s257 + $0x648] sm:$0xff] %v3064
        %3385 = vst [vmem:[%s257 + $0x650] sm:$0xff] %v3065
        %3386 = vst [vmem:[%s257 + $0x658] sm:$0xff] %v3066
        %3387 = vst [vmem:[%s257 + $0x660] sm:$0xff] %v3067
        %3388 = vst [vmem:[%s257 + $0x668] sm:$0xff] %v3068
        %3389 = vst [vmem:[%s257 + $0x670] sm:$0xff] %v3069
        %3390 = vst [vmem:[%s257 + $0x678] sm:$0xff] %v3070
        %3391 = vst [vmem:[%s257 + $0x680] sm:$0xff] %v3071
        %3392 = vst [vmem:[%s257 + $0x688] sm:$0xff] %v3072
        %3393 = vst [vmem:[%s257 + $0x690] sm:$0xff] %v3073
        %3394 = vst [vmem:[%s257 + $0x698] sm:$0xff] %v3074
        %3395 = vst [vmem:[%s257 + $0x6a0] sm:$0xff] %v3075
        %3396 = vst [vmem:[%s257 + $0x6a8] sm:$0xff] %v3076
        %3397 = vst [vmem:[%s257 + $0x6b0] sm:$0xff] %v3077
        %3398 = vst [vmem:[%s257 + $0x6b8] sm:$0xff] %v3078
        %3399 = vst [vmem:[%s257 + $0x6c0] sm:$0xff] %v3079
        %3400 = vst [vmem:[%s257 + $0x6c8] sm:$0xff] %v3080
        %3401 = vst [vmem:[%s257 + $0x6d0] sm:$0xff] %v3081
        %3402 = vst [vmem:[%s257 + $0x6d8] sm:$0xff] %v3082
        %3403 = vst [vmem:[%s257 + $0x6e0] sm:$0xff] %v3083
        %3404 = vst [vmem:[%s257 + $0x6e8] sm:$0xff] %v3084
        %3405 = vst [vmem:[%s257 + $0x6f0] sm:$0xff] %v3085
        %3406 = vst [vmem:[%s257 + $0x6f8] sm:$0xff] %v3086
        %3407 = vst [vmem:[%s257 + $0x700] sm:$0xff] %v3087
        %3408 = vst [vmem:[%s257 + $0x708] sm:$0xff] %v3088
        %3409 = vst [vmem:[%s257 + $0x710] sm:$0xff] %v3089
        %3410 = vst [vmem:[%s257 + $0x718] sm:$0xff] %v3090
        %3411 = vst [vmem:[%s257 + $0x720] sm:$0xff] %v3091
        %3412 = vst [vmem:[%s257 + $0x728] sm:$0xff] %v3092
        %3413 = vst [vmem:[%s257 + $0x730] sm:$0xff] %v3093
        %3414 = vst [vmem:[%s257 + $0x738] sm:$0xff] %v3094
        %3415 = vst [vmem:[%s257 + $0x740] sm:$0xff] %v3095
        %3416 = vst [vmem:[%s257 + $0x748] sm:$0xff] %v3096
        %3417 = vst [vmem:[%s257 + $0x750] sm:$0xff] %v3097
        %3418 = vst [vmem:[%s257 + $0x758] sm:$0xff] %v3098
        %3419 = vst [vmem:[%s257 + $0x760] sm:$0xff] %v3099
        %3420 = vst [vmem:[%s257 + $0x768] sm:$0xff] %v3100
        %3421 = vst [vmem:[%s257 + $0x770] sm:$0xff] %v3101
        %3422 = vst [vmem:[%s257 + $0x778] sm:$0xff] %v3102
        %3423 = vst [vmem:[%s257 + $0x780] sm:$0xff] %v3103
        %3424 = vst [vmem:[%s257 + $0x788] sm:$0xff] %v3104
        %3425 = vst [vmem:[%s257 + $0x790] sm:$0xff] %v3105
        %3426 = vst [vmem:[%s257 + $0x798] sm:$0xff] %v3106
        %3427 = vst [vmem:[%s257 + $0x7a0] sm:$0xff] %v3107
        %3428 = vst [vmem:[%s257 + $0x7a8] sm:$0xff] %v3108
        %3429 = vst [vmem:[%s257 + $0x7b0] sm:$0xff] %v3109
        %3430 = vst [vmem:[%s257 + $0x7b8] sm:$0xff] %v3110
        %3431 = vst [vmem:[%s257 + $0x7c0] sm:$0xff] %v3111
        %3432 = vst [vmem:[%s257 + $0x7c8] sm:$0xff] %v3112
        %3433 = vst [vmem:[%s257 + $0x7d0] sm:$0xff] %v3113
        %3434 = vst [vmem:[%s257 + $0x7d8] sm:$0xff] %v3114
        %3435 = vst [vmem:[%s257 + $0x7e0] sm:$0xff] %v3115
        %3436 = vst [vmem:[%s257 + $0x7e8] sm:$0xff] %v3116
        %3437 = vst [vmem:[%s257 + $0x7f0] sm:$0xff] %v3117
        %3438 = vst [vmem:[%s257 + $0x7f8] sm:$0xff] %v3118
        %3439 = vst [vmem:[%s257 + $0x800] sm:$0xff] %v3119
        %3440 = vst [vmem:[%s257 + $0x808] sm:$0xff] %v3120
        %3441 = vst [vmem:[%s257 + $0x810] sm:$0xff] %v3121
        %3442 = vst [vmem:[%s257 + $0x818] sm:$0xff] %v3122
        %3443 = vst [vmem:[%s257 + $0x820] sm:$0xff] %v3123
        %3444 = vst [vmem:[%s257 + $0x828] sm:$0xff] %v3124
        %3445 = vst [vmem:[%s257 + $0x830] sm:$0xff] %v3125
        %3446 = vst [vmem:[%s257 + $0x838] sm:$0xff] %v3126
        %3447 = vst [vmem:[%s257 + $0x840] sm:$0xff] %v3127
        %3448 = vst [vmem:[%s257 + $0x848] sm:$0xff] %v3128
        %3449 = vst [vmem:[%s257 + $0x850] sm:$0xff] %v3129
        %3450 = vst [vmem:[%s257 + $0x858] sm:$0xff] %v3130
        %3451 = vst [vmem:[%s257 + $0x860] sm:$0xff] %v3131
        %3452 = vst [vmem:[%s257 + $0x868] sm:$0xff] %v3132
        %3453 = vst [vmem:[%s257 + $0x870] sm:$0xff] %v3133
        %3454 = vst [vmem:[%s257 + $0x878] sm:$0xff] %v3134
        %3455 = vst [vmem:[%s257 + $0x880] sm:$0xff] %v3135
        %3456 = vst [vmem:[%s257 + $0x888] sm:$0xff] %v3136
        %3457 = vst [vmem:[%s257 + $0x890] sm:$0xff] %v3137
        %3458 = vst [vmem:[%s257 + $0x898] sm:$0xff] %v3138
        %3459 = vst [vmem:[%s257 + $0x8a0] sm:$0xff] %v3139
        %3460 = vst [vmem:[%s257 + $0x8a8] sm:$0xff] %v3140
        %3461 = vst [vmem:[%s257 + $0x8b0] sm:$0xff] %v3141
        %3462 = vst [vmem:[%s257 + $0x8b8] sm:$0xff] %v3142
        %3463 = vst [vmem:[%s257 + $0x8c0] sm:$0xff] %v3143
        %3464 = vst [vmem:[%s257 + $0x8c8] sm:$0xff] %v3144
        %3465 = vst [vmem:[%s257 + $0x8d0] sm:$0xff] %v3145
        %3466 = vst [vmem:[%s257 + $0x8d8] sm:$0xff] %v3146
        %3467 = vst [vmem:[%s257 + $0x8e0] sm:$0xff] %v3147
        %3468 = vst [vmem:[%s257 + $0x8e8] sm:$0xff] %v3148
        %3469 = vst [vmem:[%s257 + $0x8f0] sm:$0xff] %v3149
        %3470 = vst [vmem:[%s257 + $0x8f8] sm:$0xff] %v3150
        %3471 = vst [vmem:[%s257 + $0x900] sm:$0xff] %v3151
        %3472 = vst [vmem:[%s257 + $0x908] sm:$0xff] %v3152
        %3473 = vst [vmem:[%s257 + $0x910] sm:$0xff] %v3153
        %3474 = vst [vmem:[%s257 + $0x918] sm:$0xff] %v3154
        %3475 = vst [vmem:[%s257 + $0x920] sm:$0xff] %v3155
        %3476 = vst [vmem:[%s257 + $0x928] sm:$0xff] %v3156
        %3477 = vst [vmem:[%s257 + $0x930] sm:$0xff] %v3157
        %3478 = vst [vmem:[%s257 + $0x938] sm:$0xff] %v3158
        %3479 = vst [vmem:[%s257 + $0x940] sm:$0xff] %v3159
        %3480 = vst [vmem:[%s257 + $0x948] sm:$0xff] %v3160
        %3481 = vst [vmem:[%s257 + $0x950] sm:$0xff] %v3161
        %3482 = vst [vmem:[%s257 + $0x958] sm:$0xff] %v3162
        %3483 = vst [vmem:[%s257 + $0x960] sm:$0xff] %v3163
        %3484 = vst [vmem:[%s257 + $0x968] sm:$0xff] %v3164
        %3485 = vst [vmem:[%s257 + $0x970] sm:$0xff] %v3165
        %3486 = vst [vmem:[%s257 + $0x978] sm:$0xff] %v3166
        %3487 = vst [vmem:[%s257 + $0x980] sm:$0xff] %v3167
        %3488 = vst [vmem:[%s257 + $0x988] sm:$0xff] %v3168
        %3489 = vst [vmem:[%s257 + $0x990] sm:$0xff] %v3169
        %3490 = vst [vmem:[%s257 + $0x998] sm:$0xff] %v3170
        %3491 = vst [vmem:[%s257 + $0x9a0] sm:$0xff] %v3171
        %3492 = vst [vmem:[%s257 + $0x9a8] sm:$0xff] %v3172
        %3493 = vst [vmem:[%s257 + $0x9b0] sm:$0xff] %v3173
        %3494 = vst [vmem:[%s257 + $0x9b8] sm:$0xff] %v3174
        %3495 = vst [vmem:[%s257 + $0x9c0] sm:$0xff] %v3175
        %3496 = vst [vmem:[%s257 + $0x9c8] sm:$0xff] %v3176
        %3497 = vst [vmem:[%s257 + $0x9d0] sm:$0xff] %v3177
        %3498 = vst [vmem:[%s257 + $0x9d8] sm:$0xff] %v3178
        %3499 = vst [vmem:[%s257 + $0x9e0] sm:$0xff] %v3179
        %3500 = vst [vmem:[%s257 + $0x9e8] sm:$0xff] %v3180
        %3501 = vst [vmem:[%s257 + $0x9f0] sm:$0xff] %v3181
        %3502 = vst [vmem:[%s257 + $0x9f8] sm:$0xff] %v3182
        %s3503 = sand.u32 %s125, 1
        %s3504 = scalar_lea.sflag [#allocation4], %s3503
        %s3505 = sand.u32 %s125, 1
        %s3506 = smul.addr %s3505, 2560
        %s3507 = scalar_lea.vmem [#allocation9], %s3506
        // Predicated region
        $region49: #{tpu_custom_call.1} parent=35 // pred_check
          %p3508 = pneg %p135
        $region50: #{tpu_custom_call.1} parent=35 // pred_check_branch
          %3510 = sbr.rel (%p3508) target = $region52
        $region51: #{tpu_custom_call.1} parent=35 // pred_region
          %s3512 = ssub.s32 40960, 40960
          %3513 = vsyncadd %s3504, %s3512
          %s3514 = smul.addr %s23, 320
          %s3515 = smul.addr %s3514, 128
          %s3516 = scalar_lea.hbm %s4, %s3515
          %s3517 = sshll.u32 %s3507, 4
          %s3518 = int_to_ptr.vmem [resolvable:$true] %s3517
          %3523 = dma.vmem_to_hbm [thread:$0]  %s3518, 40960, %s3516, %s3504, 256, 256, 16
        $region52: #{tpu_custom_call.1} parent=35 // pred_fallthru
          _
      $region36: #{tpu_custom_call.1} parent=5 // pred_fallthru
        _
      %p3524 = scmp.le.s32.totalorder 2, %s18
      // Predicated region
      $region53: #{tpu_custom_call.1} parent=5 // pred_check
        %p3525 = pneg %p3524
      $region54: #{tpu_custom_call.1} parent=5 // pred_check_branch
        %3527 = sbr.rel (%p3525) target = $region56
      $region55: #{tpu_custom_call.1} parent=5 // pred_region
        %s3528 = ssub.s32 %s18, 2
        // Predicated region
        $region57: #{tpu_custom_call.1} parent=55 // pred_check
          %p3529 = pneg %p141
        $region58: #{tpu_custom_call.1} parent=55 // pred_check_branch
          %3531 = sbr.rel (%p3529) target = $region60
        $region59: #{tpu_custom_call.1} parent=55 // pred_region
          %s3532 = sand.u32 %s126, 1
          %s3533 = scalar_lea.sflag [#allocation4], %s3532
          %s3534 = sand.u32 %s126, 1
          %s3535 = smul.addr %s3534, 2560
          %s3536 = scalar_lea.vmem [#allocation9], %s3535
          %3537 = dma.done %s3533, 40960
        $region60: #{tpu_custom_call.1} parent=55 // pred_fallthru
          _
      $region56: #{tpu_custom_call.1} parent=5 // pred_fallthru
        _
    $region6: #{tpu_custom_call.1} parent=1 // loop_footer
      %s22 = sadd.s32 1, %s18
    $region7: #{tpu_custom_call.1} parent=1 // loop_footer_branch
      %17 = sbr.rel target = $region3
    $region8: #{tpu_custom_call.1} parent=1 // loop_exit
      _
    %3538 = vsyncpa [#allocation3], 1
    %s3539 = scalar_lea.sflag [#allocation3], 1
    %3540 = vsyncpa %s3539, 1
    %3541 = vsyncpa [#allocation7], 1
    %3542 = vsyncpa [#allocation4], 1
    %s3543 = scalar_lea.sflag [#allocation4], 1
    %3544 = vsyncpa %s3543, 1
    %3545 = vsyncpa [#allocation5], 1
    %s3546 = scalar_lea.sflag [#allocation5], 1
    %3547 = vsyncpa %s3546, 1

</llo_original>
